<compile_context>
chip_gen: v6e
topology: v6e:2x2x1
jax: 0.10.0
libtpu: 0.0.40
codegen_flags: <defaults>
</compile_context>

<pallas_src>
import math

import jax
import jax.numpy as jnp
from jax import lax
from jax.experimental import pallas as pl
from jax.experimental.pallas import tpu as pltpu


# ---------------------------------------------------------------------------
# Pallas kernel 1: one LSTM layer, BOTH directions in a single pallas_call.
# grid=(2,) over direction (0 = forward, 1 = reverse), "parallel" semantics.
# Input projection is precomputed (gx = x @ W_ih + b, gate order i|f|o|g);
# only the serial recurrence (h @ W_hh + gates/activations) runs here.
# ---------------------------------------------------------------------------
def _lstm_dir_kernel(gx_ref, whh_ref, h0_ref, c0_ref,
                     y_ref, hn_ref, cn_ref, h_scr, c_scr):
    """gx:[T,B,4H] f32  whh:[H,4H] bf16  h0/c0:[B,H] -> y:[T,B,H], hn/cn:[B,H]"""
    d = pl.program_id(0)                         # 0 = forward, 1 = reverse
    T = gx_ref.shape[0]
    H = h0_ref.shape[1]

    h_scr[...] = h0_ref[...]
    c_scr[...] = c0_ref[...]
    whh = whh_ref[...]                           # hoisted load, [H, 4H] bf16

    def step(s, carry):
        # forward walks t = s; reverse walks t = T-1-s (reads AND writes there)
        t = jnp.where(d == 0, s, T - 1 - s)
        h = h_scr[...]
        c = c_scr[...]
        gates = gx_ref[t] + jnp.dot(h.astype(jnp.bfloat16), whh,
                                    preferred_element_type=jnp.float32)
        sig = jax.nn.sigmoid(gates[:, :3 * H])   # i | f | o in one EUP pass
        g = jnp.tanh(gates[:, 3 * H:])           # g in one EUP pass
        i = sig[:, 0 * H:1 * H]
        f = sig[:, 1 * H:2 * H]
        o = sig[:, 2 * H:3 * H]
        c_new = f * c + i * g
        h_new = o * jnp.tanh(c_new)
        h_scr[...] = h_new
        c_scr[...] = c_new
        y_ref[t] = h_new
        return carry

    lax.fori_loop(0, T, step, 0, unroll=True)    # T is static -> full unroll
    hn_ref[...] = h_scr[...]
    cn_ref[...] = c_scr[...]


def bilstm_layer(layer_p, x_tm, h0, c0):
    """x_tm:[T,B,Din] time-major; layer_p holds fwd/rev stacked weights.
    Returns y:[2,T,B,H] (per direction), h_n:[2,B,H], c_n:[2,B,H]."""
    T, B, _ = x_tm.shape
    H = layer_p['w_hh'].shape[1]

    # Hoisted input projection for both directions at once (one bf16 matmul,
    # f32 accumulation), done in XLA so the kernel only carries the recurrence.
    gx = jnp.einsum('tbd,kdh->ktbh', x_tm.astype(jnp.bfloat16),
                    layer_p['w_ih'], preferred_element_type=jnp.float32)
    gx = gx + layer_p['b'][:, None]              # [2, T, B, 4H] f32

    out_shape = (jax.ShapeDtypeStruct((2, T, B, H), jnp.float32),
                 jax.ShapeDtypeStruct((2, B, H), jnp.float32),
                 jax.ShapeDtypeStruct((2, B, H), jnp.float32))
    y, hn, cn = pl.pallas_call(
        _lstm_dir_kernel,
        grid=(2,),
        in_specs=[
            pl.BlockSpec((None, T, B, 4 * H), lambda d: (d, 0, 0, 0)),
            pl.BlockSpec((None, H, 4 * H), lambda d: (d, 0, 0)),
            pl.BlockSpec((None, B, H), lambda d: (d, 0, 0)),
            pl.BlockSpec((None, B, H), lambda d: (d, 0, 0)),
        ],
        out_specs=(
            pl.BlockSpec((None, T, B, H), lambda d: (d, 0, 0, 0)),
            pl.BlockSpec((None, B, H), lambda d: (d, 0, 0)),
            pl.BlockSpec((None, B, H), lambda d: (d, 0, 0)),
        ),
        out_shape=out_shape,
        scratch_shapes=[pltpu.VMEM((B, H), jnp.float32),
                        pltpu.VMEM((B, H), jnp.float32)],
        compiler_params=pltpu.CompilerParams(
            dimension_semantics=("parallel",)),
    )(gx, layer_p['w_hh'], h0, c0)
    return y, hn, cn


# ---------------------------------------------------------------------------
# His_Temporal_Module: 2-layer bidirectional LSTM (eval mode -> dropout = id).
# ---------------------------------------------------------------------------
def temporal_module(lstm_packed, x_bf, hidden=None):
    """x_bf: [B, T, Din] (batch_first).  Returns ([B,T,2H], (h_n, c_n))."""
    B, T, _ = x_bf.shape
    H = lstm_packed['l0']['w_hh'].shape[1]
    x_tm = jnp.transpose(x_bf, (1, 0, 2))                 # [T, B, Din]

    if hidden is None:
        h0 = jnp.zeros((4, B, H), jnp.float32)
        c0 = jnp.zeros((4, B, H), jnp.float32)
    else:
        h0, c0 = hidden

    # layer 0 (fwd + rev fused in one kernel)
    y0, hn0, cn0 = bilstm_layer(lstm_packed['l0'], x_tm, h0[0:2], c0[0:2])
    y0cat = jnp.concatenate([y0[0], y0[1]], axis=-1)       # [T, B, 2H]
    # TODO(synk): nn.LSTM inter-layer dropout and the trailing nn.Dropout are
    # train-time only; eval-mode (identity) semantics are implemented here.

    # layer 1 (fwd + rev)
    y1, hn1, cn1 = bilstm_layer(lstm_packed['l1'], y0cat, h0[2:4], c0[2:4])
    y1cat = jnp.concatenate([y1[0], y1[1]], axis=-1)       # [T, B, 2H]

    last_hiddens = jnp.transpose(y1cat, (1, 0, 2))         # [B, T, 2H]
    h_n = jnp.concatenate([hn0, hn1], axis=0)              # [4,B,H]: l0f,l0r,l1f,l1r
    c_n = jnp.concatenate([cn0, cn1], axis=0)
    return last_hiddens, (h_n, c_n)


# ---------------------------------------------------------------------------
# Pallas kernel 2: fused EncoderLayer + DP_Transformer head, whole batch in
# one grid-less invocation (B is tiny & static -> static in-kernel loop).
# ---------------------------------------------------------------------------
def _encoder_kernel(q_ref, k_ref, v_ref, mask_ref, w1_ref, w2_ref,
                    g_ref, beta_ref, out_ref, attn_ref):
    """q:[B,Lq,Dq] k:[B,Lk,Dq] v:[B,Lk,H] mask:[B,1,Lk] -> out:[B,1,H], attn:[B,Lq,Lk]"""
    B, Lq, Dq = q_ref.shape
    inv_sqrt_dq = jnp.float32(1.0 / math.sqrt(float(Dq)))
    w1 = w1_ref[...]                                       # [H, F] bf16
    w2 = w2_ref[...]                                       # [F, H] bf16
    gamma = g_ref[...]                                     # [1, H] f32
    beta = beta_ref[...]                                   # [1, H] f32

    for b in range(B):                                     # B = 2, static unroll
        q = q_ref[b].astype(jnp.bfloat16)                  # [Lq, Dq]
        k = k_ref[b].astype(jnp.bfloat16)                  # [Lk, Dq]
        v = v_ref[b].astype(jnp.bfloat16)                  # [Lk, H]

        # scores = Q @ K^T / sqrt(d_q); masked_fill_(pad, -1e9)
        scores = lax.dot_general(q, k, (((1,), (1,)), ((), ())),
                                 preferred_element_type=jnp.float32)
        scores = scores * inv_sqrt_dq
        scores = jnp.where(mask_ref[b] > 0.5, jnp.float32(-1.0e9), scores)
        # NOTE: reference uses nn.Softmax(dim=1) on [B, Lq, Lk] -> softmax over
        # the QUERY axis (axis 0 here), reproduced exactly.
        attn = jax.nn.softmax(scores, axis=0)              # [Lq, Lk] f32
        context = jnp.dot(attn.astype(jnp.bfloat16), v,
                          preferred_element_type=jnp.float32)        # [Lq, H]

        # Poswise FFN: Linear(H->F, no bias) -> ReLU -> Linear(F->H, no bias)
        ff = jnp.maximum(jnp.dot(context.astype(jnp.bfloat16), w1,
                                 preferred_element_type=jnp.float32), 0.0)
        ff = jnp.dot(ff.astype(jnp.bfloat16), w2,
                     preferred_element_type=jnp.float32)

        # residual + LayerNorm(H)
        x = ff + context
        mean = jnp.mean(x, axis=-1, keepdims=True)
        var = jnp.mean((x - mean) ** 2, axis=-1, keepdims=True)
        enc = (x - mean) * lax.rsqrt(var + 1e-5) * gamma + beta

        # out = softmax(enc.sum(dim=1), dim=1)
        s = jnp.sum(enc, axis=0, keepdims=True)            # [1, H]
        out_ref[b] = jax.nn.softmax(s, axis=-1)
        attn_ref[b] = attn


def dp_transformer(tf_packed, Q, K, V):
    """Q:[B,Lq,Dq]  K:[B,Lk,Dq]  V:[B,Lk,H] -> (out:[B,H], attn:[B,Lq,Lk])."""
    B, Lq, Dq = Q.shape
    Lk = K.shape[1]
    H = V.shape[-1]

    # get_attn_pad_mask: seq_k[:, :, 0] == 0.  Precomputed as a tiny [B,1,Lk]
    # f32 array (from the ORIGINAL f32 K, so bf16 casts never affect padding).
    mask = (K[:, :, 0] == 0.0).astype(jnp.float32)[:, None, :]

    out, attn = pl.pallas_call(
        _encoder_kernel,
        out_shape=(jax.ShapeDtypeStruct((B, 1, H), jnp.float32),
                   jax.ShapeDtypeStruct((B, Lq, Lk), jnp.float32)),
    )(Q, K, V, mask, tf_packed['w1_t'], tf_packed['w2_t'],
      tf_packed['ln_g'], tf_packed['ln_b'])
    return out[:, 0, :], attn


# ---------------------------------------------------------------------------
# Parameter construction (deterministic, synthetic; PyTorch layout) + one-time
# packing into kernel-friendly layout (transposed, gate-permuted, bf16).
# ---------------------------------------------------------------------------
def init_params(key, input_size, hist_hidden_size, ff_dim):
    H = hist_hidden_size // 2          # per-direction hidden (bidirectional)

    def lstm_dir(k, din):
        k1, k2, k3, k4 = jax.random.split(k, 4)
        s = 0.1
        return {
            'w_ih': s * jax.random.normal(k1, (4 * H, din), jnp.float32),
            'w_hh': s * jax.random.normal(k2, (4 * H, H), jnp.float32),
            'b_ih': s * jax.random.normal(k3, (4 * H,), jnp.float32),
            'b_hh': s * jax.random.normal(k4, (4 * H,), jnp.float32),
        }

    k = jax.random.split(key, 7)
    lstm = {
        'l0_f': lstm_dir(k[0], input_size),
        'l0_r': lstm_dir(k[1], input_size),
        'l1_f': lstm_dir(k[2], 2 * H),
        'l1_r': lstm_dir(k[3], 2 * H),
    }
    tf = {
        'w1': 0.1 * jax.random.normal(k[4], (ff_dim, hist_hidden_size),
                                      jnp.float32),   # torch Linear [out,in]
        'w2': 0.1 * jax.random.normal(k[5], (hist_hidden_size, ff_dim),
                                      jnp.float32),
        'ln_g': jnp.ones((hist_hidden_size,), jnp.float32),
        'ln_b': jnp.zeros((hist_hidden_size,), jnp.float32),
    }
    return {'lstm': lstm, 'tf': tf}


def pack_params(params):
    """One-time prep: transpose, permute gate columns i|f|g|o -> i|f|o|g,
    stack fwd/rev on a leading direction axis, cast matmul weights to bf16."""
    def prep_dir(p):
        H = p['w_hh'].shape[1]
        perm = jnp.concatenate([jnp.arange(0, 2 * H),
                                jnp.arange(3 * H, 4 * H),
                                jnp.arange(2 * H, 3 * H)])
        w_ih = p['w_ih'].T[:, perm].astype(jnp.bfloat16)        # [Din, 4H]
        w_hh = p['w_hh'].T[:, perm].astype(jnp.bfloat16)        # [H, 4H]
        b = (p['b_ih'] + p['b_hh'])[perm].reshape(1, 4 * H)     # f32
        return w_ih, w_hh, b

    def prep_layer(pf, pr):
        wf, hf, bf = prep_dir(pf)
        wr, hr, br = prep_dir(pr)
        return {'w_ih': jnp.stack([wf, wr]),     # [2, Din, 4H] bf16
                'w_hh': jnp.stack([hf, hr]),     # [2, H, 4H]   bf16
                'b': jnp.stack([bf, br])}        # [2, 1, 4H]   f32

    lstm = params['lstm']
    tf = params['tf']
    H = tf['ln_g'].shape[0]
    return {
        'lstm': {'l0': prep_layer(lstm['l0_f'], lstm['l0_r']),
                 'l1': prep_layer(lstm['l1_f'], lstm['l1_r'])},
        'tf': {'w1_t': tf['w1'].T.astype(jnp.bfloat16),         # [H, F]
               'w2_t': tf['w2'].T.astype(jnp.bfloat16),         # [F, H]
               'ln_g': tf['ln_g'].reshape(1, H),
               'ln_b': tf['ln_b'].reshape(1, H)},
    }


# ---------------------------------------------------------------------------
# History_Module.forward
# ---------------------------------------------------------------------------
def history_module_forward(packed, query, key, traj, history):
    # (the reference's `torch.sort(history_lens)` result is never used -> dropped)

    # sptm_history_hiddens, hiddens = self.temporal_module(key)
    sptm_history_hiddens, hiddens = temporal_module(packed['lstm'], key, hidden=None)

    # TODO(synk): AttentionNet.History_Scorer / History_AttentionNet /
    # Recently_Score definitions are not provided (external module); out3/out2
    # cannot be reproduced faithfully and are returned as None.
    out3 = None

    # out1, self_attn = self.tf_encoder(Q=query, K=key, V=sptm_history_hiddens)
    out1, self_attn = dp_transformer(packed['tf'], query, key, sptm_history_hiddens)

    # sptm_recent_hiddens, _ = self.temporal_module(query, hidden=hiddens)
    sptm_recent_hiddens, _ = temporal_module(packed['lstm'], query, hidden=hiddens)
    out2 = None

    return out1, out2, out3, self_attn, sptm_recent_hiddens


if __name__ == "__main__":
    # Small shapes consistent with the module.
    B, T_q, T_k = 2, 6, 8
    input_size = 12
    hist_hidden_size = 32
    ff_dim = 64

    root = jax.random.PRNGKey(0)
    kp, kq, kk, kh, kl = jax.random.split(root, 5)

    params = init_params(kp, input_size, hist_hidden_size, ff_dim)
    packed = pack_params(params)        # one-time weight prep (no per-call transposes)

    query = jax.random.normal(kq, (B, T_q, input_size), jnp.float32)
    key = jax.random.normal(kk, (B, T_k, input_size), jnp.float32)
    # zero out feature-0 of the last key timestep so the pad mask is exercised
    key = key.at[:, -1, 0].set(0.0)
    history = jax.random.normal(kh, (B, T_k, input_size), jnp.float32)
    traj = {'his_lens': jax.random.randint(kl, (B,), 1, T_k + 1)}

    fwd = jax.jit(history_module_forward)
    out1, out2, out3, self_attn, recent_h = fwd(packed, query, key, traj, history)

    jax.block_until_ready((out1, self_attn, recent_h))
    assert out1.shape == (B, hist_hidden_size)
    assert self_attn.shape == (B, T_q, T_k)
    assert recent_h.shape == (B, T_q, hist_hidden_size)
    print("KERNEL_OK")
</pallas_src>

<mosaic_0001>
module attributes {stable_mosaic.version = 11 : i64} {
  func.func @_lstm_dir_kernel(%arg0: i32, %arg1: memref<1x8x2x64xf32, #tpu.memory_space<vmem>>, %arg2: memref<1x16x64xbf16, #tpu.memory_space<vmem>>, %arg3: memref<1x2x16xf32, #tpu.memory_space<vmem>>, %arg4: memref<1x2x16xf32, #tpu.memory_space<vmem>>, %arg5: memref<1x8x2x16xf32, #tpu.memory_space<vmem>>, %arg6: memref<1x2x16xf32, #tpu.memory_space<vmem>>, %arg7: memref<1x2x16xf32, #tpu.memory_space<vmem>>, %arg8: memref<2x16xf32, #tpu.memory_space<vmem>>, %arg9: memref<2x16xf32, #tpu.memory_space<vmem>>) attributes {dimension_semantics = [#tpu.dimension_semantics<parallel>], iteration_bounds = array<i64: 2>, scalar_prefetch = 0 : i64, scratch_operands = 2 : i64, tpu.core_type = #tpu.core_type<tc>, window_params = [{transform_indices = @transform_0, window_bounds = array<i64: 1, 8, 2, 64>}, {transform_indices = @transform_1, window_bounds = array<i64: 1, 16, 64>}, {transform_indices = @transform_2, window_bounds = array<i64: 1, 2, 16>}, {transform_indices = @transform_3, window_bounds = array<i64: 1, 2, 16>}, {transform_indices = @transform_4, window_bounds = array<i64: 1, 8, 2, 16>}, {transform_indices = @transform_5, window_bounds = array<i64: 1, 2, 16>}, {transform_indices = @transform_6, window_bounds = array<i64: 1, 2, 16>}]} {
    %c0 = arith.constant 0 : index
    %c0_0 = arith.constant 0 : index
    %c0_1 = arith.constant 0 : index
    %0 = vector.load %arg3[%c0, %c0_0, %c0_1] : memref<1x2x16xf32, #tpu.memory_space<vmem>>, vector<1x2x16xf32>
    %1 = vector.shape_cast %0 : vector<1x2x16xf32> to vector<2x16xf32>
    %c0_2 = arith.constant 0 : index
    %c0_3 = arith.constant 0 : index
    %2 = vector.load %arg8[%c0_2, %c0_3] : memref<2x16xf32, #tpu.memory_space<vmem>>, vector<2x16xf32>
    tpu.vector_store %arg8[%c0_2, %c0_3], %1 {strides = array<i32>} : memref<2x16xf32, #tpu.memory_space<vmem>>, vector<2x16xf32>,
    %c0_4 = arith.constant 0 : index
    %c0_5 = arith.constant 0 : index
    %c0_6 = arith.constant 0 : index
    %3 = vector.load %arg4[%c0_4, %c0_5, %c0_6] : memref<1x2x16xf32, #tpu.memory_space<vmem>>, vector<1x2x16xf32>
    %4 = vector.shape_cast %3 : vector<1x2x16xf32> to vector<2x16xf32>
    %c0_7 = arith.constant 0 : index
    %c0_8 = arith.constant 0 : index
    %5 = vector.load %arg9[%c0_7, %c0_8] : memref<2x16xf32, #tpu.memory_space<vmem>>, vector<2x16xf32>
    tpu.vector_store %arg9[%c0_7, %c0_8], %4 {strides = array<i32>} : memref<2x16xf32, #tpu.memory_space<vmem>>, vector<2x16xf32>,
    %c0_9 = arith.constant 0 : index
    %c0_10 = arith.constant 0 : index
    %c0_11 = arith.constant 0 : index
    %6 = vector.load %arg2[%c0_9, %c0_10, %c0_11] : memref<1x16x64xbf16, #tpu.memory_space<vmem>>, vector<1x16x64xbf16>
    %7 = vector.shape_cast %6 : vector<1x16x64xbf16> to vector<16x64xbf16>
    %c0_i32 = arith.constant 0 : i32
    %c0_i32_12 = arith.constant 0 : i32
    %8 = arith.cmpi eq, %arg0, %c0_i32_12 : i32
    %c7_i32 = arith.constant 7 : i32
    %9 = arith.subi %c7_i32, %c0_i32 : i32
    %10 = arith.select %8, %c0_i32, %9 : i32
    %c0_13 = arith.constant 0 : index
    %c0_14 = arith.constant 0 : index
    %11 = vector.load %arg8[%c0_13, %c0_14] : memref<2x16xf32, #tpu.memory_space<vmem>>, vector<2x16xf32>
    %c0_15 = arith.constant 0 : index
    %c0_16 = arith.constant 0 : index
    %12 = vector.load %arg9[%c0_15, %c0_16] : memref<2x16xf32, #tpu.memory_space<vmem>>, vector<2x16xf32>
    %c0_17 = arith.constant 0 : index
    %13 = arith.index_cast %10 : i32 to index
    %c0_18 = arith.constant 0 : index
    %c0_19 = arith.constant 0 : index
    %14 = vector.load %arg1[%c0_17, %13, %c0_18, %c0_19] : memref<1x8x2x64xf32, #tpu.memory_space<vmem>>, vector<1x1x2x64xf32>
    %15 = vector.shape_cast %14 : vector<1x1x2x64xf32> to vector<2x64xf32>
    %16 = arith.truncf %11 : vector<2x16xf32> to vector<2x16xbf16>
    %cst = arith.constant dense<0.000000e+00> : vector<2x64xf32>
    %17 = tpu.matmul %16, %7, %cst {dimension_numbers = #tpu.dot_dimension_numbers<[1], [0], [0], [1], [0, 0, 1, 1], [], []>} : vector<2x16xbf16>, vector<16x64xbf16>, vector<2x64xf32> -> vector<2x64xf32>
    %18 = arith.addf %15, %17 : vector<2x64xf32>
    %19 = vector.extract_strided_slice %18 {offsets = [0, 0], sizes = [2, 48], strides = [1, 1]} : vector<2x64xf32> to vector<2x48xf32>
    %20 = arith.negf %19 : vector<2x48xf32>
    %21 = math.exp %20 : vector<2x48xf32>
    %cst_20 = arith.constant 1.000000e+00 : f32
    %22 = vector.broadcast %cst_20 : f32 to vector<2x48xf32>
    %23 = arith.addf %22, %21 : vector<2x48xf32>
    %24 = arith.divf %22, %23 : vector<2x48xf32>
    %25 = vector.extract_strided_slice %18 {offsets = [0, 48], sizes = [2, 16], strides = [1, 1]} : vector<2x64xf32> to vector<2x16xf32>
    %26 = math.tanh %25 : vector<2x16xf32>
    %27 = vector.extract_strided_slice %24 {offsets = [0, 0], sizes = [2, 16], strides = [1, 1]} : vector<2x48xf32> to vector<2x16xf32>
    %28 = vector.extract_strided_slice %24 {offsets = [0, 16], sizes = [2, 16], strides = [1, 1]} : vector<2x48xf32> to vector<2x16xf32>
    %29 = vector.extract_strided_slice %24 {offsets = [0, 32], sizes = [2, 16], strides = [1, 1]} : vector<2x48xf32> to vector<2x16xf32>
    %30 = arith.mulf %28, %12 : vector<2x16xf32>
    %31 = arith.mulf %27, %26 : vector<2x16xf32>
    %32 = arith.addf %30, %31 : vector<2x16xf32>
    %33 = math.tanh %32 : vector<2x16xf32>
    %34 = arith.mulf %29, %33 : vector<2x16xf32>
    %c0_21 = arith.constant 0 : index
    %c0_22 = arith.constant 0 : index
    %35 = vector.load %arg8[%c0_21, %c0_22] : memref<2x16xf32, #tpu.memory_space<vmem>>, vector<2x16xf32>
    tpu.vector_store %arg8[%c0_21, %c0_22], %34 {strides = array<i32>} : memref<2x16xf32, #tpu.memory_space<vmem>>, vector<2x16xf32>,
    %c0_23 = arith.constant 0 : index
    %c0_24 = arith.constant 0 : index
    %36 = vector.load %arg9[%c0_23, %c0_24] : memref<2x16xf32, #tpu.memory_space<vmem>>, vector<2x16xf32>
    tpu.vector_store %arg9[%c0_23, %c0_24], %32 {strides = array<i32>} : memref<2x16xf32, #tpu.memory_space<vmem>>, vector<2x16xf32>,
    %c0_25 = arith.constant 0 : index
    %37 = arith.index_cast %10 : i32 to index
    %c0_26 = arith.constant 0 : index
    %c0_27 = arith.constant 0 : index
    %38 = vector.load %arg5[%c0_25, %37, %c0_26, %c0_27] : memref<1x8x2x16xf32, #tpu.memory_space<vmem>>, vector<1x1x2x16xf32>
    %39 = vector.shape_cast %38 : vector<1x1x2x16xf32> to vector<2x16xf32>
    %40 = vector.shape_cast %34 : vector<2x16xf32> to vector<1x1x2x16xf32>
    tpu.vector_store %arg5[%c0_25, %37, %c0_26, %c0_27], %40 {strides = array<i32>} : memref<1x8x2x16xf32, #tpu.memory_space<vmem>>, vector<1x1x2x16xf32>,
    %c1_i32 = arith.constant 1 : i32
    %c0_i32_28 = arith.constant 0 : i32
    %41 = arith.cmpi eq, %arg0, %c0_i32_28 : i32
    %c7_i32_29 = arith.constant 7 : i32
    %42 = arith.subi %c7_i32_29, %c1_i32 : i32
    %43 = arith.select %41, %c1_i32, %42 : i32
    %c0_30 = arith.constant 0 : index
    %c0_31 = arith.constant 0 : index
    %44 = vector.load %arg8[%c0_30, %c0_31] : memref<2x16xf32, #tpu.memory_space<vmem>>, vector<2x16xf32>
    %c0_32 = arith.constant 0 : index
    %c0_33 = arith.constant 0 : index
    %45 = vector.load %arg9[%c0_32, %c0_33] : memref<2x16xf32, #tpu.memory_space<vmem>>, vector<2x16xf32>
    %c0_34 = arith.constant 0 : index
    %46 = arith.index_cast %43 : i32 to index
    %c0_35 = arith.constant 0 : index
    %c0_36 = arith.constant 0 : index
    %47 = vector.load %arg1[%c0_34, %46, %c0_35, %c0_36] : memref<1x8x2x64xf32, #tpu.memory_space<vmem>>, vector<1x1x2x64xf32>
    %48 = vector.shape_cast %47 : vector<1x1x2x64xf32> to vector<2x64xf32>
    %49 = arith.truncf %44 : vector<2x16xf32> to vector<2x16xbf16>
    %cst_37 = arith.constant dense<0.000000e+00> : vector<2x64xf32>
    %50 = tpu.matmul %49, %7, %cst_37 {dimension_numbers = #tpu.dot_dimension_numbers<[1], [0], [0], [1], [0, 0, 1, 1], [], []>} : vector<2x16xbf16>, vector<16x64xbf16>, vector<2x64xf32> -> vector<2x64xf32>
    %51 = arith.addf %48, %50 : vector<2x64xf32>
    %52 = vector.extract_strided_slice %51 {offsets = [0, 0], sizes = [2, 48], strides = [1, 1]} : vector<2x64xf32> to vector<2x48xf32>
    %53 = arith.negf %52 : vector<2x48xf32>
    %54 = math.exp %53 : vector<2x48xf32>
    %cst_38 = arith.constant 1.000000e+00 : f32
    %55 = vector.broadcast %cst_38 : f32 to vector<2x48xf32>
    %56 = arith.addf %55, %54 : vector<2x48xf32>
    %57 = arith.divf %55, %56 : vector<2x48xf32>
    %58 = vector.extract_strided_slice %51 {offsets = [0, 48], sizes = [2, 16], strides = [1, 1]} : vector<2x64xf32> to vector<2x16xf32>
    %59 = math.tanh %58 : vector<2x16xf32>
    %60 = vector.extract_strided_slice %57 {offsets = [0, 0], sizes = [2, 16], strides = [1, 1]} : vector<2x48xf32> to vector<2x16xf32>
    %61 = vector.extract_strided_slice %57 {offsets = [0, 16], sizes = [2, 16], strides = [1, 1]} : vector<2x48xf32> to vector<2x16xf32>
    %62 = vector.extract_strided_slice %57 {offsets = [0, 32], sizes = [2, 16], strides = [1, 1]} : vector<2x48xf32> to vector<2x16xf32>
    %63 = arith.mulf %61, %45 : vector<2x16xf32>
    %64 = arith.mulf %60, %59 : vector<2x16xf32>
    %65 = arith.addf %63, %64 : vector<2x16xf32>
    %66 = math.tanh %65 : vector<2x16xf32>
    %67 = arith.mulf %62, %66 : vector<2x16xf32>
    %c0_39 = arith.constant 0 : index
    %c0_40 = arith.constant 0 : index
    %68 = vector.load %arg8[%c0_39, %c0_40] : memref<2x16xf32, #tpu.memory_space<vmem>>, vector<2x16xf32>
    tpu.vector_store %arg8[%c0_39, %c0_40], %67 {strides = array<i32>} : memref<2x16xf32, #tpu.memory_space<vmem>>, vector<2x16xf32>,
    %c0_41 = arith.constant 0 : index
    %c0_42 = arith.constant 0 : index
    %69 = vector.load %arg9[%c0_41, %c0_42] : memref<2x16xf32, #tpu.memory_space<vmem>>, vector<2x16xf32>
    tpu.vector_store %arg9[%c0_41, %c0_42], %65 {strides = array<i32>} : memref<2x16xf32, #tpu.memory_space<vmem>>, vector<2x16xf32>,
    %c0_43 = arith.constant 0 : index
    %70 = arith.index_cast %43 : i32 to index
    %c0_44 = arith.constant 0 : index
    %c0_45 = arith.constant 0 : index
    %71 = vector.load %arg5[%c0_43, %70, %c0_44, %c0_45] : memref<1x8x2x16xf32, #tpu.memory_space<vmem>>, vector<1x1x2x16xf32>
    %72 = vector.shape_cast %71 : vector<1x1x2x16xf32> to vector<2x16xf32>
    %73 = vector.shape_cast %67 : vector<2x16xf32> to vector<1x1x2x16xf32>
    tpu.vector_store %arg5[%c0_43, %70, %c0_44, %c0_45], %73 {strides = array<i32>} : memref<1x8x2x16xf32, #tpu.memory_space<vmem>>, vector<1x1x2x16xf32>,
    %c2_i32 = arith.constant 2 : i32
    %c0_i32_46 = arith.constant 0 : i32
    %74 = arith.cmpi eq, %arg0, %c0_i32_46 : i32
    %c7_i32_47 = arith.constant 7 : i32
    %75 = arith.subi %c7_i32_47, %c2_i32 : i32
    %76 = arith.select %74, %c2_i32, %75 : i32
    %c0_48 = arith.constant 0 : index
    %c0_49 = arith.constant 0 : index
    %77 = vector.load %arg8[%c0_48, %c0_49] : memref<2x16xf32, #tpu.memory_space<vmem>>, vector<2x16xf32>
    %c0_50 = arith.constant 0 : index
    %c0_51 = arith.constant 0 : index
    %78 = vector.load %arg9[%c0_50, %c0_51] : memref<2x16xf32, #tpu.memory_space<vmem>>, vector<2x16xf32>
    %c0_52 = arith.constant 0 : index
    %79 = arith.index_cast %76 : i32 to index
    %c0_53 = arith.constant 0 : index
    %c0_54 = arith.constant 0 : index
    %80 = vector.load %arg1[%c0_52, %79, %c0_53, %c0_54] : memref<1x8x2x64xf32, #tpu.memory_space<vmem>>, vector<1x1x2x64xf32>
    %81 = vector.shape_cast %80 : vector<1x1x2x64xf32> to vector<2x64xf32>
    %82 = arith.truncf %77 : vector<2x16xf32> to vector<2x16xbf16>
    %cst_55 = arith.constant dense<0.000000e+00> : vector<2x64xf32>
    %83 = tpu.matmul %82, %7, %cst_55 {dimension_numbers = #tpu.dot_dimension_numbers<[1], [0], [0], [1], [0, 0, 1, 1], [], []>} : vector<2x16xbf16>, vector<16x64xbf16>, vector<2x64xf32> -> vector<2x64xf32>
    %84 = arith.addf %81, %83 : vector<2x64xf32>
    %85 = vector.extract_strided_slice %84 {offsets = [0, 0], sizes = [2, 48], strides = [1, 1]} : vector<2x64xf32> to vector<2x48xf32>
    %86 = arith.negf %85 : vector<2x48xf32>
    %87 = math.exp %86 : vector<2x48xf32>
    %cst_56 = arith.constant 1.000000e+00 : f32
    %88 = vector.broadcast %cst_56 : f32 to vector<2x48xf32>
    %89 = arith.addf %88, %87 : vector<2x48xf32>
    %90 = arith.divf %88, %89 : vector<2x48xf32>
    %91 = vector.extract_strided_slice %84 {offsets = [0, 48], sizes = [2, 16], strides = [1, 1]} : vector<2x64xf32> to vector<2x16xf32>
    %92 = math.tanh %91 : vector<2x16xf32>
    %93 = vector.extract_strided_slice %90 {offsets = [0, 0], sizes = [2, 16], strides = [1, 1]} : vector<2x48xf32> to vector<2x16xf32>
    %94 = vector.extract_strided_slice %90 {offsets = [0, 16], sizes = [2, 16], strides = [1, 1]} : vector<2x48xf32> to vector<2x16xf32>
    %95 = vector.extract_strided_slice %90 {offsets = [0, 32], sizes = [2, 16], strides = [1, 1]} : vector<2x48xf32> to vector<2x16xf32>
    %96 = arith.mulf %94, %78 : vector<2x16xf32>
    %97 = arith.mulf %93, %92 : vector<2x16xf32>
    %98 = arith.addf %96, %97 : vector<2x16xf32>
    %99 = math.tanh %98 : vector<2x16xf32>
    %100 = arith.mulf %95, %99 : vector<2x16xf32>
    %c0_57 = arith.constant 0 : index
    %c0_58 = arith.constant 0 : index
    %101 = vector.load %arg8[%c0_57, %c0_58] : memref<2x16xf32, #tpu.memory_space<vmem>>, vector<2x16xf32>
    tpu.vector_store %arg8[%c0_57, %c0_58], %100 {strides = array<i32>} : memref<2x16xf32, #tpu.memory_space<vmem>>, vector<2x16xf32>,
    %c0_59 = arith.constant 0 : index
    %c0_60 = arith.constant 0 : index
    %102 = vector.load %arg9[%c0_59, %c0_60] : memref<2x16xf32, #tpu.memory_space<vmem>>, vector<2x16xf32>
    tpu.vector_store %arg9[%c0_59, %c0_60], %98 {strides = array<i32>} : memref<2x16xf32, #tpu.memory_space<vmem>>, vector<2x16xf32>,
    %c0_61 = arith.constant 0 : index
    %103 = arith.index_cast %76 : i32 to index
    %c0_62 = arith.constant 0 : index
    %c0_63 = arith.constant 0 : index
    %104 = vector.load %arg5[%c0_61, %103, %c0_62, %c0_63] : memref<1x8x2x16xf32, #tpu.memory_space<vmem>>, vector<1x1x2x16xf32>
    %105 = vector.shape_cast %104 : vector<1x1x2x16xf32> to vector<2x16xf32>
    %106 = vector.shape_cast %100 : vector<2x16xf32> to vector<1x1x2x16xf32>
    tpu.vector_store %arg5[%c0_61, %103, %c0_62, %c0_63], %106 {strides = array<i32>} : memref<1x8x2x16xf32, #tpu.memory_space<vmem>>, vector<1x1x2x16xf32>,
    %c3_i32 = arith.constant 3 : i32
    %c0_i32_64 = arith.constant 0 : i32
    %107 = arith.cmpi eq, %arg0, %c0_i32_64 : i32
    %c7_i32_65 = arith.constant 7 : i32
    %108 = arith.subi %c7_i32_65, %c3_i32 : i32
    %109 = arith.select %107, %c3_i32, %108 : i32
    %c0_66 = arith.constant 0 : index
    %c0_67 = arith.constant 0 : index
    %110 = vector.load %arg8[%c0_66, %c0_67] : memref<2x16xf32, #tpu.memory_space<vmem>>, vector<2x16xf32>
    %c0_68 = arith.constant 0 : index
    %c0_69 = arith.constant 0 : index
    %111 = vector.load %arg9[%c0_68, %c0_69] : memref<2x16xf32, #tpu.memory_space<vmem>>, vector<2x16xf32>
    %c0_70 = arith.constant 0 : index
    %112 = arith.index_cast %109 : i32 to index
    %c0_71 = arith.constant 0 : index
    %c0_72 = arith.constant 0 : index
    %113 = vector.load %arg1[%c0_70, %112, %c0_71, %c0_72] : memref<1x8x2x64xf32, #tpu.memory_space<vmem>>, vector<1x1x2x64xf32>
    %114 = vector.shape_cast %113 : vector<1x1x2x64xf32> to vector<2x64xf32>
    %115 = arith.truncf %110 : vector<2x16xf32> to vector<2x16xbf16>
    %cst_73 = arith.constant dense<0.000000e+00> : vector<2x64xf32>
    %116 = tpu.matmul %115, %7, %cst_73 {dimension_numbers = #tpu.dot_dimension_numbers<[1], [0], [0], [1], [0, 0, 1, 1], [], []>} : vector<2x16xbf16>, vector<16x64xbf16>, vector<2x64xf32> -> vector<2x64xf32>
    %117 = arith.addf %114, %116 : vector<2x64xf32>
    %118 = vector.extract_strided_slice %117 {offsets = [0, 0], sizes = [2, 48], strides = [1, 1]} : vector<2x64xf32> to vector<2x48xf32>
    %119 = arith.negf %118 : vector<2x48xf32>
    %120 = math.exp %119 : vector<2x48xf32>
    %cst_74 = arith.constant 1.000000e+00 : f32
    %121 = vector.broadcast %cst_74 : f32 to vector<2x48xf32>
    %122 = arith.addf %121, %120 : vector<2x48xf32>
    %123 = arith.divf %121, %122 : vector<2x48xf32>
    %124 = vector.extract_strided_slice %117 {offsets = [0, 48], sizes = [2, 16], strides = [1, 1]} : vector<2x64xf32> to vector<2x16xf32>
    %125 = math.tanh %124 : vector<2x16xf32>
    %126 = vector.extract_strided_slice %123 {offsets = [0, 0], sizes = [2, 16], strides = [1, 1]} : vector<2x48xf32> to vector<2x16xf32>
    %127 = vector.extract_strided_slice %123 {offsets = [0, 16], sizes = [2, 16], strides = [1, 1]} : vector<2x48xf32> to vector<2x16xf32>
    %128 = vector.extract_strided_slice %123 {offsets = [0, 32], sizes = [2, 16], strides = [1, 1]} : vector<2x48xf32> to vector<2x16xf32>
    %129 = arith.mulf %127, %111 : vector<2x16xf32>
    %130 = arith.mulf %126, %125 : vector<2x16xf32>
    %131 = arith.addf %129, %130 : vector<2x16xf32>
    %132 = math.tanh %131 : vector<2x16xf32>
    %133 = arith.mulf %128, %132 : vector<2x16xf32>
    %c0_75 = arith.constant 0 : index
    %c0_76 = arith.constant 0 : index
    %134 = vector.load %arg8[%c0_75, %c0_76] : memref<2x16xf32, #tpu.memory_space<vmem>>, vector<2x16xf32>
    tpu.vector_store %arg8[%c0_75, %c0_76], %133 {strides = array<i32>} : memref<2x16xf32, #tpu.memory_space<vmem>>, vector<2x16xf32>,
    %c0_77 = arith.constant 0 : index
    %c0_78 = arith.constant 0 : index
    %135 = vector.load %arg9[%c0_77, %c0_78] : memref<2x16xf32, #tpu.memory_space<vmem>>, vector<2x16xf32>
    tpu.vector_store %arg9[%c0_77, %c0_78], %131 {strides = array<i32>} : memref<2x16xf32, #tpu.memory_space<vmem>>, vector<2x16xf32>,
    %c0_79 = arith.constant 0 : index
    %136 = arith.index_cast %109 : i32 to index
    %c0_80 = arith.constant 0 : index
    %c0_81 = arith.constant 0 : index
    %137 = vector.load %arg5[%c0_79, %136, %c0_80, %c0_81] : memref<1x8x2x16xf32, #tpu.memory_space<vmem>>, vector<1x1x2x16xf32>
    %138 = vector.shape_cast %137 : vector<1x1x2x16xf32> to vector<2x16xf32>
    %139 = vector.shape_cast %133 : vector<2x16xf32> to vector<1x1x2x16xf32>
    tpu.vector_store %arg5[%c0_79, %136, %c0_80, %c0_81], %139 {strides = array<i32>} : memref<1x8x2x16xf32, #tpu.memory_space<vmem>>, vector<1x1x2x16xf32>,
    %c4_i32 = arith.constant 4 : i32
    %c0_i32_82 = arith.constant 0 : i32
    %140 = arith.cmpi eq, %arg0, %c0_i32_82 : i32
    %c7_i32_83 = arith.constant 7 : i32
    %141 = arith.subi %c7_i32_83, %c4_i32 : i32
    %142 = arith.select %140, %c4_i32, %141 : i32
    %c0_84 = arith.constant 0 : index
    %c0_85 = arith.constant 0 : index
    %143 = vector.load %arg8[%c0_84, %c0_85] : memref<2x16xf32, #tpu.memory_space<vmem>>, vector<2x16xf32>
    %c0_86 = arith.constant 0 : index
    %c0_87 = arith.constant 0 : index
    %144 = vector.load %arg9[%c0_86, %c0_87] : memref<2x16xf32, #tpu.memory_space<vmem>>, vector<2x16xf32>
    %c0_88 = arith.constant 0 : index
    %145 = arith.index_cast %142 : i32 to index
    %c0_89 = arith.constant 0 : index
    %c0_90 = arith.constant 0 : index
    %146 = vector.load %arg1[%c0_88, %145, %c0_89, %c0_90] : memref<1x8x2x64xf32, #tpu.memory_space<vmem>>, vector<1x1x2x64xf32>
    %147 = vector.shape_cast %146 : vector<1x1x2x64xf32> to vector<2x64xf32>
    %148 = arith.truncf %143 : vector<2x16xf32> to vector<2x16xbf16>
    %cst_91 = arith.constant dense<0.000000e+00> : vector<2x64xf32>
    %149 = tpu.matmul %148, %7, %cst_91 {dimension_numbers = #tpu.dot_dimension_numbers<[1], [0], [0], [1], [0, 0, 1, 1], [], []>} : vector<2x16xbf16>, vector<16x64xbf16>, vector<2x64xf32> -> vector<2x64xf32>
    %150 = arith.addf %147, %149 : vector<2x64xf32>
    %151 = vector.extract_strided_slice %150 {offsets = [0, 0], sizes = [2, 48], strides = [1, 1]} : vector<2x64xf32> to vector<2x48xf32>
    %152 = arith.negf %151 : vector<2x48xf32>
    %153 = math.exp %152 : vector<2x48xf32>
    %cst_92 = arith.constant 1.000000e+00 : f32
    %154 = vector.broadcast %cst_92 : f32 to vector<2x48xf32>
    %155 = arith.addf %154, %153 : vector<2x48xf32>
    %156 = arith.divf %154, %155 : vector<2x48xf32>
    %157 = vector.extract_strided_slice %150 {offsets = [0, 48], sizes = [2, 16], strides = [1, 1]} : vector<2x64xf32> to vector<2x16xf32>
    %158 = math.tanh %157 : vector<2x16xf32>
    %159 = vector.extract_strided_slice %156 {offsets = [0, 0], sizes = [2, 16], strides = [1, 1]} : vector<2x48xf32> to vector<2x16xf32>
    %160 = vector.extract_strided_slice %156 {offsets = [0, 16], sizes = [2, 16], strides = [1, 1]} : vector<2x48xf32> to vector<2x16xf32>
    %161 = vector.extract_strided_slice %156 {offsets = [0, 32], sizes = [2, 16], strides = [1, 1]} : vector<2x48xf32> to vector<2x16xf32>
    %162 = arith.mulf %160, %144 : vector<2x16xf32>
    %163 = arith.mulf %159, %158 : vector<2x16xf32>
    %164 = arith.addf %162, %163 : vector<2x16xf32>
    %165 = math.tanh %164 : vector<2x16xf32>
    %166 = arith.mulf %161, %165 : vector<2x16xf32>
    %c0_93 = arith.constant 0 : index
    %c0_94 = arith.constant 0 : index
    %167 = vector.load %arg8[%c0_93, %c0_94] : memref<2x16xf32, #tpu.memory_space<vmem>>, vector<2x16xf32>
    tpu.vector_store %arg8[%c0_93, %c0_94], %166 {strides = array<i32>} : memref<2x16xf32, #tpu.memory_space<vmem>>, vector<2x16xf32>,
    %c0_95 = arith.constant 0 : index
    %c0_96 = arith.constant 0 : index
    %168 = vector.load %arg9[%c0_95, %c0_96] : memref<2x16xf32, #tpu.memory_space<vmem>>, vector<2x16xf32>
    tpu.vector_store %arg9[%c0_95, %c0_96], %164 {strides = array<i32>} : memref<2x16xf32, #tpu.memory_space<vmem>>, vector<2x16xf32>,
    %c0_97 = arith.constant 0 : index
    %169 = arith.index_cast %142 : i32 to index
    %c0_98 = arith.constant 0 : index
    %c0_99 = arith.constant 0 : index
    %170 = vector.load %arg5[%c0_97, %169, %c0_98, %c0_99] : memref<1x8x2x16xf32, #tpu.memory_space<vmem>>, vector<1x1x2x16xf32>
    %171 = vector.shape_cast %170 : vector<1x1x2x16xf32> to vector<2x16xf32>
    %172 = vector.shape_cast %166 : vector<2x16xf32> to vector<1x1x2x16xf32>
    tpu.vector_store %arg5[%c0_97, %169, %c0_98, %c0_99], %172 {strides = array<i32>} : memref<1x8x2x16xf32, #tpu.memory_space<vmem>>, vector<1x1x2x16xf32>,
    %c5_i32 = arith.constant 5 : i32
    %c0_i32_100 = arith.constant 0 : i32
    %173 = arith.cmpi eq, %arg0, %c0_i32_100 : i32
    %c7_i32_101 = arith.constant 7 : i32
    %174 = arith.subi %c7_i32_101, %c5_i32 : i32
    %175 = arith.select %173, %c5_i32, %174 : i32
    %c0_102 = arith.constant 0 : index
    %c0_103 = arith.constant 0 : index
    %176 = vector.load %arg8[%c0_102, %c0_103] : memref<2x16xf32, #tpu.memory_space<vmem>>, vector<2x16xf32>
    %c0_104 = arith.constant 0 : index
    %c0_105 = arith.constant 0 : index
    %177 = vector.load %arg9[%c0_104, %c0_105] : memref<2x16xf32, #tpu.memory_space<vmem>>, vector<2x16xf32>
    %c0_106 = arith.constant 0 : index
    %178 = arith.index_cast %175 : i32 to index
    %c0_107 = arith.constant 0 : index
    %c0_108 = arith.constant 0 : index
    %179 = vector.load %arg1[%c0_106, %178, %c0_107, %c0_108] : memref<1x8x2x64xf32, #tpu.memory_space<vmem>>, vector<1x1x2x64xf32>
    %180 = vector.shape_cast %179 : vector<1x1x2x64xf32> to vector<2x64xf32>
    %181 = arith.truncf %176 : vector<2x16xf32> to vector<2x16xbf16>
    %cst_109 = arith.constant dense<0.000000e+00> : vector<2x64xf32>
    %182 = tpu.matmul %181, %7, %cst_109 {dimension_numbers = #tpu.dot_dimension_numbers<[1], [0], [0], [1], [0, 0, 1, 1], [], []>} : vector<2x16xbf16>, vector<16x64xbf16>, vector<2x64xf32> -> vector<2x64xf32>
    %183 = arith.addf %180, %182 : vector<2x64xf32>
    %184 = vector.extract_strided_slice %183 {offsets = [0, 0], sizes = [2, 48], strides = [1, 1]} : vector<2x64xf32> to vector<2x48xf32>
    %185 = arith.negf %184 : vector<2x48xf32>
    %186 = math.exp %185 : vector<2x48xf32>
    %cst_110 = arith.constant 1.000000e+00 : f32
    %187 = vector.broadcast %cst_110 : f32 to vector<2x48xf32>
    %188 = arith.addf %187, %186 : vector<2x48xf32>
    %189 = arith.divf %187, %188 : vector<2x48xf32>
    %190 = vector.extract_strided_slice %183 {offsets = [0, 48], sizes = [2, 16], strides = [1, 1]} : vector<2x64xf32> to vector<2x16xf32>
    %191 = math.tanh %190 : vector<2x16xf32>
    %192 = vector.extract_strided_slice %189 {offsets = [0, 0], sizes = [2, 16], strides = [1, 1]} : vector<2x48xf32> to vector<2x16xf32>
    %193 = vector.extract_strided_slice %189 {offsets = [0, 16], sizes = [2, 16], strides = [1, 1]} : vector<2x48xf32> to vector<2x16xf32>
    %194 = vector.extract_strided_slice %189 {offsets = [0, 32], sizes = [2, 16], strides = [1, 1]} : vector<2x48xf32> to vector<2x16xf32>
    %195 = arith.mulf %193, %177 : vector<2x16xf32>
    %196 = arith.mulf %192, %191 : vector<2x16xf32>
    %197 = arith.addf %195, %196 : vector<2x16xf32>
    %198 = math.tanh %197 : vector<2x16xf32>
    %199 = arith.mulf %194, %198 : vector<2x16xf32>
    %c0_111 = arith.constant 0 : index
    %c0_112 = arith.constant 0 : index
    %200 = vector.load %arg8[%c0_111, %c0_112] : memref<2x16xf32, #tpu.memory_space<vmem>>, vector<2x16xf32>
    tpu.vector_store %arg8[%c0_111, %c0_112], %199 {strides = array<i32>} : memref<2x16xf32, #tpu.memory_space<vmem>>, vector<2x16xf32>,
    %c0_113 = arith.constant 0 : index
    %c0_114 = arith.constant 0 : index
    %201 = vector.load %arg9[%c0_113, %c0_114] : memref<2x16xf32, #tpu.memory_space<vmem>>, vector<2x16xf32>
    tpu.vector_store %arg9[%c0_113, %c0_114], %197 {strides = array<i32>} : memref<2x16xf32, #tpu.memory_space<vmem>>, vector<2x16xf32>,
    %c0_115 = arith.constant 0 : index
    %202 = arith.index_cast %175 : i32 to index
    %c0_116 = arith.constant 0 : index
    %c0_117 = arith.constant 0 : index
    %203 = vector.load %arg5[%c0_115, %202, %c0_116, %c0_117] : memref<1x8x2x16xf32, #tpu.memory_space<vmem>>, vector<1x1x2x16xf32>
    %204 = vector.shape_cast %203 : vector<1x1x2x16xf32> to vector<2x16xf32>
    %205 = vector.shape_cast %199 : vector<2x16xf32> to vector<1x1x2x16xf32>
    tpu.vector_store %arg5[%c0_115, %202, %c0_116, %c0_117], %205 {strides = array<i32>} : memref<1x8x2x16xf32, #tpu.memory_space<vmem>>, vector<1x1x2x16xf32>,
    %c6_i32 = arith.constant 6 : i32
    %c0_i32_118 = arith.constant 0 : i32
    %206 = arith.cmpi eq, %arg0, %c0_i32_118 : i32
    %c7_i32_119 = arith.constant 7 : i32
    %207 = arith.subi %c7_i32_119, %c6_i32 : i32
    %208 = arith.select %206, %c6_i32, %207 : i32
    %c0_120 = arith.constant 0 : index
    %c0_121 = arith.constant 0 : index
    %209 = vector.load %arg8[%c0_120, %c0_121] : memref<2x16xf32, #tpu.memory_space<vmem>>, vector<2x16xf32>
    %c0_122 = arith.constant 0 : index
    %c0_123 = arith.constant 0 : index
    %210 = vector.load %arg9[%c0_122, %c0_123] : memref<2x16xf32, #tpu.memory_space<vmem>>, vector<2x16xf32>
    %c0_124 = arith.constant 0 : index
    %211 = arith.index_cast %208 : i32 to index
    %c0_125 = arith.constant 0 : index
    %c0_126 = arith.constant 0 : index
    %212 = vector.load %arg1[%c0_124, %211, %c0_125, %c0_126] : memref<1x8x2x64xf32, #tpu.memory_space<vmem>>, vector<1x1x2x64xf32>
    %213 = vector.shape_cast %212 : vector<1x1x2x64xf32> to vector<2x64xf32>
    %214 = arith.truncf %209 : vector<2x16xf32> to vector<2x16xbf16>
    %cst_127 = arith.constant dense<0.000000e+00> : vector<2x64xf32>
    %215 = tpu.matmul %214, %7, %cst_127 {dimension_numbers = #tpu.dot_dimension_numbers<[1], [0], [0], [1], [0, 0, 1, 1], [], []>} : vector<2x16xbf16>, vector<16x64xbf16>, vector<2x64xf32> -> vector<2x64xf32>
    %216 = arith.addf %213, %215 : vector<2x64xf32>
    %217 = vector.extract_strided_slice %216 {offsets = [0, 0], sizes = [2, 48], strides = [1, 1]} : vector<2x64xf32> to vector<2x48xf32>
    %218 = arith.negf %217 : vector<2x48xf32>
    %219 = math.exp %218 : vector<2x48xf32>
    %cst_128 = arith.constant 1.000000e+00 : f32
    %220 = vector.broadcast %cst_128 : f32 to vector<2x48xf32>
    %221 = arith.addf %220, %219 : vector<2x48xf32>
    %222 = arith.divf %220, %221 : vector<2x48xf32>
    %223 = vector.extract_strided_slice %216 {offsets = [0, 48], sizes = [2, 16], strides = [1, 1]} : vector<2x64xf32> to vector<2x16xf32>
    %224 = math.tanh %223 : vector<2x16xf32>
    %225 = vector.extract_strided_slice %222 {offsets = [0, 0], sizes = [2, 16], strides = [1, 1]} : vector<2x48xf32> to vector<2x16xf32>
    %226 = vector.extract_strided_slice %222 {offsets = [0, 16], sizes = [2, 16], strides = [1, 1]} : vector<2x48xf32> to vector<2x16xf32>
    %227 = vector.extract_strided_slice %222 {offsets = [0, 32], sizes = [2, 16], strides = [1, 1]} : vector<2x48xf32> to vector<2x16xf32>
    %228 = arith.mulf %226, %210 : vector<2x16xf32>
    %229 = arith.mulf %225, %224 : vector<2x16xf32>
    %230 = arith.addf %228, %229 : vector<2x16xf32>
    %231 = math.tanh %230 : vector<2x16xf32>
    %232 = arith.mulf %227, %231 : vector<2x16xf32>
    %c0_129 = arith.constant 0 : index
    %c0_130 = arith.constant 0 : index
    %233 = vector.load %arg8[%c0_129, %c0_130] : memref<2x16xf32, #tpu.memory_space<vmem>>, vector<2x16xf32>
    tpu.vector_store %arg8[%c0_129, %c0_130], %232 {strides = array<i32>} : memref<2x16xf32, #tpu.memory_space<vmem>>, vector<2x16xf32>,
    %c0_131 = arith.constant 0 : index
    %c0_132 = arith.constant 0 : index
    %234 = vector.load %arg9[%c0_131, %c0_132] : memref<2x16xf32, #tpu.memory_space<vmem>>, vector<2x16xf32>
    tpu.vector_store %arg9[%c0_131, %c0_132], %230 {strides = array<i32>} : memref<2x16xf32, #tpu.memory_space<vmem>>, vector<2x16xf32>,
    %c0_133 = arith.constant 0 : index
    %235 = arith.index_cast %208 : i32 to index
    %c0_134 = arith.constant 0 : index
    %c0_135 = arith.constant 0 : index
    %236 = vector.load %arg5[%c0_133, %235, %c0_134, %c0_135] : memref<1x8x2x16xf32, #tpu.memory_space<vmem>>, vector<1x1x2x16xf32>
    %237 = vector.shape_cast %236 : vector<1x1x2x16xf32> to vector<2x16xf32>
    %238 = vector.shape_cast %232 : vector<2x16xf32> to vector<1x1x2x16xf32>
    tpu.vector_store %arg5[%c0_133, %235, %c0_134, %c0_135], %238 {strides = array<i32>} : memref<1x8x2x16xf32, #tpu.memory_space<vmem>>, vector<1x1x2x16xf32>,
    %c7_i32_136 = arith.constant 7 : i32
    %c0_i32_137 = arith.constant 0 : i32
    %239 = arith.cmpi eq, %arg0, %c0_i32_137 : i32
    %c7_i32_138 = arith.constant 7 : i32
    %240 = arith.subi %c7_i32_138, %c7_i32_136 : i32
    %241 = arith.select %239, %c7_i32_136, %240 : i32
    %c0_139 = arith.constant 0 : index
    %c0_140 = arith.constant 0 : index
    %242 = vector.load %arg8[%c0_139, %c0_140] : memref<2x16xf32, #tpu.memory_space<vmem>>, vector<2x16xf32>
    %c0_141 = arith.constant 0 : index
    %c0_142 = arith.constant 0 : index
    %243 = vector.load %arg9[%c0_141, %c0_142] : memref<2x16xf32, #tpu.memory_space<vmem>>, vector<2x16xf32>
    %c0_143 = arith.constant 0 : index
    %244 = arith.index_cast %241 : i32 to index
    %c0_144 = arith.constant 0 : index
    %c0_145 = arith.constant 0 : index
    %245 = vector.load %arg1[%c0_143, %244, %c0_144, %c0_145] : memref<1x8x2x64xf32, #tpu.memory_space<vmem>>, vector<1x1x2x64xf32>
    %246 = vector.shape_cast %245 : vector<1x1x2x64xf32> to vector<2x64xf32>
    %247 = arith.truncf %242 : vector<2x16xf32> to vector<2x16xbf16>
    %cst_146 = arith.constant dense<0.000000e+00> : vector<2x64xf32>
    %248 = tpu.matmul %247, %7, %cst_146 {dimension_numbers = #tpu.dot_dimension_numbers<[1], [0], [0], [1], [0, 0, 1, 1], [], []>} : vector<2x16xbf16>, vector<16x64xbf16>, vector<2x64xf32> -> vector<2x64xf32>
    %249 = arith.addf %246, %248 : vector<2x64xf32>
    %250 = vector.extract_strided_slice %249 {offsets = [0, 0], sizes = [2, 48], strides = [1, 1]} : vector<2x64xf32> to vector<2x48xf32>
    %251 = arith.negf %250 : vector<2x48xf32>
    %252 = math.exp %251 : vector<2x48xf32>
    %cst_147 = arith.constant 1.000000e+00 : f32
    %253 = vector.broadcast %cst_147 : f32 to vector<2x48xf32>
    %254 = arith.addf %253, %252 : vector<2x48xf32>
    %255 = arith.divf %253, %254 : vector<2x48xf32>
    %256 = vector.extract_strided_slice %249 {offsets = [0, 48], sizes = [2, 16], strides = [1, 1]} : vector<2x64xf32> to vector<2x16xf32>
    %257 = math.tanh %256 : vector<2x16xf32>
    %258 = vector.extract_strided_slice %255 {offsets = [0, 0], sizes = [2, 16], strides = [1, 1]} : vector<2x48xf32> to vector<2x16xf32>
    %259 = vector.extract_strided_slice %255 {offsets = [0, 16], sizes = [2, 16], strides = [1, 1]} : vector<2x48xf32> to vector<2x16xf32>
    %260 = vector.extract_strided_slice %255 {offsets = [0, 32], sizes = [2, 16], strides = [1, 1]} : vector<2x48xf32> to vector<2x16xf32>
    %261 = arith.mulf %259, %243 : vector<2x16xf32>
    %262 = arith.mulf %258, %257 : vector<2x16xf32>
    %263 = arith.addf %261, %262 : vector<2x16xf32>
    %264 = math.tanh %263 : vector<2x16xf32>
    %265 = arith.mulf %260, %264 : vector<2x16xf32>
    %c0_148 = arith.constant 0 : index
    %c0_149 = arith.constant 0 : index
    %266 = vector.load %arg8[%c0_148, %c0_149] : memref<2x16xf32, #tpu.memory_space<vmem>>, vector<2x16xf32>
    tpu.vector_store %arg8[%c0_148, %c0_149], %265 {strides = array<i32>} : memref<2x16xf32, #tpu.memory_space<vmem>>, vector<2x16xf32>,
    %c0_150 = arith.constant 0 : index
    %c0_151 = arith.constant 0 : index
    %267 = vector.load %arg9[%c0_150, %c0_151] : memref<2x16xf32, #tpu.memory_space<vmem>>, vector<2x16xf32>
    tpu.vector_store %arg9[%c0_150, %c0_151], %263 {strides = array<i32>} : memref<2x16xf32, #tpu.memory_space<vmem>>, vector<2x16xf32>,
    %c0_152 = arith.constant 0 : index
    %268 = arith.index_cast %241 : i32 to index
    %c0_153 = arith.constant 0 : index
    %c0_154 = arith.constant 0 : index
    %269 = vector.load %arg5[%c0_152, %268, %c0_153, %c0_154] : memref<1x8x2x16xf32, #tpu.memory_space<vmem>>, vector<1x1x2x16xf32>
    %270 = vector.shape_cast %269 : vector<1x1x2x16xf32> to vector<2x16xf32>
    %271 = vector.shape_cast %265 : vector<2x16xf32> to vector<1x1x2x16xf32>
    tpu.vector_store %arg5[%c0_152, %268, %c0_153, %c0_154], %271 {strides = array<i32>} : memref<1x8x2x16xf32, #tpu.memory_space<vmem>>, vector<1x1x2x16xf32>,
    %c8_i32 = arith.constant 8 : i32
    %c0_155 = arith.constant 0 : index
    %c0_156 = arith.constant 0 : index
    %272 = vector.load %arg8[%c0_155, %c0_156] : memref<2x16xf32, #tpu.memory_space<vmem>>, vector<2x16xf32>
    %c0_157 = arith.constant 0 : index
    %c0_158 = arith.constant 0 : index
    %c0_159 = arith.constant 0 : index
    %273 = vector.load %arg6[%c0_157, %c0_158, %c0_159] : memref<1x2x16xf32, #tpu.memory_space<vmem>>, vector<1x2x16xf32>
    %274 = vector.shape_cast %273 : vector<1x2x16xf32> to vector<2x16xf32>
    %275 = vector.shape_cast %272 : vector<2x16xf32> to vector<1x2x16xf32>
    tpu.vector_store %arg6[%c0_157, %c0_158, %c0_159], %275 {strides = array<i32>} : memref<1x2x16xf32, #tpu.memory_space<vmem>>, vector<1x2x16xf32>,
    %c0_160 = arith.constant 0 : index
    %c0_161 = arith.constant 0 : index
    %276 = vector.load %arg9[%c0_160, %c0_161] : memref<2x16xf32, #tpu.memory_space<vmem>>, vector<2x16xf32>
    %c0_162 = arith.constant 0 : index
    %c0_163 = arith.constant 0 : index
    %c0_164 = arith.constant 0 : index
    %277 = vector.load %arg7[%c0_162, %c0_163, %c0_164] : memref<1x2x16xf32, #tpu.memory_space<vmem>>, vector<1x2x16xf32>
    %278 = vector.shape_cast %277 : vector<1x2x16xf32> to vector<2x16xf32>
    %279 = vector.shape_cast %276 : vector<2x16xf32> to vector<1x2x16xf32>
    tpu.vector_store %arg7[%c0_162, %c0_163, %c0_164], %279 {strides = array<i32>} : memref<1x2x16xf32, #tpu.memory_space<vmem>>, vector<1x2x16xf32>,
    return
  }
  func.func @transform_0(%arg0: i32) -> (i32, i32, i32, i32) {
    %c0_i32 = arith.constant 0 : i32
    %c0_i32_0 = arith.constant 0 : i32
    %c0_i32_1 = arith.constant 0 : i32
    %c0_i32_2 = arith.constant 0 : i32
    return %arg0, %c0_i32, %c0_i32_0, %c0_i32_1 : i32, i32, i32, i32
  }
  func.func @transform_1(%arg0: i32) -> (i32, i32, i32) {
    %c0_i32 = arith.constant 0 : i32
    %c0_i32_0 = arith.constant 0 : i32
    %c0_i32_1 = arith.constant 0 : i32
    return %arg0, %c0_i32, %c0_i32_0 : i32, i32, i32
  }
  func.func @transform_2(%arg0: i32) -> (i32, i32, i32) {
    %c0_i32 = arith.constant 0 : i32
    %c0_i32_0 = arith.constant 0 : i32
    %c0_i32_1 = arith.constant 0 : i32
    return %arg0, %c0_i32, %c0_i32_0 : i32, i32, i32
  }
  func.func @transform_3(%arg0: i32) -> (i32, i32, i32) {
    %c0_i32 = arith.constant 0 : i32
    %c0_i32_0 = arith.constant 0 : i32
    %c0_i32_1 = arith.constant 0 : i32
    return %arg0, %c0_i32, %c0_i32_0 : i32, i32, i32
  }
  func.func @transform_4(%arg0: i32) -> (i32, i32, i32, i32) {
    %c0_i32 = arith.constant 0 : i32
    %c0_i32_0 = arith.constant 0 : i32
    %c0_i32_1 = arith.constant 0 : i32
    %c0_i32_2 = arith.constant 0 : i32
    return %arg0, %c0_i32, %c0_i32_0, %c0_i32_1 : i32, i32, i32, i32
  }
  func.func @transform_5(%arg0: i32) -> (i32, i32, i32) {
    %c0_i32 = arith.constant 0 : i32
    %c0_i32_0 = arith.constant 0 : i32
    %c0_i32_1 = arith.constant 0 : i32
    return %arg0, %c0_i32, %c0_i32_0 : i32, i32, i32
  }
  func.func @transform_6(%arg0: i32) -> (i32, i32, i32) {
    %c0_i32 = arith.constant 0 : i32
    %c0_i32_0 = arith.constant 0 : i32
    %c0_i32_1 = arith.constant 0 : i32
    return %arg0, %c0_i32, %c0_i32_0 : i32, i32, i32
  }
}

module attributes {stable_mosaic.version = 11 : i64} {
  func.func @_lstm_dir_kernel(%arg0: i32, %arg1: memref<1x6x2x64xf32, #tpu.memory_space<vmem>>, %arg2: memref<1x16x64xbf16, #tpu.memory_space<vmem>>, %arg3: memref<1x2x16xf32, #tpu.memory_space<vmem>>, %arg4: memref<1x2x16xf32, #tpu.memory_space<vmem>>, %arg5: memref<1x6x2x16xf32, #tpu.memory_space<vmem>>, %arg6: memref<1x2x16xf32, #tpu.memory_space<vmem>>, %arg7: memref<1x2x16xf32, #tpu.memory_space<vmem>>, %arg8: memref<2x16xf32, #tpu.memory_space<vmem>>, %arg9: memref<2x16xf32, #tpu.memory_space<vmem>>) attributes {dimension_semantics = [#tpu.dimension_semantics<parallel>], iteration_bounds = array<i64: 2>, scalar_prefetch = 0 : i64, scratch_operands = 2 : i64, tpu.core_type = #tpu.core_type<tc>, window_params = [{transform_indices = @transform_0, window_bounds = array<i64: 1, 6, 2, 64>}, {transform_indices = @transform_1, window_bounds = array<i64: 1, 16, 64>}, {transform_indices = @transform_2, window_bounds = array<i64: 1, 2, 16>}, {transform_indices = @transform_3, window_bounds = array<i64: 1, 2, 16>}, {transform_indices = @transform_4, window_bounds = array<i64: 1, 6, 2, 16>}, {transform_indices = @transform_5, window_bounds = array<i64: 1, 2, 16>}, {transform_indices = @transform_6, window_bounds = array<i64: 1, 2, 16>}]} {
    %c0 = arith.constant 0 : index
    %c0_0 = arith.constant 0 : index
    %c0_1 = arith.constant 0 : index
    %0 = vector.load %arg3[%c0, %c0_0, %c0_1] : memref<1x2x16xf32, #tpu.memory_space<vmem>>, vector<1x2x16xf32>
    %1 = vector.shape_cast %0 : vector<1x2x16xf32> to vector<2x16xf32>
    %c0_2 = arith.constant 0 : index
    %c0_3 = arith.constant 0 : index
    %2 = vector.load %arg8[%c0_2, %c0_3] : memref<2x16xf32, #tpu.memory_space<vmem>>, vector<2x16xf32>
    tpu.vector_store %arg8[%c0_2, %c0_3], %1 {strides = array<i32>} : memref<2x16xf32, #tpu.memory_space<vmem>>, vector<2x16xf32>,
    %c0_4 = arith.constant 0 : index
    %c0_5 = arith.constant 0 : index
    %c0_6 = arith.constant 0 : index
    %3 = vector.load %arg4[%c0_4, %c0_5, %c0_6] : memref<1x2x16xf32, #tpu.memory_space<vmem>>, vector<1x2x16xf32>
    %4 = vector.shape_cast %3 : vector<1x2x16xf32> to vector<2x16xf32>
    %c0_7 = arith.constant 0 : index
    %c0_8 = arith.constant 0 : index
    %5 = vector.load %arg9[%c0_7, %c0_8] : memref<2x16xf32, #tpu.memory_space<vmem>>, vector<2x16xf32>
    tpu.vector_store %arg9[%c0_7, %c0_8], %4 {strides = array<i32>} : memref<2x16xf32, #tpu.memory_space<vmem>>, vector<2x16xf32>,
    %c0_9 = arith.constant 0 : index
    %c0_10 = arith.constant 0 : index
    %c0_11 = arith.constant 0 : index
    %6 = vector.load %arg2[%c0_9, %c0_10, %c0_11] : memref<1x16x64xbf16, #tpu.memory_space<vmem>>, vector<1x16x64xbf16>
    %7 = vector.shape_cast %6 : vector<1x16x64xbf16> to vector<16x64xbf16>
    %c0_i32 = arith.constant 0 : i32
    %c0_i32_12 = arith.constant 0 : i32
    %8 = arith.cmpi eq, %arg0, %c0_i32_12 : i32
    %c5_i32 = arith.constant 5 : i32
    %9 = arith.subi %c5_i32, %c0_i32 : i32
    %10 = arith.select %8, %c0_i32, %9 : i32
    %c0_13 = arith.constant 0 : index
    %c0_14 = arith.constant 0 : index
    %11 = vector.load %arg8[%c0_13, %c0_14] : memref<2x16xf32, #tpu.memory_space<vmem>>, vector<2x16xf32>
    %c0_15 = arith.constant 0 : index
    %c0_16 = arith.constant 0 : index
    %12 = vector.load %arg9[%c0_15, %c0_16] : memref<2x16xf32, #tpu.memory_space<vmem>>, vector<2x16xf32>
    %c0_17 = arith.constant 0 : index
    %13 = arith.index_cast %10 : i32 to index
    %c0_18 = arith.constant 0 : index
    %c0_19 = arith.constant 0 : index
    %14 = vector.load %arg1[%c0_17, %13, %c0_18, %c0_19] : memref<1x6x2x64xf32, #tpu.memory_space<vmem>>, vector<1x1x2x64xf32>
    %15 = vector.shape_cast %14 : vector<1x1x2x64xf32> to vector<2x64xf32>
    %16 = arith.truncf %11 : vector<2x16xf32> to vector<2x16xbf16>
    %cst = arith.constant dense<0.000000e+00> : vector<2x64xf32>
    %17 = tpu.matmul %16, %7, %cst {dimension_numbers = #tpu.dot_dimension_numbers<[1], [0], [0], [1], [0, 0, 1, 1], [], []>} : vector<2x16xbf16>, vector<16x64xbf16>, vector<2x64xf32> -> vector<2x64xf32>
    %18 = arith.addf %15, %17 : vector<2x64xf32>
    %19 = vector.extract_strided_slice %18 {offsets = [0, 0], sizes = [2, 48], strides = [1, 1]} : vector<2x64xf32> to vector<2x48xf32>
    %20 = arith.negf %19 : vector<2x48xf32>
    %21 = math.exp %20 : vector<2x48xf32>
    %cst_20 = arith.constant 1.000000e+00 : f32
    %22 = vector.broadcast %cst_20 : f32 to vector<2x48xf32>
    %23 = arith.addf %22, %21 : vector<2x48xf32>
    %24 = arith.divf %22, %23 : vector<2x48xf32>
    %25 = vector.extract_strided_slice %18 {offsets = [0, 48], sizes = [2, 16], strides = [1, 1]} : vector<2x64xf32> to vector<2x16xf32>
    %26 = math.tanh %25 : vector<2x16xf32>
    %27 = vector.extract_strided_slice %24 {offsets = [0, 0], sizes = [2, 16], strides = [1, 1]} : vector<2x48xf32> to vector<2x16xf32>
    %28 = vector.extract_strided_slice %24 {offsets = [0, 16], sizes = [2, 16], strides = [1, 1]} : vector<2x48xf32> to vector<2x16xf32>
    %29 = vector.extract_strided_slice %24 {offsets = [0, 32], sizes = [2, 16], strides = [1, 1]} : vector<2x48xf32> to vector<2x16xf32>
    %30 = arith.mulf %28, %12 : vector<2x16xf32>
    %31 = arith.mulf %27, %26 : vector<2x16xf32>
    %32 = arith.addf %30, %31 : vector<2x16xf32>
    %33 = math.tanh %32 : vector<2x16xf32>
    %34 = arith.mulf %29, %33 : vector<2x16xf32>
    %c0_21 = arith.constant 0 : index
    %c0_22 = arith.constant 0 : index
    %35 = vector.load %arg8[%c0_21, %c0_22] : memref<2x16xf32, #tpu.memory_space<vmem>>, vector<2x16xf32>
    tpu.vector_store %arg8[%c0_21, %c0_22], %34 {strides = array<i32>} : memref<2x16xf32, #tpu.memory_space<vmem>>, vector<2x16xf32>,
    %c0_23 = arith.constant 0 : index
    %c0_24 = arith.constant 0 : index
    %36 = vector.load %arg9[%c0_23, %c0_24] : memref<2x16xf32, #tpu.memory_space<vmem>>, vector<2x16xf32>
    tpu.vector_store %arg9[%c0_23, %c0_24], %32 {strides = array<i32>} : memref<2x16xf32, #tpu.memory_space<vmem>>, vector<2x16xf32>,
    %c0_25 = arith.constant 0 : index
    %37 = arith.index_cast %10 : i32 to index
    %c0_26 = arith.constant 0 : index
    %c0_27 = arith.constant 0 : index
    %38 = vector.load %arg5[%c0_25, %37, %c0_26, %c0_27] : memref<1x6x2x16xf32, #tpu.memory_space<vmem>>, vector<1x1x2x16xf32>
    %39 = vector.shape_cast %38 : vector<1x1x2x16xf32> to vector<2x16xf32>
    %40 = vector.shape_cast %34 : vector<2x16xf32> to vector<1x1x2x16xf32>
    tpu.vector_store %arg5[%c0_25, %37, %c0_26, %c0_27], %40 {strides = array<i32>} : memref<1x6x2x16xf32, #tpu.memory_space<vmem>>, vector<1x1x2x16xf32>,
    %c1_i32 = arith.constant 1 : i32
    %c0_i32_28 = arith.constant 0 : i32
    %41 = arith.cmpi eq, %arg0, %c0_i32_28 : i32
    %c5_i32_29 = arith.constant 5 : i32
    %42 = arith.subi %c5_i32_29, %c1_i32 : i32
    %43 = arith.select %41, %c1_i32, %42 : i32
    %c0_30 = arith.constant 0 : index
    %c0_31 = arith.constant 0 : index
    %44 = vector.load %arg8[%c0_30, %c0_31] : memref<2x16xf32, #tpu.memory_space<vmem>>, vector<2x16xf32>
    %c0_32 = arith.constant 0 : index
    %c0_33 = arith.constant 0 : index
    %45 = vector.load %arg9[%c0_32, %c0_33] : memref<2x16xf32, #tpu.memory_space<vmem>>, vector<2x16xf32>
    %c0_34 = arith.constant 0 : index
    %46 = arith.index_cast %43 : i32 to index
    %c0_35 = arith.constant 0 : index
    %c0_36 = arith.constant 0 : index
    %47 = vector.load %arg1[%c0_34, %46, %c0_35, %c0_36] : memref<1x6x2x64xf32, #tpu.memory_space<vmem>>, vector<1x1x2x64xf32>
    %48 = vector.shape_cast %47 : vector<1x1x2x64xf32> to vector<2x64xf32>
    %49 = arith.truncf %44 : vector<2x16xf32> to vector<2x16xbf16>
    %cst_37 = arith.constant dense<0.000000e+00> : vector<2x64xf32>
    %50 = tpu.matmul %49, %7, %cst_37 {dimension_numbers = #tpu.dot_dimension_numbers<[1], [0], [0], [1], [0, 0, 1, 1], [], []>} : vector<2x16xbf16>, vector<16x64xbf16>, vector<2x64xf32> -> vector<2x64xf32>
    %51 = arith.addf %48, %50 : vector<2x64xf32>
    %52 = vector.extract_strided_slice %51 {offsets = [0, 0], sizes = [2, 48], strides = [1, 1]} : vector<2x64xf32> to vector<2x48xf32>
    %53 = arith.negf %52 : vector<2x48xf32>
    %54 = math.exp %53 : vector<2x48xf32>
    %cst_38 = arith.constant 1.000000e+00 : f32
    %55 = vector.broadcast %cst_38 : f32 to vector<2x48xf32>
    %56 = arith.addf %55, %54 : vector<2x48xf32>
    %57 = arith.divf %55, %56 : vector<2x48xf32>
    %58 = vector.extract_strided_slice %51 {offsets = [0, 48], sizes = [2, 16], strides = [1, 1]} : vector<2x64xf32> to vector<2x16xf32>
    %59 = math.tanh %58 : vector<2x16xf32>
    %60 = vector.extract_strided_slice %57 {offsets = [0, 0], sizes = [2, 16], strides = [1, 1]} : vector<2x48xf32> to vector<2x16xf32>
    %61 = vector.extract_strided_slice %57 {offsets = [0, 16], sizes = [2, 16], strides = [1, 1]} : vector<2x48xf32> to vector<2x16xf32>
    %62 = vector.extract_strided_slice %57 {offsets = [0, 32], sizes = [2, 16], strides = [1, 1]} : vector<2x48xf32> to vector<2x16xf32>
    %63 = arith.mulf %61, %45 : vector<2x16xf32>
    %64 = arith.mulf %60, %59 : vector<2x16xf32>
    %65 = arith.addf %63, %64 : vector<2x16xf32>
    %66 = math.tanh %65 : vector<2x16xf32>
    %67 = arith.mulf %62, %66 : vector<2x16xf32>
    %c0_39 = arith.constant 0 : index
    %c0_40 = arith.constant 0 : index
    %68 = vector.load %arg8[%c0_39, %c0_40] : memref<2x16xf32, #tpu.memory_space<vmem>>, vector<2x16xf32>
    tpu.vector_store %arg8[%c0_39, %c0_40], %67 {strides = array<i32>} : memref<2x16xf32, #tpu.memory_space<vmem>>, vector<2x16xf32>,
    %c0_41 = arith.constant 0 : index
    %c0_42 = arith.constant 0 : index
    %69 = vector.load %arg9[%c0_41, %c0_42] : memref<2x16xf32, #tpu.memory_space<vmem>>, vector<2x16xf32>
    tpu.vector_store %arg9[%c0_41, %c0_42], %65 {strides = array<i32>} : memref<2x16xf32, #tpu.memory_space<vmem>>, vector<2x16xf32>,
    %c0_43 = arith.constant 0 : index
    %70 = arith.index_cast %43 : i32 to index
    %c0_44 = arith.constant 0 : index
    %c0_45 = arith.constant 0 : index
    %71 = vector.load %arg5[%c0_43, %70, %c0_44, %c0_45] : memref<1x6x2x16xf32, #tpu.memory_space<vmem>>, vector<1x1x2x16xf32>
    %72 = vector.shape_cast %71 : vector<1x1x2x16xf32> to vector<2x16xf32>
    %73 = vector.shape_cast %67 : vector<2x16xf32> to vector<1x1x2x16xf32>
    tpu.vector_store %arg5[%c0_43, %70, %c0_44, %c0_45], %73 {strides = array<i32>} : memref<1x6x2x16xf32, #tpu.memory_space<vmem>>, vector<1x1x2x16xf32>,
    %c2_i32 = arith.constant 2 : i32
    %c0_i32_46 = arith.constant 0 : i32
    %74 = arith.cmpi eq, %arg0, %c0_i32_46 : i32
    %c5_i32_47 = arith.constant 5 : i32
    %75 = arith.subi %c5_i32_47, %c2_i32 : i32
    %76 = arith.select %74, %c2_i32, %75 : i32
    %c0_48 = arith.constant 0 : index
    %c0_49 = arith.constant 0 : index
    %77 = vector.load %arg8[%c0_48, %c0_49] : memref<2x16xf32, #tpu.memory_space<vmem>>, vector<2x16xf32>
    %c0_50 = arith.constant 0 : index
    %c0_51 = arith.constant 0 : index
    %78 = vector.load %arg9[%c0_50, %c0_51] : memref<2x16xf32, #tpu.memory_space<vmem>>, vector<2x16xf32>
    %c0_52 = arith.constant 0 : index
    %79 = arith.index_cast %76 : i32 to index
    %c0_53 = arith.constant 0 : index
    %c0_54 = arith.constant 0 : index
    %80 = vector.load %arg1[%c0_52, %79, %c0_53, %c0_54] : memref<1x6x2x64xf32, #tpu.memory_space<vmem>>, vector<1x1x2x64xf32>
    %81 = vector.shape_cast %80 : vector<1x1x2x64xf32> to vector<2x64xf32>
    %82 = arith.truncf %77 : vector<2x16xf32> to vector<2x16xbf16>
    %cst_55 = arith.constant dense<0.000000e+00> : vector<2x64xf32>
    %83 = tpu.matmul %82, %7, %cst_55 {dimension_numbers = #tpu.dot_dimension_numbers<[1], [0], [0], [1], [0, 0, 1, 1], [], []>} : vector<2x16xbf16>, vector<16x64xbf16>, vector<2x64xf32> -> vector<2x64xf32>
    %84 = arith.addf %81, %83 : vector<2x64xf32>
    %85 = vector.extract_strided_slice %84 {offsets = [0, 0], sizes = [2, 48], strides = [1, 1]} : vector<2x64xf32> to vector<2x48xf32>
    %86 = arith.negf %85 : vector<2x48xf32>
    %87 = math.exp %86 : vector<2x48xf32>
    %cst_56 = arith.constant 1.000000e+00 : f32
    %88 = vector.broadcast %cst_56 : f32 to vector<2x48xf32>
    %89 = arith.addf %88, %87 : vector<2x48xf32>
    %90 = arith.divf %88, %89 : vector<2x48xf32>
    %91 = vector.extract_strided_slice %84 {offsets = [0, 48], sizes = [2, 16], strides = [1, 1]} : vector<2x64xf32> to vector<2x16xf32>
    %92 = math.tanh %91 : vector<2x16xf32>
    %93 = vector.extract_strided_slice %90 {offsets = [0, 0], sizes = [2, 16], strides = [1, 1]} : vector<2x48xf32> to vector<2x16xf32>
    %94 = vector.extract_strided_slice %90 {offsets = [0, 16], sizes = [2, 16], strides = [1, 1]} : vector<2x48xf32> to vector<2x16xf32>
    %95 = vector.extract_strided_slice %90 {offsets = [0, 32], sizes = [2, 16], strides = [1, 1]} : vector<2x48xf32> to vector<2x16xf32>
    %96 = arith.mulf %94, %78 : vector<2x16xf32>
    %97 = arith.mulf %93, %92 : vector<2x16xf32>
    %98 = arith.addf %96, %97 : vector<2x16xf32>
    %99 = math.tanh %98 : vector<2x16xf32>
    %100 = arith.mulf %95, %99 : vector<2x16xf32>
    %c0_57 = arith.constant 0 : index
    %c0_58 = arith.constant 0 : index
    %101 = vector.load %arg8[%c0_57, %c0_58] : memref<2x16xf32, #tpu.memory_space<vmem>>, vector<2x16xf32>
    tpu.vector_store %arg8[%c0_57, %c0_58], %100 {strides = array<i32>} : memref<2x16xf32, #tpu.memory_space<vmem>>, vector<2x16xf32>,
    %c0_59 = arith.constant 0 : index
    %c0_60 = arith.constant 0 : index
    %102 = vector.load %arg9[%c0_59, %c0_60] : memref<2x16xf32, #tpu.memory_space<vmem>>, vector<2x16xf32>
    tpu.vector_store %arg9[%c0_59, %c0_60], %98 {strides = array<i32>} : memref<2x16xf32, #tpu.memory_space<vmem>>, vector<2x16xf32>,
    %c0_61 = arith.constant 0 : index
    %103 = arith.index_cast %76 : i32 to index
    %c0_62 = arith.constant 0 : index
    %c0_63 = arith.constant 0 : index
    %104 = vector.load %arg5[%c0_61, %103, %c0_62, %c0_63] : memref<1x6x2x16xf32, #tpu.memory_space<vmem>>, vector<1x1x2x16xf32>
    %105 = vector.shape_cast %104 : vector<1x1x2x16xf32> to vector<2x16xf32>
    %106 = vector.shape_cast %100 : vector<2x16xf32> to vector<1x1x2x16xf32>
    tpu.vector_store %arg5[%c0_61, %103, %c0_62, %c0_63], %106 {strides = array<i32>} : memref<1x6x2x16xf32, #tpu.memory_space<vmem>>, vector<1x1x2x16xf32>,
    %c3_i32 = arith.constant 3 : i32
    %c0_i32_64 = arith.constant 0 : i32
    %107 = arith.cmpi eq, %arg0, %c0_i32_64 : i32
    %c5_i32_65 = arith.constant 5 : i32
    %108 = arith.subi %c5_i32_65, %c3_i32 : i32
    %109 = arith.select %107, %c3_i32, %108 : i32
    %c0_66 = arith.constant 0 : index
    %c0_67 = arith.constant 0 : index
    %110 = vector.load %arg8[%c0_66, %c0_67] : memref<2x16xf32, #tpu.memory_space<vmem>>, vector<2x16xf32>
    %c0_68 = arith.constant 0 : index
    %c0_69 = arith.constant 0 : index
    %111 = vector.load %arg9[%c0_68, %c0_69] : memref<2x16xf32, #tpu.memory_space<vmem>>, vector<2x16xf32>
    %c0_70 = arith.constant 0 : index
    %112 = arith.index_cast %109 : i32 to index
    %c0_71 = arith.constant 0 : index
    %c0_72 = arith.constant 0 : index
    %113 = vector.load %arg1[%c0_70, %112, %c0_71, %c0_72] : memref<1x6x2x64xf32, #tpu.memory_space<vmem>>, vector<1x1x2x64xf32>
    %114 = vector.shape_cast %113 : vector<1x1x2x64xf32> to vector<2x64xf32>
    %115 = arith.truncf %110 : vector<2x16xf32> to vector<2x16xbf16>
    %cst_73 = arith.constant dense<0.000000e+00> : vector<2x64xf32>
    %116 = tpu.matmul %115, %7, %cst_73 {dimension_numbers = #tpu.dot_dimension_numbers<[1], [0], [0], [1], [0, 0, 1, 1], [], []>} : vector<2x16xbf16>, vector<16x64xbf16>, vector<2x64xf32> -> vector<2x64xf32>
    %117 = arith.addf %114, %116 : vector<2x64xf32>
    %118 = vector.extract_strided_slice %117 {offsets = [0, 0], sizes = [2, 48], strides = [1, 1]} : vector<2x64xf32> to vector<2x48xf32>
    %119 = arith.negf %118 : vector<2x48xf32>
    %120 = math.exp %119 : vector<2x48xf32>
    %cst_74 = arith.constant 1.000000e+00 : f32
    %121 = vector.broadcast %cst_74 : f32 to vector<2x48xf32>
    %122 = arith.addf %121, %120 : vector<2x48xf32>
    %123 = arith.divf %121, %122 : vector<2x48xf32>
    %124 = vector.extract_strided_slice %117 {offsets = [0, 48], sizes = [2, 16], strides = [1, 1]} : vector<2x64xf32> to vector<2x16xf32>
    %125 = math.tanh %124 : vector<2x16xf32>
    %126 = vector.extract_strided_slice %123 {offsets = [0, 0], sizes = [2, 16], strides = [1, 1]} : vector<2x48xf32> to vector<2x16xf32>
    %127 = vector.extract_strided_slice %123 {offsets = [0, 16], sizes = [2, 16], strides = [1, 1]} : vector<2x48xf32> to vector<2x16xf32>
    %128 = vector.extract_strided_slice %123 {offsets = [0, 32], sizes = [2, 16], strides = [1, 1]} : vector<2x48xf32> to vector<2x16xf32>
    %129 = arith.mulf %127, %111 : vector<2x16xf32>
    %130 = arith.mulf %126, %125 : vector<2x16xf32>
    %131 = arith.addf %129, %130 : vector<2x16xf32>
    %132 = math.tanh %131 : vector<2x16xf32>
    %133 = arith.mulf %128, %132 : vector<2x16xf32>
    %c0_75 = arith.constant 0 : index
    %c0_76 = arith.constant 0 : index
    %134 = vector.load %arg8[%c0_75, %c0_76] : memref<2x16xf32, #tpu.memory_space<vmem>>, vector<2x16xf32>
    tpu.vector_store %arg8[%c0_75, %c0_76], %133 {strides = array<i32>} : memref<2x16xf32, #tpu.memory_space<vmem>>, vector<2x16xf32>,
    %c0_77 = arith.constant 0 : index
    %c0_78 = arith.constant 0 : index
    %135 = vector.load %arg9[%c0_77, %c0_78] : memref<2x16xf32, #tpu.memory_space<vmem>>, vector<2x16xf32>
    tpu.vector_store %arg9[%c0_77, %c0_78], %131 {strides = array<i32>} : memref<2x16xf32, #tpu.memory_space<vmem>>, vector<2x16xf32>,
    %c0_79 = arith.constant 0 : index
    %136 = arith.index_cast %109 : i32 to index
    %c0_80 = arith.constant 0 : index
    %c0_81 = arith.constant 0 : index
    %137 = vector.load %arg5[%c0_79, %136, %c0_80, %c0_81] : memref<1x6x2x16xf32, #tpu.memory_space<vmem>>, vector<1x1x2x16xf32>
    %138 = vector.shape_cast %137 : vector<1x1x2x16xf32> to vector<2x16xf32>
    %139 = vector.shape_cast %133 : vector<2x16xf32> to vector<1x1x2x16xf32>
    tpu.vector_store %arg5[%c0_79, %136, %c0_80, %c0_81], %139 {strides = array<i32>} : memref<1x6x2x16xf32, #tpu.memory_space<vmem>>, vector<1x1x2x16xf32>,
    %c4_i32 = arith.constant 4 : i32
    %c0_i32_82 = arith.constant 0 : i32
    %140 = arith.cmpi eq, %arg0, %c0_i32_82 : i32
    %c5_i32_83 = arith.constant 5 : i32
    %141 = arith.subi %c5_i32_83, %c4_i32 : i32
    %142 = arith.select %140, %c4_i32, %141 : i32
    %c0_84 = arith.constant 0 : index
    %c0_85 = arith.constant 0 : index
    %143 = vector.load %arg8[%c0_84, %c0_85] : memref<2x16xf32, #tpu.memory_space<vmem>>, vector<2x16xf32>
    %c0_86 = arith.constant 0 : index
    %c0_87 = arith.constant 0 : index
    %144 = vector.load %arg9[%c0_86, %c0_87] : memref<2x16xf32, #tpu.memory_space<vmem>>, vector<2x16xf32>
    %c0_88 = arith.constant 0 : index
    %145 = arith.index_cast %142 : i32 to index
    %c0_89 = arith.constant 0 : index
    %c0_90 = arith.constant 0 : index
    %146 = vector.load %arg1[%c0_88, %145, %c0_89, %c0_90] : memref<1x6x2x64xf32, #tpu.memory_space<vmem>>, vector<1x1x2x64xf32>
    %147 = vector.shape_cast %146 : vector<1x1x2x64xf32> to vector<2x64xf32>
    %148 = arith.truncf %143 : vector<2x16xf32> to vector<2x16xbf16>
    %cst_91 = arith.constant dense<0.000000e+00> : vector<2x64xf32>
    %149 = tpu.matmul %148, %7, %cst_91 {dimension_numbers = #tpu.dot_dimension_numbers<[1], [0], [0], [1], [0, 0, 1, 1], [], []>} : vector<2x16xbf16>, vector<16x64xbf16>, vector<2x64xf32> -> vector<2x64xf32>
    %150 = arith.addf %147, %149 : vector<2x64xf32>
    %151 = vector.extract_strided_slice %150 {offsets = [0, 0], sizes = [2, 48], strides = [1, 1]} : vector<2x64xf32> to vector<2x48xf32>
    %152 = arith.negf %151 : vector<2x48xf32>
    %153 = math.exp %152 : vector<2x48xf32>
    %cst_92 = arith.constant 1.000000e+00 : f32
    %154 = vector.broadcast %cst_92 : f32 to vector<2x48xf32>
    %155 = arith.addf %154, %153 : vector<2x48xf32>
    %156 = arith.divf %154, %155 : vector<2x48xf32>
    %157 = vector.extract_strided_slice %150 {offsets = [0, 48], sizes = [2, 16], strides = [1, 1]} : vector<2x64xf32> to vector<2x16xf32>
    %158 = math.tanh %157 : vector<2x16xf32>
    %159 = vector.extract_strided_slice %156 {offsets = [0, 0], sizes = [2, 16], strides = [1, 1]} : vector<2x48xf32> to vector<2x16xf32>
    %160 = vector.extract_strided_slice %156 {offsets = [0, 16], sizes = [2, 16], strides = [1, 1]} : vector<2x48xf32> to vector<2x16xf32>
    %161 = vector.extract_strided_slice %156 {offsets = [0, 32], sizes = [2, 16], strides = [1, 1]} : vector<2x48xf32> to vector<2x16xf32>
    %162 = arith.mulf %160, %144 : vector<2x16xf32>
    %163 = arith.mulf %159, %158 : vector<2x16xf32>
    %164 = arith.addf %162, %163 : vector<2x16xf32>
    %165 = math.tanh %164 : vector<2x16xf32>
    %166 = arith.mulf %161, %165 : vector<2x16xf32>
    %c0_93 = arith.constant 0 : index
    %c0_94 = arith.constant 0 : index
    %167 = vector.load %arg8[%c0_93, %c0_94] : memref<2x16xf32, #tpu.memory_space<vmem>>, vector<2x16xf32>
    tpu.vector_store %arg8[%c0_93, %c0_94], %166 {strides = array<i32>} : memref<2x16xf32, #tpu.memory_space<vmem>>, vector<2x16xf32>,
    %c0_95 = arith.constant 0 : index
    %c0_96 = arith.constant 0 : index
    %168 = vector.load %arg9[%c0_95, %c0_96] : memref<2x16xf32, #tpu.memory_space<vmem>>, vector<2x16xf32>
    tpu.vector_store %arg9[%c0_95, %c0_96], %164 {strides = array<i32>} : memref<2x16xf32, #tpu.memory_space<vmem>>, vector<2x16xf32>,
    %c0_97 = arith.constant 0 : index
    %169 = arith.index_cast %142 : i32 to index
    %c0_98 = arith.constant 0 : index
    %c0_99 = arith.constant 0 : index
    %170 = vector.load %arg5[%c0_97, %169, %c0_98, %c0_99] : memref<1x6x2x16xf32, #tpu.memory_space<vmem>>, vector<1x1x2x16xf32>
    %171 = vector.shape_cast %170 : vector<1x1x2x16xf32> to vector<2x16xf32>
    %172 = vector.shape_cast %166 : vector<2x16xf32> to vector<1x1x2x16xf32>
    tpu.vector_store %arg5[%c0_97, %169, %c0_98, %c0_99], %172 {strides = array<i32>} : memref<1x6x2x16xf32, #tpu.memory_space<vmem>>, vector<1x1x2x16xf32>,
    %c5_i32_100 = arith.constant 5 : i32
    %c0_i32_101 = arith.constant 0 : i32
    %173 = arith.cmpi eq, %arg0, %c0_i32_101 : i32
    %c5_i32_102 = arith.constant 5 : i32
    %174 = arith.subi %c5_i32_102, %c5_i32_100 : i32
    %175 = arith.select %173, %c5_i32_100, %174 : i32
    %c0_103 = arith.constant 0 : index
    %c0_104 = arith.constant 0 : index
    %176 = vector.load %arg8[%c0_103, %c0_104] : memref<2x16xf32, #tpu.memory_space<vmem>>, vector<2x16xf32>
    %c0_105 = arith.constant 0 : index
    %c0_106 = arith.constant 0 : index
    %177 = vector.load %arg9[%c0_105, %c0_106] : memref<2x16xf32, #tpu.memory_space<vmem>>, vector<2x16xf32>
    %c0_107 = arith.constant 0 : index
    %178 = arith.index_cast %175 : i32 to index
    %c0_108 = arith.constant 0 : index
    %c0_109 = arith.constant 0 : index
    %179 = vector.load %arg1[%c0_107, %178, %c0_108, %c0_109] : memref<1x6x2x64xf32, #tpu.memory_space<vmem>>, vector<1x1x2x64xf32>
    %180 = vector.shape_cast %179 : vector<1x1x2x64xf32> to vector<2x64xf32>
    %181 = arith.truncf %176 : vector<2x16xf32> to vector<2x16xbf16>
    %cst_110 = arith.constant dense<0.000000e+00> : vector<2x64xf32>
    %182 = tpu.matmul %181, %7, %cst_110 {dimension_numbers = #tpu.dot_dimension_numbers<[1], [0], [0], [1], [0, 0, 1, 1], [], []>} : vector<2x16xbf16>, vector<16x64xbf16>, vector<2x64xf32> -> vector<2x64xf32>
    %183 = arith.addf %180, %182 : vector<2x64xf32>
    %184 = vector.extract_strided_slice %183 {offsets = [0, 0], sizes = [2, 48], strides = [1, 1]} : vector<2x64xf32> to vector<2x48xf32>
    %185 = arith.negf %184 : vector<2x48xf32>
    %186 = math.exp %185 : vector<2x48xf32>
    %cst_111 = arith.constant 1.000000e+00 : f32
    %187 = vector.broadcast %cst_111 : f32 to vector<2x48xf32>
    %188 = arith.addf %187, %186 : vector<2x48xf32>
    %189 = arith.divf %187, %188 : vector<2x48xf32>
    %190 = vector.extract_strided_slice %183 {offsets = [0, 48], sizes = [2, 16], strides = [1, 1]} : vector<2x64xf32> to vector<2x16xf32>
    %191 = math.tanh %190 : vector<2x16xf32>
    %192 = vector.extract_strided_slice %189 {offsets = [0, 0], sizes = [2, 16], strides = [1, 1]} : vector<2x48xf32> to vector<2x16xf32>
    %193 = vector.extract_strided_slice %189 {offsets = [0, 16], sizes = [2, 16], strides = [1, 1]} : vector<2x48xf32> to vector<2x16xf32>
    %194 = vector.extract_strided_slice %189 {offsets = [0, 32], sizes = [2, 16], strides = [1, 1]} : vector<2x48xf32> to vector<2x16xf32>
    %195 = arith.mulf %193, %177 : vector<2x16xf32>
    %196 = arith.mulf %192, %191 : vector<2x16xf32>
    %197 = arith.addf %195, %196 : vector<2x16xf32>
    %198 = math.tanh %197 : vector<2x16xf32>
    %199 = arith.mulf %194, %198 : vector<2x16xf32>
    %c0_112 = arith.constant 0 : index
    %c0_113 = arith.constant 0 : index
    %200 = vector.load %arg8[%c0_112, %c0_113] : memref<2x16xf32, #tpu.memory_space<vmem>>, vector<2x16xf32>
    tpu.vector_store %arg8[%c0_112, %c0_113], %199 {strides = array<i32>} : memref<2x16xf32, #tpu.memory_space<vmem>>, vector<2x16xf32>,
    %c0_114 = arith.constant 0 : index
    %c0_115 = arith.constant 0 : index
    %201 = vector.load %arg9[%c0_114, %c0_115] : memref<2x16xf32, #tpu.memory_space<vmem>>, vector<2x16xf32>
    tpu.vector_store %arg9[%c0_114, %c0_115], %197 {strides = array<i32>} : memref<2x16xf32, #tpu.memory_space<vmem>>, vector<2x16xf32>,
    %c0_116 = arith.constant 0 : index
    %202 = arith.index_cast %175 : i32 to index
    %c0_117 = arith.constant 0 : index
    %c0_118 = arith.constant 0 : index
    %203 = vector.load %arg5[%c0_116, %202, %c0_117, %c0_118] : memref<1x6x2x16xf32, #tpu.memory_space<vmem>>, vector<1x1x2x16xf32>
    %204 = vector.shape_cast %203 : vector<1x1x2x16xf32> to vector<2x16xf32>
    %205 = vector.shape_cast %199 : vector<2x16xf32> to vector<1x1x2x16xf32>
    tpu.vector_store %arg5[%c0_116, %202, %c0_117, %c0_118], %205 {strides = array<i32>} : memref<1x6x2x16xf32, #tpu.memory_space<vmem>>, vector<1x1x2x16xf32>,
    %c6_i32 = arith.constant 6 : i32
    %c0_119 = arith.constant 0 : index
    %c0_120 = arith.constant 0 : index
    %206 = vector.load %arg8[%c0_119, %c0_120] : memref<2x16xf32, #tpu.memory_space<vmem>>, vector<2x16xf32>
    %c0_121 = arith.constant 0 : index
    %c0_122 = arith.constant 0 : index
    %c0_123 = arith.constant 0 : index
    %207 = vector.load %arg6[%c0_121, %c0_122, %c0_123] : memref<1x2x16xf32, #tpu.memory_space<vmem>>, vector<1x2x16xf32>
    %208 = vector.shape_cast %207 : vector<1x2x16xf32> to vector<2x16xf32>
    %209 = vector.shape_cast %206 : vector<2x16xf32> to vector<1x2x16xf32>
    tpu.vector_store %arg6[%c0_121, %c0_122, %c0_123], %209 {strides = array<i32>} : memref<1x2x16xf32, #tpu.memory_space<vmem>>, vector<1x2x16xf32>,
    %c0_124 = arith.constant 0 : index
    %c0_125 = arith.constant 0 : index
    %210 = vector.load %arg9[%c0_124, %c0_125] : memref<2x16xf32, #tpu.memory_space<vmem>>, vector<2x16xf32>
    %c0_126 = arith.constant 0 : index
    %c0_127 = arith.constant 0 : index
    %c0_128 = arith.constant 0 : index
    %211 = vector.load %arg7[%c0_126, %c0_127, %c0_128] : memref<1x2x16xf32, #tpu.memory_space<vmem>>, vector<1x2x16xf32>
    %212 = vector.shape_cast %211 : vector<1x2x16xf32> to vector<2x16xf32>
    %213 = vector.shape_cast %210 : vector<2x16xf32> to vector<1x2x16xf32>
    tpu.vector_store %arg7[%c0_126, %c0_127, %c0_128], %213 {strides = array<i32>} : memref<1x2x16xf32, #tpu.memory_space<vmem>>, vector<1x2x16xf32>,
    return
  }
  func.func @transform_0(%arg0: i32) -> (i32, i32, i32, i32) {
    %c0_i32 = arith.constant 0 : i32
    %c0_i32_0 = arith.constant 0 : i32
    %c0_i32_1 = arith.constant 0 : i32
    %c0_i32_2 = arith.constant 0 : i32
    return %arg0, %c0_i32, %c0_i32_0, %c0_i32_1 : i32, i32, i32, i32
  }
  func.func @transform_1(%arg0: i32) -> (i32, i32, i32) {
    %c0_i32 = arith.constant 0 : i32
    %c0_i32_0 = arith.constant 0 : i32
    %c0_i32_1 = arith.constant 0 : i32
    return %arg0, %c0_i32, %c0_i32_0 : i32, i32, i32
  }
  func.func @transform_2(%arg0: i32) -> (i32, i32, i32) {
    %c0_i32 = arith.constant 0 : i32
    %c0_i32_0 = arith.constant 0 : i32
    %c0_i32_1 = arith.constant 0 : i32
    return %arg0, %c0_i32, %c0_i32_0 : i32, i32, i32
  }
  func.func @transform_3(%arg0: i32) -> (i32, i32, i32) {
    %c0_i32 = arith.constant 0 : i32
    %c0_i32_0 = arith.constant 0 : i32
    %c0_i32_1 = arith.constant 0 : i32
    return %arg0, %c0_i32, %c0_i32_0 : i32, i32, i32
  }
  func.func @transform_4(%arg0: i32) -> (i32, i32, i32, i32) {
    %c0_i32 = arith.constant 0 : i32
    %c0_i32_0 = arith.constant 0 : i32
    %c0_i32_1 = arith.constant 0 : i32
    %c0_i32_2 = arith.constant 0 : i32
    return %arg0, %c0_i32, %c0_i32_0, %c0_i32_1 : i32, i32, i32, i32
  }
  func.func @transform_5(%arg0: i32) -> (i32, i32, i32) {
    %c0_i32 = arith.constant 0 : i32
    %c0_i32_0 = arith.constant 0 : i32
    %c0_i32_1 = arith.constant 0 : i32
    return %arg0, %c0_i32, %c0_i32_0 : i32, i32, i32
  }
  func.func @transform_6(%arg0: i32) -> (i32, i32, i32) {
    %c0_i32 = arith.constant 0 : i32
    %c0_i32_0 = arith.constant 0 : i32
    %c0_i32_1 = arith.constant 0 : i32
    return %arg0, %c0_i32, %c0_i32_0 : i32, i32, i32
  }
}

module attributes {stable_mosaic.version = 11 : i64} {
  func.func @_encoder_kernel(%arg0: memref<2x6x12xf32, #tpu.memory_space<vmem>>, %arg1: memref<2x8x12xf32, #tpu.memory_space<vmem>>, %arg2: memref<2x8x32xf32, #tpu.memory_space<vmem>>, %arg3: memref<2x1x8xf32, #tpu.memory_space<vmem>>, %arg4: memref<32x64xbf16, #tpu.memory_space<vmem>>, %arg5: memref<64x32xbf16, #tpu.memory_space<vmem>>, %arg6: memref<1x32xf32, #tpu.memory_space<vmem>>, %arg7: memref<1x32xf32, #tpu.memory_space<vmem>>, %arg8: memref<2x1x32xf32, #tpu.memory_space<vmem>>, %arg9: memref<2x6x8xf32, #tpu.memory_space<vmem>>) attributes {dimension_semantics = [], scalar_prefetch = 0 : i64, scratch_operands = 0 : i64, tpu.core_type = #tpu.core_type<tc>} {
    %c0 = arith.constant 0 : index
    %c0_0 = arith.constant 0 : index
    %0 = vector.load %arg4[%c0, %c0_0] : memref<32x64xbf16, #tpu.memory_space<vmem>>, vector<32x64xbf16>
    %c0_1 = arith.constant 0 : index
    %c0_2 = arith.constant 0 : index
    %1 = vector.load %arg5[%c0_1, %c0_2] : memref<64x32xbf16, #tpu.memory_space<vmem>>, vector<64x32xbf16>
    %c0_3 = arith.constant 0 : index
    %c0_4 = arith.constant 0 : index
    %2 = vector.load %arg6[%c0_3, %c0_4] : memref<1x32xf32, #tpu.memory_space<vmem>>, vector<1x32xf32>
    %c0_5 = arith.constant 0 : index
    %c0_6 = arith.constant 0 : index
    %3 = vector.load %arg7[%c0_5, %c0_6] : memref<1x32xf32, #tpu.memory_space<vmem>>, vector<1x32xf32>
    %c0_7 = arith.constant 0 : index
    %c0_8 = arith.constant 0 : index
    %c0_9 = arith.constant 0 : index
    %4 = vector.load %arg0[%c0_7, %c0_8, %c0_9] : memref<2x6x12xf32, #tpu.memory_space<vmem>>, vector<1x6x12xf32>
    %5 = vector.shape_cast %4 : vector<1x6x12xf32> to vector<6x12xf32>
    %6 = arith.truncf %5 : vector<6x12xf32> to vector<6x12xbf16>
    %c0_10 = arith.constant 0 : index
    %c0_11 = arith.constant 0 : index
    %c0_12 = arith.constant 0 : index
    %7 = vector.load %arg1[%c0_10, %c0_11, %c0_12] : memref<2x8x12xf32, #tpu.memory_space<vmem>>, vector<1x8x12xf32>
    %8 = vector.shape_cast %7 : vector<1x8x12xf32> to vector<8x12xf32>
    %9 = arith.truncf %8 : vector<8x12xf32> to vector<8x12xbf16>
    %c0_13 = arith.constant 0 : index
    %c0_14 = arith.constant 0 : index
    %c0_15 = arith.constant 0 : index
    %10 = vector.load %arg2[%c0_13, %c0_14, %c0_15] : memref<2x8x32xf32, #tpu.memory_space<vmem>>, vector<1x8x32xf32>
    %11 = vector.shape_cast %10 : vector<1x8x32xf32> to vector<8x32xf32>
    %12 = arith.truncf %11 : vector<8x32xf32> to vector<8x32xbf16>
    %cst = arith.constant dense<0.000000e+00> : vector<6x8xf32>
    %13 = tpu.matmul %6, %9, %cst {dimension_numbers = #tpu.dot_dimension_numbers<[1], [1], [0], [0], [0, 0, 1, 0], [], []>} : vector<6x12xbf16>, vector<8x12xbf16>, vector<6x8xf32> -> vector<6x8xf32>
    %cst_16 = arith.constant 0.288675129 : f32
    %14 = vector.broadcast %cst_16 : f32 to vector<6x8xf32>
    %15 = arith.mulf %13, %14 : vector<6x8xf32>
    %c0_17 = arith.constant 0 : index
    %c0_18 = arith.constant 0 : index
    %c0_19 = arith.constant 0 : index
    %16 = vector.load %arg3[%c0_17, %c0_18, %c0_19] : memref<2x1x8xf32, #tpu.memory_space<vmem>>, vector<1x1x8xf32>
    %17 = vector.shape_cast %16 : vector<1x1x8xf32> to vector<1x8xf32>
    %cst_20 = arith.constant 5.000000e-01 : f32
    %18 = vector.broadcast %cst_20 : f32 to vector<1x8xf32>
    %19 = arith.cmpf ogt, %17, %18 : vector<1x8xf32>
    %cst_21 = arith.constant -1.000000e+09 : f32
    %20 = vector.shape_cast %19 : vector<1x8xi1> to vector<1x8xi1>
    %21 = vector.broadcast %20 : vector<1x8xi1> to vector<6x8xi1>
    %22 = vector.broadcast %cst_21 : f32 to vector<6x8xf32>
    %23 = arith.select %21, %22, %15 : vector<6x8xi1>, vector<6x8xf32>
    %cst_22 = arith.constant dense<0xFF800000> : vector<8xf32>
    %24 = vector.multi_reduction <maximumf>, %23, %cst_22 [0] : vector<6x8xf32> to vector<8xf32>
    %cst_23 = arith.constant 0xFF800000 : f32
    %25 = vector.broadcast %cst_23 : f32 to vector<8xf32>
    %26 = arith.maximumf %25, %24 : vector<8xf32>
    %27 = vector.shape_cast %26 : vector<8xf32> to vector<1x8xf32>
    %28 = vector.broadcast %27 : vector<1x8xf32> to vector<6x8xf32>
    %29 = arith.subf %23, %28 : vector<6x8xf32>
    %30 = math.exp %29 : vector<6x8xf32>
    %cst_24 = arith.constant dense<0.000000e+00> : vector<8xf32>
    %31 = vector.multi_reduction <add>, %30, %cst_24 [0] : vector<6x8xf32> to vector<8xf32>
    %32 = vector.shape_cast %31 : vector<8xf32> to vector<1x8xf32>
    %33 = vector.broadcast %32 : vector<1x8xf32> to vector<6x8xf32>
    %34 = arith.divf %30, %33 : vector<6x8xf32>
    %35 = arith.truncf %34 : vector<6x8xf32> to vector<6x8xbf16>
    %cst_25 = arith.constant dense<0.000000e+00> : vector<6x32xf32>
    %36 = tpu.matmul %35, %12, %cst_25 {dimension_numbers = #tpu.dot_dimension_numbers<[1], [0], [0], [1], [0, 0, 1, 1], [], []>} : vector<6x8xbf16>, vector<8x32xbf16>, vector<6x32xf32> -> vector<6x32xf32>
    %37 = arith.truncf %36 : vector<6x32xf32> to vector<6x32xbf16>
    %cst_26 = arith.constant dense<0.000000e+00> : vector<6x64xf32>
    %38 = tpu.matmul %37, %0, %cst_26 {dimension_numbers = #tpu.dot_dimension_numbers<[1], [0], [0], [1], [0, 0, 1, 1], [], []>} : vector<6x32xbf16>, vector<32x64xbf16>, vector<6x64xf32> -> vector<6x64xf32>
    %cst_27 = arith.constant 0.000000e+00 : f32
    %39 = vector.broadcast %cst_27 : f32 to vector<6x64xf32>
    %40 = arith.maximumf %38, %39 : vector<6x64xf32>
    %41 = arith.truncf %40 : vector<6x64xf32> to vector<6x64xbf16>
    %cst_28 = arith.constant dense<0.000000e+00> : vector<6x32xf32>
    %42 = tpu.matmul %41, %1, %cst_28 {dimension_numbers = #tpu.dot_dimension_numbers<[1], [0], [0], [1], [0, 0, 1, 1], [], []>} : vector<6x64xbf16>, vector<64x32xbf16>, vector<6x32xf32> -> vector<6x32xf32>
    %43 = arith.addf %42, %36 : vector<6x32xf32>
    %cst_29 = arith.constant dense<0.000000e+00> : vector<6xf32>
    %44 = vector.multi_reduction <add>, %43, %cst_29 [1] : vector<6x32xf32> to vector<6xf32>
    %45 = vector.shape_cast %44 : vector<6xf32> to vector<6x1xf32>
    %cst_30 = arith.constant 3.200000e+01 : f32
    %46 = vector.broadcast %cst_30 : f32 to vector<6x1xf32>
    %47 = arith.divf %45, %46 : vector<6x1xf32>
    %48 = vector.broadcast %47 : vector<6x1xf32> to vector<6x32xf32>
    %49 = arith.subf %43, %48 : vector<6x32xf32>
    %50 = arith.mulf %49, %49 : vector<6x32xf32>
    %cst_31 = arith.constant dense<0.000000e+00> : vector<6xf32>
    %51 = vector.multi_reduction <add>, %50, %cst_31 [1] : vector<6x32xf32> to vector<6xf32>
    %52 = vector.shape_cast %51 : vector<6xf32> to vector<6x1xf32>
    %cst_32 = arith.constant 3.200000e+01 : f32
    %53 = vector.broadcast %cst_32 : f32 to vector<6x1xf32>
    %54 = arith.divf %52, %53 : vector<6x1xf32>
    %55 = vector.broadcast %47 : vector<6x1xf32> to vector<6x32xf32>
    %56 = arith.subf %43, %55 : vector<6x32xf32>
    %cst_33 = arith.constant 9.99999974E-6 : f32
    %57 = vector.broadcast %cst_33 : f32 to vector<6x1xf32>
    %58 = arith.addf %54, %57 : vector<6x1xf32>
    %59 = math.rsqrt %58 : vector<6x1xf32>
    %60 = vector.broadcast %59 : vector<6x1xf32> to vector<6x32xf32>
    %61 = arith.mulf %56, %60 : vector<6x32xf32>
    %62 = vector.broadcast %2 : vector<1x32xf32> to vector<6x32xf32>
    %63 = arith.mulf %61, %62 : vector<6x32xf32>
    %64 = vector.broadcast %3 : vector<1x32xf32> to vector<6x32xf32>
    %65 = arith.addf %63, %64 : vector<6x32xf32>
    %cst_34 = arith.constant dense<0.000000e+00> : vector<32xf32>
    %66 = vector.multi_reduction <add>, %65, %cst_34 [0] : vector<6x32xf32> to vector<32xf32>
    %67 = vector.shape_cast %66 : vector<32xf32> to vector<1x32xf32>
    %cst_35 = arith.constant dense<0xFF800000> : vector<1xf32>
    %68 = vector.multi_reduction <maximumf>, %67, %cst_35 [1] : vector<1x32xf32> to vector<1xf32>
    %cst_36 = arith.constant 0xFF800000 : f32
    %69 = vector.broadcast %cst_36 : f32 to vector<1xf32>
    %70 = arith.maximumf %69, %68 : vector<1xf32>
    %71 = vector.shape_cast %70 : vector<1xf32> to vector<1x1xf32>
    %72 = vector.broadcast %71 : vector<1x1xf32> to vector<1x32xf32>
    %73 = arith.subf %67, %72 : vector<1x32xf32>
    %74 = math.exp %73 : vector<1x32xf32>
    %cst_37 = arith.constant dense<0.000000e+00> : vector<1xf32>
    %75 = vector.multi_reduction <add>, %74, %cst_37 [1] : vector<1x32xf32> to vector<1xf32>
    %76 = vector.shape_cast %75 : vector<1xf32> to vector<1x1xf32>
    %77 = vector.broadcast %76 : vector<1x1xf32> to vector<1x32xf32>
    %78 = arith.divf %74, %77 : vector<1x32xf32>
    %c0_38 = arith.constant 0 : index
    %c0_39 = arith.constant 0 : index
    %c0_40 = arith.constant 0 : index
    %79 = vector.load %arg8[%c0_38, %c0_39, %c0_40] : memref<2x1x32xf32, #tpu.memory_space<vmem>>, vector<1x1x32xf32>
    %80 = vector.shape_cast %79 : vector<1x1x32xf32> to vector<1x32xf32>
    %81 = vector.shape_cast %78 : vector<1x32xf32> to vector<1x1x32xf32>
    tpu.vector_store %arg8[%c0_38, %c0_39, %c0_40], %81 {strides = array<i32>} : memref<2x1x32xf32, #tpu.memory_space<vmem>>, vector<1x1x32xf32>,
    %c0_41 = arith.constant 0 : index
    %c0_42 = arith.constant 0 : index
    %c0_43 = arith.constant 0 : index
    %82 = vector.load %arg9[%c0_41, %c0_42, %c0_43] : memref<2x6x8xf32, #tpu.memory_space<vmem>>, vector<1x6x8xf32>
    %83 = vector.shape_cast %82 : vector<1x6x8xf32> to vector<6x8xf32>
    %84 = vector.shape_cast %34 : vector<6x8xf32> to vector<1x6x8xf32>
    tpu.vector_store %arg9[%c0_41, %c0_42, %c0_43], %84 {strides = array<i32>} : memref<2x6x8xf32, #tpu.memory_space<vmem>>, vector<1x6x8xf32>,
    %c1 = arith.constant 1 : index
    %c0_44 = arith.constant 0 : index
    %c0_45 = arith.constant 0 : index
    %85 = vector.load %arg0[%c1, %c0_44, %c0_45] : memref<2x6x12xf32, #tpu.memory_space<vmem>>, vector<1x6x12xf32>
    %86 = vector.shape_cast %85 : vector<1x6x12xf32> to vector<6x12xf32>
    %87 = arith.truncf %86 : vector<6x12xf32> to vector<6x12xbf16>
    %c1_46 = arith.constant 1 : index
    %c0_47 = arith.constant 0 : index
    %c0_48 = arith.constant 0 : index
    %88 = vector.load %arg1[%c1_46, %c0_47, %c0_48] : memref<2x8x12xf32, #tpu.memory_space<vmem>>, vector<1x8x12xf32>
    %89 = vector.shape_cast %88 : vector<1x8x12xf32> to vector<8x12xf32>
    %90 = arith.truncf %89 : vector<8x12xf32> to vector<8x12xbf16>
    %c1_49 = arith.constant 1 : index
    %c0_50 = arith.constant 0 : index
    %c0_51 = arith.constant 0 : index
    %91 = vector.load %arg2[%c1_49, %c0_50, %c0_51] : memref<2x8x32xf32, #tpu.memory_space<vmem>>, vector<1x8x32xf32>
    %92 = vector.shape_cast %91 : vector<1x8x32xf32> to vector<8x32xf32>
    %93 = arith.truncf %92 : vector<8x32xf32> to vector<8x32xbf16>
    %cst_52 = arith.constant dense<0.000000e+00> : vector<6x8xf32>
    %94 = tpu.matmul %87, %90, %cst_52 {dimension_numbers = #tpu.dot_dimension_numbers<[1], [1], [0], [0], [0, 0, 1, 0], [], []>} : vector<6x12xbf16>, vector<8x12xbf16>, vector<6x8xf32> -> vector<6x8xf32>
    %cst_53 = arith.constant 0.288675129 : f32
    %95 = vector.broadcast %cst_53 : f32 to vector<6x8xf32>
    %96 = arith.mulf %94, %95 : vector<6x8xf32>
    %c1_54 = arith.constant 1 : index
    %c0_55 = arith.constant 0 : index
    %c0_56 = arith.constant 0 : index
    %97 = vector.load %arg3[%c1_54, %c0_55, %c0_56] : memref<2x1x8xf32, #tpu.memory_space<vmem>>, vector<1x1x8xf32>
    %98 = vector.shape_cast %97 : vector<1x1x8xf32> to vector<1x8xf32>
    %cst_57 = arith.constant 5.000000e-01 : f32
    %99 = vector.broadcast %cst_57 : f32 to vector<1x8xf32>
    %100 = arith.cmpf ogt, %98, %99 : vector<1x8xf32>
    %cst_58 = arith.constant -1.000000e+09 : f32
    %101 = vector.shape_cast %100 : vector<1x8xi1> to vector<1x8xi1>
    %102 = vector.broadcast %101 : vector<1x8xi1> to vector<6x8xi1>
    %103 = vector.broadcast %cst_58 : f32 to vector<6x8xf32>
    %104 = arith.select %102, %103, %96 : vector<6x8xi1>, vector<6x8xf32>
    %cst_59 = arith.constant dense<0xFF800000> : vector<8xf32>
    %105 = vector.multi_reduction <maximumf>, %104, %cst_59 [0] : vector<6x8xf32> to vector<8xf32>
    %cst_60 = arith.constant 0xFF800000 : f32
    %106 = vector.broadcast %cst_60 : f32 to vector<8xf32>
    %107 = arith.maximumf %106, %105 : vector<8xf32>
    %108 = vector.shape_cast %107 : vector<8xf32> to vector<1x8xf32>
    %109 = vector.broadcast %108 : vector<1x8xf32> to vector<6x8xf32>
    %110 = arith.subf %104, %109 : vector<6x8xf32>
    %111 = math.exp %110 : vector<6x8xf32>
    %cst_61 = arith.constant dense<0.000000e+00> : vector<8xf32>
    %112 = vector.multi_reduction <add>, %111, %cst_61 [0] : vector<6x8xf32> to vector<8xf32>
    %113 = vector.shape_cast %112 : vector<8xf32> to vector<1x8xf32>
    %114 = vector.broadcast %113 : vector<1x8xf32> to vector<6x8xf32>
    %115 = arith.divf %111, %114 : vector<6x8xf32>
    %116 = arith.truncf %115 : vector<6x8xf32> to vector<6x8xbf16>
    %cst_62 = arith.constant dense<0.000000e+00> : vector<6x32xf32>
    %117 = tpu.matmul %116, %93, %cst_62 {dimension_numbers = #tpu.dot_dimension_numbers<[1], [0], [0], [1], [0, 0, 1, 1], [], []>} : vector<6x8xbf16>, vector<8x32xbf16>, vector<6x32xf32> -> vector<6x32xf32>
    %118 = arith.truncf %117 : vector<6x32xf32> to vector<6x32xbf16>
    %cst_63 = arith.constant dense<0.000000e+00> : vector<6x64xf32>
    %119 = tpu.matmul %118, %0, %cst_63 {dimension_numbers = #tpu.dot_dimension_numbers<[1], [0], [0], [1], [0, 0, 1, 1], [], []>} : vector<6x32xbf16>, vector<32x64xbf16>, vector<6x64xf32> -> vector<6x64xf32>
    %cst_64 = arith.constant 0.000000e+00 : f32
    %120 = vector.broadcast %cst_64 : f32 to vector<6x64xf32>
    %121 = arith.maximumf %119, %120 : vector<6x64xf32>
    %122 = arith.truncf %121 : vector<6x64xf32> to vector<6x64xbf16>
    %cst_65 = arith.constant dense<0.000000e+00> : vector<6x32xf32>
    %123 = tpu.matmul %122, %1, %cst_65 {dimension_numbers = #tpu.dot_dimension_numbers<[1], [0], [0], [1], [0, 0, 1, 1], [], []>} : vector<6x64xbf16>, vector<64x32xbf16>, vector<6x32xf32> -> vector<6x32xf32>
    %124 = arith.addf %123, %117 : vector<6x32xf32>
    %cst_66 = arith.constant dense<0.000000e+00> : vector<6xf32>
    %125 = vector.multi_reduction <add>, %124, %cst_66 [1] : vector<6x32xf32> to vector<6xf32>
    %126 = vector.shape_cast %125 : vector<6xf32> to vector<6x1xf32>
    %cst_67 = arith.constant 3.200000e+01 : f32
    %127 = vector.broadcast %cst_67 : f32 to vector<6x1xf32>
    %128 = arith.divf %126, %127 : vector<6x1xf32>
    %129 = vector.broadcast %128 : vector<6x1xf32> to vector<6x32xf32>
    %130 = arith.subf %124, %129 : vector<6x32xf32>
    %131 = arith.mulf %130, %130 : vector<6x32xf32>
    %cst_68 = arith.constant dense<0.000000e+00> : vector<6xf32>
    %132 = vector.multi_reduction <add>, %131, %cst_68 [1] : vector<6x32xf32> to vector<6xf32>
    %133 = vector.shape_cast %132 : vector<6xf32> to vector<6x1xf32>
    %cst_69 = arith.constant 3.200000e+01 : f32
    %134 = vector.broadcast %cst_69 : f32 to vector<6x1xf32>
    %135 = arith.divf %133, %134 : vector<6x1xf32>
    %136 = vector.broadcast %128 : vector<6x1xf32> to vector<6x32xf32>
    %137 = arith.subf %124, %136 : vector<6x32xf32>
    %cst_70 = arith.constant 9.99999974E-6 : f32
    %138 = vector.broadcast %cst_70 : f32 to vector<6x1xf32>
    %139 = arith.addf %135, %138 : vector<6x1xf32>
    %140 = math.rsqrt %139 : vector<6x1xf32>
    %141 = vector.broadcast %140 : vector<6x1xf32> to vector<6x32xf32>
    %142 = arith.mulf %137, %141 : vector<6x32xf32>
    %143 = vector.broadcast %2 : vector<1x32xf32> to vector<6x32xf32>
    %144 = arith.mulf %142, %143 : vector<6x32xf32>
    %145 = vector.broadcast %3 : vector<1x32xf32> to vector<6x32xf32>
    %146 = arith.addf %144, %145 : vector<6x32xf32>
    %cst_71 = arith.constant dense<0.000000e+00> : vector<32xf32>
    %147 = vector.multi_reduction <add>, %146, %cst_71 [0] : vector<6x32xf32> to vector<32xf32>
    %148 = vector.shape_cast %147 : vector<32xf32> to vector<1x32xf32>
    %cst_72 = arith.constant dense<0xFF800000> : vector<1xf32>
    %149 = vector.multi_reduction <maximumf>, %148, %cst_72 [1] : vector<1x32xf32> to vector<1xf32>
    %cst_73 = arith.constant 0xFF800000 : f32
    %150 = vector.broadcast %cst_73 : f32 to vector<1xf32>
    %151 = arith.maximumf %150, %149 : vector<1xf32>
    %152 = vector.shape_cast %151 : vector<1xf32> to vector<1x1xf32>
    %153 = vector.broadcast %152 : vector<1x1xf32> to vector<1x32xf32>
    %154 = arith.subf %148, %153 : vector<1x32xf32>
    %155 = math.exp %154 : vector<1x32xf32>
    %cst_74 = arith.constant dense<0.000000e+00> : vector<1xf32>
    %156 = vector.multi_reduction <add>, %155, %cst_74 [1] : vector<1x32xf32> to vector<1xf32>
    %157 = vector.shape_cast %156 : vector<1xf32> to vector<1x1xf32>
    %158 = vector.broadcast %157 : vector<1x1xf32> to vector<1x32xf32>
    %159 = arith.divf %155, %158 : vector<1x32xf32>
    %c1_75 = arith.constant 1 : index
    %c0_76 = arith.constant 0 : index
    %c0_77 = arith.constant 0 : index
    %160 = vector.load %arg8[%c1_75, %c0_76, %c0_77] : memref<2x1x32xf32, #tpu.memory_space<vmem>>, vector<1x1x32xf32>
    %161 = vector.shape_cast %160 : vector<1x1x32xf32> to vector<1x32xf32>
    %162 = vector.shape_cast %159 : vector<1x32xf32> to vector<1x1x32xf32>
    tpu.vector_store %arg8[%c1_75, %c0_76, %c0_77], %162 {strides = array<i32>} : memref<2x1x32xf32, #tpu.memory_space<vmem>>, vector<1x1x32xf32>,
    %c1_78 = arith.constant 1 : index
    %c0_79 = arith.constant 0 : index
    %c0_80 = arith.constant 0 : index
    %163 = vector.load %arg9[%c1_78, %c0_79, %c0_80] : memref<2x6x8xf32, #tpu.memory_space<vmem>>, vector<1x6x8xf32>
    %164 = vector.shape_cast %163 : vector<1x6x8xf32> to vector<6x8xf32>
    %165 = vector.shape_cast %115 : vector<6x8xf32> to vector<1x6x8xf32>
    tpu.vector_store %arg9[%c1_78, %c0_79, %c0_80], %165 {strides = array<i32>} : memref<2x6x8xf32, #tpu.memory_space<vmem>>, vector<1x6x8xf32>,
    return
  }
}

</mosaic_0001>

<llo_original>
// kernel: history_module_forward.8
$region0: #{history_module_forward.8}
  #allocation0 [shape = 'u32[]', space=smem, size = 0x4, offset = 0x4, fixed_abs, tag = 'smem constant byte address 0x4 - core index']
  #allocation1 [shape = 'u32[144,128]{1,0:T(1,128)}', space=vmem, size = 0x12000, scoped, tag = 'internal scratch']
  #allocation2 [shape = 'f32[2,16]{1,0:T(2,128)}', space=vmem, size = 0x400, scoped, tag = 'scratch operand']
  #allocation3 [shape = 'f32[2,16]{1,0:T(2,128)}', space=vmem, size = 0x400, scoped, tag = 'scratch operand']
  %s0 = inlined_call_operand.vmem [shape: f32[2,6,2,64], index: 0, kind: input, shape index: {}]
  %s1 = inlined_call_operand.vmem [shape: bf16[2,16,64], index: 1, kind: input, shape index: {}]
  %s2 = inlined_call_operand.vmem [shape: f32[2,2,16], index: 2, kind: input, shape index: {}]
  %s3 = inlined_call_operand.vmem [shape: f32[2,2,16], index: 3, kind: input, shape index: {}]
  %s4 = inlined_call_operand.vmem [shape: f32[2,6,2,16], index: 4, kind: output, shape index: {0}]
  %s5 = inlined_call_operand.hbm [shape: f32[2,2,16], index: 5, kind: output, shape index: {1}]
  %s6 = inlined_call_operand.hbm [shape: f32[2,2,16], index: 6, kind: output, shape index: {2}]
  %7 = xla_tuple %s4, %s5, %s6
  %s8 = sld [smem:[#allocation0]]
  $region65: #{history_module_forward.8} parent=0
    _
  %s10 = ssub.s32 1, %s8
  %s11 = scalar_select 0, %s10, %s8
  $region1: #{history_module_forward.8} parent=0
    #allocation4 [shape = 'u8[2048]{0}', space=vmem, size = 0x800, scoped, tag = 'output window, operand 1']
    #allocation5 [shape = 's32[2]{0}', space=sflag, size = 0x8, scoped, tag = 'scoped memory for history_module_forward.8']
    #allocation6 [shape = 'u8[2048]{0}', space=vmem, size = 0x800, scoped, tag = 'output window, operand 2']
    #allocation7 [shape = 's32[2]{0}', space=sflag, size = 0x8, scoped, tag = 'scoped memory for history_module_forward.8']
    %12 = vsyncpa [#allocation5], 0
    %s13 = scalar_lea.sflag [#allocation5], 1
    %14 = vsyncpa %s13, 0
    %15 = vsyncpa [#allocation7], 0
    %s16 = scalar_lea.sflag [#allocation7], 1
    %17 = vsyncpa %s16, 0
    loop: start=0, step=1, limit=4
    $region2: #{history_module_forward.8} parent=1 // loop_pre_header
      _
    $region3: #{history_module_forward.8} parent=1 // loop_header
      %s19 = sphi 0, %s23
      %p20 = scmp.ge.s32.totalorder %s19, 4
      %s29 = sphi 0, %s31
      %s32 = sphi 0, %s29
      %s33 = sphi 0, %s32
      %s49 = sphi 0, %s33
      %s55 = sphi 0, %s57
      %s58 = sphi 0, %s55
      %s59 = sphi 0, %s58
      %s75 = sphi 0, %s59
      %s81 = sphi 0, %s83
      %s84 = sphi 0, %s81
      %s85 = sphi 0, %s84
      %s101 = sphi 0, %s85
      %s107 = sphi 0, %s109
      %s110 = sphi 0, %s107
      %s111 = sphi 0, %s110
      %s127 = sphi 0, %s111
      %s133 = sphi 0, %s135
      %s136 = sphi 0, %s133
      %s137 = sphi 0, %s136
      %s153 = sphi 0, %s137
      %s159 = sphi 0, %s161
      %s162 = sphi 0, %s159
      %s163 = sphi 0, %s162
      %s179 = sphi 0, %s163
      %s185 = sphi 0, %s187
      %s188 = sphi 0, %s185
      %s189 = sphi 0, %s188
      %s205 = sphi 0, %s189
    $region4: #{history_module_forward.8} parent=1 // loop_header_branch
      %22 = sbr.rel (%p20) target = $region8
    $region5: #{history_module_forward.8} parent=1 // loop_body
      %s24 = ssub.s32 %s19, 1
      %s25 = ssub.s32 %s19, 2
      %s26 = sadd.s32 %s19, 1
      %s27 = ssub.s32 %s19, %s26
      %p28 = scmp.eq.s32.totalorder %s27, 0
      %s30 = sadd.s32 %s29, 1
      %s31 = scalar_select %p28, %s29, %s30
      %p34 = pneg %p28
      %p35 = scmp.eq.s32.totalorder %s19, 1
      %p36 = por %p34, %p35
      %p37 = scmp.ne.s32.totalorder %s29, %s32
      %p38 = scmp.eq.s32.totalorder %s19, 0
      %p39 = por %p37, %p38
      %p40 = scmp.ne.s32.totalorder %s29, %s32
      %p41 = scmp.eq.s32.totalorder %s24, 1
      %p42 = por %p40, %p41
      %p43 = scmp.ne.s32.totalorder %s32, %s33
      %p44 = scmp.eq.s32.totalorder %s24, 0
      %p45 = por %p43, %p44
      %p46 = scmp.ne.s32.totalorder %s32, %s33
      %p47 = scmp.eq.s32.totalorder %s25, 1
      %p48 = por %p46, %p47
      %p50 = scmp.ne.s32.totalorder %s33, %s49
      %p51 = scmp.eq.s32.totalorder %s25, 0
      %p52 = por %p50, %p51
      %s53 = ssub.s32 %s19, %s26
      %p54 = scmp.eq.s32.totalorder %s53, 0
      %s56 = sadd.s32 %s55, 1
      %s57 = scalar_select %p54, %s55, %s56
      %p60 = pneg %p54
      %p61 = scmp.eq.s32.totalorder %s19, 1
      %p62 = por %p60, %p61
      %p63 = scmp.ne.s32.totalorder %s55, %s58
      %p64 = scmp.eq.s32.totalorder %s19, 0
      %p65 = por %p63, %p64
      %p66 = scmp.ne.s32.totalorder %s55, %s58
      %p67 = scmp.eq.s32.totalorder %s24, 1
      %p68 = por %p66, %p67
      %p69 = scmp.ne.s32.totalorder %s58, %s59
      %p70 = scmp.eq.s32.totalorder %s24, 0
      %p71 = por %p69, %p70
      %p72 = scmp.ne.s32.totalorder %s58, %s59
      %p73 = scmp.eq.s32.totalorder %s25, 1
      %p74 = por %p72, %p73
      %p76 = scmp.ne.s32.totalorder %s59, %s75
      %p77 = scmp.eq.s32.totalorder %s25, 0
      %p78 = por %p76, %p77
      %s79 = ssub.s32 %s19, %s26
      %p80 = scmp.eq.s32.totalorder %s79, 0
      %s82 = sadd.s32 %s81, 1
      %s83 = scalar_select %p80, %s81, %s82
      %p86 = pneg %p80
      %p87 = scmp.eq.s32.totalorder %s19, 1
      %p88 = por %p86, %p87
      %p89 = scmp.ne.s32.totalorder %s81, %s84
      %p90 = scmp.eq.s32.totalorder %s19, 0
      %p91 = por %p89, %p90
      %p92 = scmp.ne.s32.totalorder %s81, %s84
      %p93 = scmp.eq.s32.totalorder %s24, 1
      %p94 = por %p92, %p93
      %p95 = scmp.ne.s32.totalorder %s84, %s85
      %p96 = scmp.eq.s32.totalorder %s24, 0
      %p97 = por %p95, %p96
      %p98 = scmp.ne.s32.totalorder %s84, %s85
      %p99 = scmp.eq.s32.totalorder %s25, 1
      %p100 = por %p98, %p99
      %p102 = scmp.ne.s32.totalorder %s85, %s101
      %p103 = scmp.eq.s32.totalorder %s25, 0
      %p104 = por %p102, %p103
      %s105 = ssub.s32 %s19, %s26
      %p106 = scmp.eq.s32.totalorder %s105, 0
      %s108 = sadd.s32 %s107, 1
      %s109 = scalar_select %p106, %s107, %s108
      %p112 = pneg %p106
      %p113 = scmp.eq.s32.totalorder %s19, 1
      %p114 = por %p112, %p113
      %p115 = scmp.ne.s32.totalorder %s107, %s110
      %p116 = scmp.eq.s32.totalorder %s19, 0
      %p117 = por %p115, %p116
      %p118 = scmp.ne.s32.totalorder %s107, %s110
      %p119 = scmp.eq.s32.totalorder %s24, 1
      %p120 = por %p118, %p119
      %p121 = scmp.ne.s32.totalorder %s110, %s111
      %p122 = scmp.eq.s32.totalorder %s24, 0
      %p123 = por %p121, %p122
      %p124 = scmp.ne.s32.totalorder %s110, %s111
      %p125 = scmp.eq.s32.totalorder %s25, 1
      %p126 = por %p124, %p125
      %p128 = scmp.ne.s32.totalorder %s111, %s127
      %p129 = scmp.eq.s32.totalorder %s25, 0
      %p130 = por %p128, %p129
      %s131 = ssub.s32 %s19, %s26
      %p132 = scmp.eq.s32.totalorder %s131, 0
      %s134 = sadd.s32 %s133, 1
      %s135 = scalar_select %p132, %s133, %s134
      %p138 = pneg %p132
      %p139 = scmp.eq.s32.totalorder %s19, 1
      %p140 = por %p138, %p139
      %p141 = scmp.ne.s32.totalorder %s133, %s136
      %p142 = scmp.eq.s32.totalorder %s19, 0
      %p143 = por %p141, %p142
      %p144 = scmp.ne.s32.totalorder %s133, %s136
      %p145 = scmp.eq.s32.totalorder %s24, 1
      %p146 = por %p144, %p145
      %p147 = scmp.ne.s32.totalorder %s136, %s137
      %p148 = scmp.eq.s32.totalorder %s24, 0
      %p149 = por %p147, %p148
      %p150 = scmp.ne.s32.totalorder %s136, %s137
      %p151 = scmp.eq.s32.totalorder %s25, 1
      %p152 = por %p150, %p151
      %p154 = scmp.ne.s32.totalorder %s137, %s153
      %p155 = scmp.eq.s32.totalorder %s25, 0
      %p156 = por %p154, %p155
      %s157 = ssub.s32 %s19, %s26
      %p158 = scmp.eq.s32.totalorder %s157, 0
      %s160 = sadd.s32 %s159, 1
      %s161 = scalar_select %p158, %s159, %s160
      %p164 = pneg %p158
      %p165 = scmp.eq.s32.totalorder %s19, 1
      %p166 = por %p164, %p165
      %p167 = scmp.ne.s32.totalorder %s159, %s162
      %p168 = scmp.eq.s32.totalorder %s19, 0
      %p169 = por %p167, %p168
      %p170 = scmp.ne.s32.totalorder %s159, %s162
      %p171 = scmp.eq.s32.totalorder %s24, 1
      %p172 = por %p170, %p171
      %p173 = scmp.ne.s32.totalorder %s162, %s163
      %p174 = scmp.eq.s32.totalorder %s24, 0
      %p175 = por %p173, %p174
      %p176 = scmp.ne.s32.totalorder %s162, %s163
      %p177 = scmp.eq.s32.totalorder %s25, 1
      %p178 = por %p176, %p177
      %p180 = scmp.ne.s32.totalorder %s163, %s179
      %p181 = scmp.eq.s32.totalorder %s25, 0
      %p182 = por %p180, %p181
      %s183 = ssub.s32 %s19, %s26
      %p184 = scmp.eq.s32.totalorder %s183, 0
      %s186 = sadd.s32 %s185, 1
      %s187 = scalar_select %p184, %s185, %s186
      %p190 = pneg %p184
      %p191 = scmp.eq.s32.totalorder %s19, 1
      %p192 = por %p190, %p191
      %p193 = scmp.ne.s32.totalorder %s185, %s188
      %p194 = scmp.eq.s32.totalorder %s19, 0
      %p195 = por %p193, %p194
      %p196 = scmp.ne.s32.totalorder %s185, %s188
      %p197 = scmp.eq.s32.totalorder %s24, 1
      %p198 = por %p196, %p197
      %p199 = scmp.ne.s32.totalorder %s188, %s189
      %p200 = scmp.eq.s32.totalorder %s24, 0
      %p201 = por %p199, %p200
      %p202 = scmp.ne.s32.totalorder %s188, %s189
      %p203 = scmp.eq.s32.totalorder %s25, 1
      %p204 = por %p202, %p203
      %p206 = scmp.ne.s32.totalorder %s189, %s205
      %p207 = scmp.eq.s32.totalorder %s25, 0
      %p208 = por %p206, %p207
      %p209 = scmp.le.s32.totalorder 1, %s19
      %p210 = scmp.lt.s32.totalorder %s19, 3
      %p211 = pnand %p209, %p210
      %p212 = pneg %p211
      // Predicated region
      $region9: #{history_module_forward.8} parent=5 // pred_check
        _
      $region10: #{history_module_forward.8} parent=5 // pred_check_branch
        %214 = sbr.rel (%p211) target = $region12
      $region11: #{history_module_forward.8} parent=5 // pred_region
        %s215 = ssub.s32 %s19, 1
      $region12: #{history_module_forward.8} parent=5 // pred_fallthru
        _
      %p216 = scmp.lt.s32.totalorder %s19, 2
      // Predicated region
      $region13: #{history_module_forward.8} parent=5 // pred_check
        %p217 = pneg %p216
      $region14: #{history_module_forward.8} parent=5 // pred_check_branch
        %219 = sbr.rel (%p217) target = $region16
      $region15: #{history_module_forward.8} parent=5 // pred_region
        // Predicated region
        $region17: #{history_module_forward.8} parent=15 // pred_check
          %p220 = pneg %p39
        $region18: #{history_module_forward.8} parent=15 // pred_check_branch
          %222 = sbr.rel (%p220) target = $region20
        $region19: #{history_module_forward.8} parent=15 // pred_region
          %p223 = scmp.lt.s32.totalorder %s19, 1
          %s224 = scalar_select %p223, %s19, 1
          %s225 = smul.addr %s224, 6
          %s226 = smul.addr %s225, 2
          %s227 = scalar_lea.vmem %s0, %s226
        $region20: #{history_module_forward.8} parent=15 // pred_fallthru
          _
        // Predicated region
        $region21: #{history_module_forward.8} parent=15 // pred_check
          %p228 = pneg %p65
        $region22: #{history_module_forward.8} parent=15 // pred_check_branch
          %230 = sbr.rel (%p228) target = $region24
        $region23: #{history_module_forward.8} parent=15 // pred_region
          %p231 = scmp.lt.s32.totalorder %s19, 1
          %s232 = scalar_select %p231, %s19, 1
          %s233 = smul.addr %s232, 2
          %s234 = smul.addr %s233, 4
          %s235 = scalar_lea.vmem %s1, %s234
        $region24: #{history_module_forward.8} parent=15 // pred_fallthru
          _
        // Predicated region
        $region25: #{history_module_forward.8} parent=15 // pred_check
          %p236 = pneg %p91
        $region26: #{history_module_forward.8} parent=15 // pred_check_branch
          %238 = sbr.rel (%p236) target = $region28
        $region27: #{history_module_forward.8} parent=15 // pred_region
          %p239 = scmp.lt.s32.totalorder %s19, 1
          %s240 = scalar_select %p239, %s19, 1
          %s241 = smul.addr %s240, 2
          %s242 = scalar_lea.vmem %s2, %s241
        $region28: #{history_module_forward.8} parent=15 // pred_fallthru
          _
        // Predicated region
        $region29: #{history_module_forward.8} parent=15 // pred_check
          %p243 = pneg %p117
        $region30: #{history_module_forward.8} parent=15 // pred_check_branch
          %245 = sbr.rel (%p243) target = $region32
        $region31: #{history_module_forward.8} parent=15 // pred_region
          %p246 = scmp.lt.s32.totalorder %s19, 1
          %s247 = scalar_select %p246, %s19, 1
          %s248 = smul.addr %s247, 2
          %s249 = scalar_lea.vmem %s3, %s248
        $region32: #{history_module_forward.8} parent=15 // pred_fallthru
          _
      $region16: #{history_module_forward.8} parent=5 // pred_fallthru
        _
      %p250 = scmp.le.s32.totalorder 1, %s19
      %p251 = scmp.lt.s32.totalorder %s19, 3
      %p252 = pnand %p250, %p251
      %p253 = pneg %p252
      // Predicated region
      $region33: #{history_module_forward.8} parent=5 // pred_check
        _
      $region34: #{history_module_forward.8} parent=5 // pred_check_branch
        %255 = sbr.rel (%p252) target = $region36
      $region35: #{history_module_forward.8} parent=5 // pred_region
        %s256 = ssub.s32 %s19, 1
        %p257 = scmp.lt.s32.totalorder %s24, 1
        %s258 = scalar_select %p257, %s24, 1
        %s259 = smul.addr %s258, 6
        %s260 = smul.addr %s259, 2
        %s261 = scalar_lea.vmem %s0, %s260
        %p262 = pneg %p45
        %p263 = pneg %p42
        %p264 = scmp.lt.s32.totalorder %s24, 1
        %s265 = scalar_select %p264, %s24, 1
        %s266 = smul.addr %s265, 2
        %s267 = smul.addr %s266, 4
        %s268 = scalar_lea.vmem %s1, %s267
        %p269 = pneg %p71
        %p270 = pneg %p68
        %p271 = scmp.lt.s32.totalorder %s24, 1
        %s272 = scalar_select %p271, %s24, 1
        %s273 = smul.addr %s272, 2
        %s274 = scalar_lea.vmem %s2, %s273
        %p275 = pneg %p97
        %p276 = pneg %p94
        %p277 = scmp.lt.s32.totalorder %s24, 1
        %s278 = scalar_select %p277, %s24, 1
        %s279 = smul.addr %s278, 2
        %s280 = scalar_lea.vmem %s3, %s279
        %p281 = pneg %p123
        %p282 = pneg %p120
        %p283 = pneg %p149
        %p284 = pneg %p146
        %p285 = scmp.lt.s32.totalorder %s24, 1
        %s286 = scalar_select %p285, %s24, 1
        %s287 = smul.addr %s286, 6
        %s288 = smul.addr %s287, 2
        %s289 = scalar_lea.vmem %s4, %s288
        %p290 = pneg %p175
        %p291 = pneg %p172
        %s292 = sand.u32 %s162, 1
        %s293 = scalar_lea.sflag [#allocation5], %s292
        %s294 = sand.u32 %s162, 1
        %s295 = smul.addr %s294, 2
        %s296 = scalar_lea.vmem [#allocation4], %s295
        %p297 = pneg %p201
        %p298 = pneg %p198
        %s299 = sand.u32 %s188, 1
        %s300 = scalar_lea.sflag [#allocation7], %s299
        %s301 = sand.u32 %s188, 1
        %s302 = smul.addr %s301, 2
        %s303 = scalar_lea.vmem [#allocation6], %s302
        %p304 = scmp.lt.s32.totalorder %s24, 1
        %s305 = scalar_select %p304, %s24, 1
        %s306 = smul.addr %s305, 6
        %s307 = smul.addr %s306, 2
        %s308 = scalar_lea.vmem %s0, %s307
        %p309 = scmp.lt.s32.totalorder %s24, 1
        %s310 = scalar_select %p309, %s24, 1
        %s311 = smul.addr %s310, 2
        %s312 = smul.addr %s311, 4
        %s313 = scalar_lea.vmem %s1, %s312
        %p314 = scmp.lt.s32.totalorder %s24, 1
        %s315 = scalar_select %p314, %s24, 1
        %s316 = smul.addr %s315, 2
        %s317 = scalar_lea.vmem %s2, %s316
        %p318 = scmp.lt.s32.totalorder %s24, 1
        %s319 = scalar_select %p318, %s24, 1
        %s320 = smul.addr %s319, 2
        %s321 = scalar_lea.vmem %s3, %s320
        %p322 = scmp.lt.s32.totalorder %s24, 1
        %s323 = scalar_select %p322, %s24, 1
        %s324 = smul.addr %s323, 6
        %s325 = smul.addr %s324, 2
        %s326 = scalar_lea.vmem %s4, %s325
        %v328 = vld [vmem:[%s317] sm:$0x3]
        %vm329 = vcmask 123904
        %330 = vst.msk [vmem:[#allocation2] sm:$0x3] %vm329, %v328
        %v331 = vld [vmem:[%s321] sm:$0x3]
        %332 = vst.msk [vmem:[#allocation3] sm:$0x3] %vm329, %v331
        %v333 = vld [vmem:[%s313] sm:$0xf]
        %v334 = vld [vmem:[%s313 + $0x4] sm:$0xf]
        %p335 = scmp.eq.s32.totalorder %s24, 0
        %s336 = scalar_select %p335, 0, 5
        %v337 = vld [vmem:[#allocation2] sm:$0x3]
        %v338 = vld [vmem:[#allocation3] sm:$0x3]
        %s339 = smul.u32 %s336, 2
        %s340 = scalar_lea.vmem %s308, %s339
        %v341 = vld [vmem:[%s340] sm:$0x3]
        %v342 = vpack.c.bf16 %v337, %v337
        %v345 = vunpack.c.l.b16 %v333
        %v346 = vunpack.c.l.b16 %v334
        %v347 = vpack.c.b16 %v346, %v345
        %vm349 = vcmask 130048
        %v351 = vsel %vm349, %v342, 0
        %353 = vmatprep.subr.bf16.mxu0 0
        %354 = vmatpush1.bf16.msra.mxu0 0
        %355 = vmatprep.subr.bf16.mxu0 0
        %356 = vmatpush1.bf16.msra.mxu0 0
        %357 = vmatprep.subr.bf16.mxu0 0
        %358 = vmatpush1.bf16.msra.mxu0 0
        %359 = vmatprep.subr.bf16.mxu0 0
        %360 = vmatpush1.bf16.msra.mxu0 0
        %361 = vmatprep.subr.bf16.mxu0 0
        %362 = vmatpush1.bf16.msra.mxu0 0
        %363 = vmatprep.subr.bf16.mxu0 0
        %364 = vmatpush1.bf16.msra.mxu0 0
        %365 = vmatprep.subr.bf16.mxu0 0
        %366 = vmatpush1.bf16.msra.mxu0 0
        %367 = vmatprep.subr.bf16.mxu0 0
        %368 = vmatpush1.bf16.msra.mxu0 %v347
        %369 = vmatprep.subr.bf16.mxu0 0
        %370 = vmatpush2.bf16.msra.mxu0 0
        %371 = vmatprep.subr.bf16.mxu0 0
        %372 = vmatpush2.bf16.msra.mxu0 0
        %373 = vmatprep.subr.bf16.mxu0 0
        %374 = vmatpush2.bf16.msra.mxu0 0
        %375 = vmatprep.subr.bf16.mxu0 0
        %376 = vmatpush2.bf16.msra.mxu0 0
        %377 = vmatprep.subr.bf16.mxu0 0
        %378 = vmatpush2.bf16.msra.mxu0 0
        %379 = vmatprep.subr.bf16.mxu0 0
        %380 = vmatpush2.bf16.msra.mxu0 0
        %381 = vmatprep.subr.bf16.mxu0 0
        %382 = vmatpush2.bf16.msra.mxu0 0
        %383 = vmatprep.subr.bf16.mxu0 0
        %384 = vmatpush2.bf16.msra.mxu0 0
        %385 = vmatprep.mubr.bf16.mxu0 0
        %386 = vmatmul.mubr.bf16.gmra.mxu0 %v351
        %v387 = vpop.f32.mrf.mxu0
        %v388 = vadd.f32 0.0, %v387
        %v389 = vpop.f32.mrf.mxu0
        %v390 = vpop.f32.mrf.mxu0
        %v391 = vpop.f32.mrf.mxu0
        %392 = vdwg.mxu0
        %v393 = vadd.f32 %v341, %v388
        %v394 = vxor.u32 %v393, 2147483648
        %v395 = vmul.f32 %v394, 1.442695
        %v396 = vpow.pop %v395
        %v397 = vadd.f32 %v396, 1.0
        %v398 = vrcp.pop %v397
        %v399 = vmul.f32 1.0, %v398
        %v400 = vtanh.pop %v393
        %402 = vrot.lane.b32.xlu0 %v338, 16
        %v403 = vpop.permute.xlu0 %402
        %v405 = vmul.f32 %v399, %v403
        %407 = vrot.lane.b32.xlu0 %v400, 80
        %v408 = vpop.permute.xlu0 %407
        %v410 = vmul.f32 %v399, %v408
        %412 = vrot.lane.b32.xlu0 %v410, 16
        %v413 = vpop.permute.xlu0 %412
        %v415 = vadd.f32 %v405, %v413
        %v416 = vtanh.pop %v415
        %418 = vrot.lane.b32.xlu0 %v416, 16
        %v419 = vpop.permute.xlu0 %418
        %v421 = vmul.f32 %v399, %v419
        %423 = vrot.lane.b32.xlu0 %v421, 96
        %v424 = vpop.permute.xlu0 %423
        %426 = vst.msk [vmem:[#allocation2] sm:$0x3] %vm329, %v424
        %428 = vrot.lane.b32.xlu0 %v415, 112
        %v429 = vpop.permute.xlu0 %428
        %431 = vst.msk [vmem:[#allocation3] sm:$0x3] %vm329, %v429
        %s432 = scalar_lea.vmem %s326, %s339
        %433 = vst.msk [vmem:[%s432] sm:$0x3] %vm329, %v424
        %s434 = scalar_select %p335, 1, 4
        %v435 = vld [vmem:[#allocation2] sm:$0x3]
        %v436 = vld [vmem:[#allocation3] sm:$0x3]
        %s437 = smul.u32 %s434, 2
        %s438 = scalar_lea.vmem %s308, %s437
        %v439 = vld [vmem:[%s438] sm:$0x3]
        %v440 = vpack.c.bf16 %v435, %v435
        %v442 = vsel %vm349, %v440, 0
        %444 = vmatprep.subr.bf16.mxu0 0
        %445 = vmatpush1.bf16.msra.mxu0 0
        %446 = vmatprep.subr.bf16.mxu0 0
        %447 = vmatpush1.bf16.msra.mxu0 0
        %448 = vmatprep.subr.bf16.mxu0 0
        %449 = vmatpush1.bf16.msra.mxu0 0
        %450 = vmatprep.subr.bf16.mxu0 0
        %451 = vmatpush1.bf16.msra.mxu0 0
        %452 = vmatprep.subr.bf16.mxu0 0
        %453 = vmatpush1.bf16.msra.mxu0 0
        %454 = vmatprep.subr.bf16.mxu0 0
        %455 = vmatpush1.bf16.msra.mxu0 0
        %456 = vmatprep.subr.bf16.mxu0 0
        %457 = vmatpush1.bf16.msra.mxu0 0
        %458 = vmatprep.subr.bf16.mxu0 0
        %459 = vmatpush1.bf16.msra.mxu0 %v347
        %460 = vmatprep.subr.bf16.mxu0 0
        %461 = vmatpush2.bf16.msra.mxu0 0
        %462 = vmatprep.subr.bf16.mxu0 0
        %463 = vmatpush2.bf16.msra.mxu0 0
        %464 = vmatprep.subr.bf16.mxu0 0
        %465 = vmatpush2.bf16.msra.mxu0 0
        %466 = vmatprep.subr.bf16.mxu0 0
        %467 = vmatpush2.bf16.msra.mxu0 0
        %468 = vmatprep.subr.bf16.mxu0 0
        %469 = vmatpush2.bf16.msra.mxu0 0
        %470 = vmatprep.subr.bf16.mxu0 0
        %471 = vmatpush2.bf16.msra.mxu0 0
        %472 = vmatprep.subr.bf16.mxu0 0
        %473 = vmatpush2.bf16.msra.mxu0 0
        %474 = vmatprep.subr.bf16.mxu0 0
        %475 = vmatpush2.bf16.msra.mxu0 0
        %476 = vmatprep.mubr.bf16.mxu0 0
        %477 = vmatmul.mubr.bf16.gmra.mxu0 %v442
        %v478 = vpop.f32.mrf.mxu0
        %v479 = vadd.f32 0.0, %v478
        %v480 = vpop.f32.mrf.mxu0
        %v481 = vpop.f32.mrf.mxu0
        %v482 = vpop.f32.mrf.mxu0
        %483 = vdwg.mxu0
        %v484 = vadd.f32 %v439, %v479
        %v485 = vxor.u32 %v484, 2147483648
        %v486 = vmul.f32 %v485, 1.442695
        %v487 = vpow.pop %v486
        %v488 = vadd.f32 %v487, 1.0
        %v489 = vrcp.pop %v488
        %v490 = vmul.f32 1.0, %v489
        %v491 = vtanh.pop %v484
        %493 = vrot.lane.b32.xlu0 %v436, 16
        %v494 = vpop.permute.xlu0 %493
        %v496 = vmul.f32 %v490, %v494
        %498 = vrot.lane.b32.xlu0 %v491, 80
        %v499 = vpop.permute.xlu0 %498
        %v501 = vmul.f32 %v490, %v499
        %503 = vrot.lane.b32.xlu0 %v501, 16
        %v504 = vpop.permute.xlu0 %503
        %v506 = vadd.f32 %v496, %v504
        %v507 = vtanh.pop %v506
        %509 = vrot.lane.b32.xlu0 %v507, 16
        %v510 = vpop.permute.xlu0 %509
        %v512 = vmul.f32 %v490, %v510
        %514 = vrot.lane.b32.xlu0 %v512, 96
        %v515 = vpop.permute.xlu0 %514
        %517 = vst.msk [vmem:[#allocation2] sm:$0x3] %vm329, %v515
        %519 = vrot.lane.b32.xlu0 %v506, 112
        %v520 = vpop.permute.xlu0 %519
        %522 = vst.msk [vmem:[#allocation3] sm:$0x3] %vm329, %v520
        %s523 = scalar_lea.vmem %s326, %s437
        %524 = vst.msk [vmem:[%s523] sm:$0x3] %vm329, %v515
        %s525 = scalar_select %p335, 2, 3
        %v526 = vld [vmem:[#allocation2] sm:$0x3]
        %v527 = vld [vmem:[#allocation3] sm:$0x3]
        %s528 = smul.u32 %s525, 2
        %s529 = scalar_lea.vmem %s308, %s528
        %v530 = vld [vmem:[%s529] sm:$0x3]
        %v531 = vpack.c.bf16 %v526, %v526
        %v533 = vsel %vm349, %v531, 0
        %535 = vmatprep.subr.bf16.mxu0 0
        %536 = vmatpush1.bf16.msra.mxu0 0
        %537 = vmatprep.subr.bf16.mxu0 0
        %538 = vmatpush1.bf16.msra.mxu0 0
        %539 = vmatprep.subr.bf16.mxu0 0
        %540 = vmatpush1.bf16.msra.mxu0 0
        %541 = vmatprep.subr.bf16.mxu0 0
        %542 = vmatpush1.bf16.msra.mxu0 0
        %543 = vmatprep.subr.bf16.mxu0 0
        %544 = vmatpush1.bf16.msra.mxu0 0
        %545 = vmatprep.subr.bf16.mxu0 0
        %546 = vmatpush1.bf16.msra.mxu0 0
        %547 = vmatprep.subr.bf16.mxu0 0
        %548 = vmatpush1.bf16.msra.mxu0 0
        %549 = vmatprep.subr.bf16.mxu0 0
        %550 = vmatpush1.bf16.msra.mxu0 %v347
        %551 = vmatprep.subr.bf16.mxu0 0
        %552 = vmatpush2.bf16.msra.mxu0 0
        %553 = vmatprep.subr.bf16.mxu0 0
        %554 = vmatpush2.bf16.msra.mxu0 0
        %555 = vmatprep.subr.bf16.mxu0 0
        %556 = vmatpush2.bf16.msra.mxu0 0
        %557 = vmatprep.subr.bf16.mxu0 0
        %558 = vmatpush2.bf16.msra.mxu0 0
        %559 = vmatprep.subr.bf16.mxu0 0
        %560 = vmatpush2.bf16.msra.mxu0 0
        %561 = vmatprep.subr.bf16.mxu0 0
        %562 = vmatpush2.bf16.msra.mxu0 0
        %563 = vmatprep.subr.bf16.mxu0 0
        %564 = vmatpush2.bf16.msra.mxu0 0
        %565 = vmatprep.subr.bf16.mxu0 0
        %566 = vmatpush2.bf16.msra.mxu0 0
        %567 = vmatprep.mubr.bf16.mxu0 0
        %568 = vmatmul.mubr.bf16.gmra.mxu0 %v533
        %v569 = vpop.f32.mrf.mxu0
        %v570 = vadd.f32 0.0, %v569
        %v571 = vpop.f32.mrf.mxu0
        %v572 = vpop.f32.mrf.mxu0
        %v573 = vpop.f32.mrf.mxu0
        %574 = vdwg.mxu0
        %v575 = vadd.f32 %v530, %v570
        %v576 = vxor.u32 %v575, 2147483648
        %v577 = vmul.f32 %v576, 1.442695
        %v578 = vpow.pop %v577
        %v579 = vadd.f32 %v578, 1.0
        %v580 = vrcp.pop %v579
        %v581 = vmul.f32 1.0, %v580
        %v582 = vtanh.pop %v575
        %584 = vrot.lane.b32.xlu0 %v527, 16
        %v585 = vpop.permute.xlu0 %584
        %v587 = vmul.f32 %v581, %v585
        %589 = vrot.lane.b32.xlu0 %v582, 80
        %v590 = vpop.permute.xlu0 %589
        %v592 = vmul.f32 %v581, %v590
        %594 = vrot.lane.b32.xlu0 %v592, 16
        %v595 = vpop.permute.xlu0 %594
        %v597 = vadd.f32 %v587, %v595
        %v598 = vtanh.pop %v597
        %600 = vrot.lane.b32.xlu0 %v598, 16
        %v601 = vpop.permute.xlu0 %600
        %v603 = vmul.f32 %v581, %v601
        %605 = vrot.lane.b32.xlu0 %v603, 96
        %v606 = vpop.permute.xlu0 %605
        %608 = vst.msk [vmem:[#allocation2] sm:$0x3] %vm329, %v606
        %610 = vrot.lane.b32.xlu0 %v597, 112
        %v611 = vpop.permute.xlu0 %610
        %613 = vst.msk [vmem:[#allocation3] sm:$0x3] %vm329, %v611
        %s614 = scalar_lea.vmem %s326, %s528
        %615 = vst.msk [vmem:[%s614] sm:$0x3] %vm329, %v606
        %s616 = scalar_select %p335, 3, 2
        %v617 = vld [vmem:[#allocation2] sm:$0x3]
        %v618 = vld [vmem:[#allocation3] sm:$0x3]
        %s619 = smul.u32 %s616, 2
        %s620 = scalar_lea.vmem %s308, %s619
        %v621 = vld [vmem:[%s620] sm:$0x3]
        %v622 = vpack.c.bf16 %v617, %v617
        %v624 = vsel %vm349, %v622, 0
        %626 = vmatprep.subr.bf16.mxu0 0
        %627 = vmatpush1.bf16.msra.mxu0 0
        %628 = vmatprep.subr.bf16.mxu0 0
        %629 = vmatpush1.bf16.msra.mxu0 0
        %630 = vmatprep.subr.bf16.mxu0 0
        %631 = vmatpush1.bf16.msra.mxu0 0
        %632 = vmatprep.subr.bf16.mxu0 0
        %633 = vmatpush1.bf16.msra.mxu0 0
        %634 = vmatprep.subr.bf16.mxu0 0
        %635 = vmatpush1.bf16.msra.mxu0 0
        %636 = vmatprep.subr.bf16.mxu0 0
        %637 = vmatpush1.bf16.msra.mxu0 0
        %638 = vmatprep.subr.bf16.mxu0 0
        %639 = vmatpush1.bf16.msra.mxu0 0
        %640 = vmatprep.subr.bf16.mxu0 0
        %641 = vmatpush1.bf16.msra.mxu0 %v347
        %642 = vmatprep.subr.bf16.mxu0 0
        %643 = vmatpush2.bf16.msra.mxu0 0
        %644 = vmatprep.subr.bf16.mxu0 0
        %645 = vmatpush2.bf16.msra.mxu0 0
        %646 = vmatprep.subr.bf16.mxu0 0
        %647 = vmatpush2.bf16.msra.mxu0 0
        %648 = vmatprep.subr.bf16.mxu0 0
        %649 = vmatpush2.bf16.msra.mxu0 0
        %650 = vmatprep.subr.bf16.mxu0 0
        %651 = vmatpush2.bf16.msra.mxu0 0
        %652 = vmatprep.subr.bf16.mxu0 0
        %653 = vmatpush2.bf16.msra.mxu0 0
        %654 = vmatprep.subr.bf16.mxu0 0
        %655 = vmatpush2.bf16.msra.mxu0 0
        %656 = vmatprep.subr.bf16.mxu0 0
        %657 = vmatpush2.bf16.msra.mxu0 0
        %658 = vmatprep.mubr.bf16.mxu0 0
        %659 = vmatmul.mubr.bf16.gmra.mxu0 %v624
        %v660 = vpop.f32.mrf.mxu0
        %v661 = vadd.f32 0.0, %v660
        %v662 = vpop.f32.mrf.mxu0
        %v663 = vpop.f32.mrf.mxu0
        %v664 = vpop.f32.mrf.mxu0
        %665 = vdwg.mxu0
        %v666 = vadd.f32 %v621, %v661
        %v667 = vxor.u32 %v666, 2147483648
        %v668 = vmul.f32 %v667, 1.442695
        %v669 = vpow.pop %v668
        %v670 = vadd.f32 %v669, 1.0
        %v671 = vrcp.pop %v670
        %v672 = vmul.f32 1.0, %v671
        %v673 = vtanh.pop %v666
        %675 = vrot.lane.b32.xlu0 %v618, 16
        %v676 = vpop.permute.xlu0 %675
        %v678 = vmul.f32 %v672, %v676
        %680 = vrot.lane.b32.xlu0 %v673, 80
        %v681 = vpop.permute.xlu0 %680
        %v683 = vmul.f32 %v672, %v681
        %685 = vrot.lane.b32.xlu0 %v683, 16
        %v686 = vpop.permute.xlu0 %685
        %v688 = vadd.f32 %v678, %v686
        %v689 = vtanh.pop %v688
        %691 = vrot.lane.b32.xlu0 %v689, 16
        %v692 = vpop.permute.xlu0 %691
        %v694 = vmul.f32 %v672, %v692
        %696 = vrot.lane.b32.xlu0 %v694, 96
        %v697 = vpop.permute.xlu0 %696
        %699 = vst.msk [vmem:[#allocation2] sm:$0x3] %vm329, %v697
        %701 = vrot.lane.b32.xlu0 %v688, 112
        %v702 = vpop.permute.xlu0 %701
        %704 = vst.msk [vmem:[#allocation3] sm:$0x3] %vm329, %v702
        %s705 = scalar_lea.vmem %s326, %s619
        %706 = vst.msk [vmem:[%s705] sm:$0x3] %vm329, %v697
        %s707 = scalar_select %p335, 4, 1
        %v708 = vld [vmem:[#allocation2] sm:$0x3]
        %v709 = vld [vmem:[#allocation3] sm:$0x3]
        %s710 = smul.u32 %s707, 2
        %s711 = scalar_lea.vmem %s308, %s710
        %v712 = vld [vmem:[%s711] sm:$0x3]
        %v713 = vpack.c.bf16 %v708, %v708
        %v715 = vsel %vm349, %v713, 0
        %717 = vmatprep.subr.bf16.mxu0 0
        %718 = vmatpush1.bf16.msra.mxu0 0
        %719 = vmatprep.subr.bf16.mxu0 0
        %720 = vmatpush1.bf16.msra.mxu0 0
        %721 = vmatprep.subr.bf16.mxu0 0
        %722 = vmatpush1.bf16.msra.mxu0 0
        %723 = vmatprep.subr.bf16.mxu0 0
        %724 = vmatpush1.bf16.msra.mxu0 0
        %725 = vmatprep.subr.bf16.mxu0 0
        %726 = vmatpush1.bf16.msra.mxu0 0
        %727 = vmatprep.subr.bf16.mxu0 0
        %728 = vmatpush1.bf16.msra.mxu0 0
        %729 = vmatprep.subr.bf16.mxu0 0
        %730 = vmatpush1.bf16.msra.mxu0 0
        %731 = vmatprep.subr.bf16.mxu0 0
        %732 = vmatpush1.bf16.msra.mxu0 %v347
        %733 = vmatprep.subr.bf16.mxu0 0
        %734 = vmatpush2.bf16.msra.mxu0 0
        %735 = vmatprep.subr.bf16.mxu0 0
        %736 = vmatpush2.bf16.msra.mxu0 0
        %737 = vmatprep.subr.bf16.mxu0 0
        %738 = vmatpush2.bf16.msra.mxu0 0
        %739 = vmatprep.subr.bf16.mxu0 0
        %740 = vmatpush2.bf16.msra.mxu0 0
        %741 = vmatprep.subr.bf16.mxu0 0
        %742 = vmatpush2.bf16.msra.mxu0 0
        %743 = vmatprep.subr.bf16.mxu0 0
        %744 = vmatpush2.bf16.msra.mxu0 0
        %745 = vmatprep.subr.bf16.mxu0 0
        %746 = vmatpush2.bf16.msra.mxu0 0
        %747 = vmatprep.subr.bf16.mxu0 0
        %748 = vmatpush2.bf16.msra.mxu0 0
        %749 = vmatprep.mubr.bf16.mxu0 0
        %750 = vmatmul.mubr.bf16.gmra.mxu0 %v715
        %v751 = vpop.f32.mrf.mxu0
        %v752 = vadd.f32 0.0, %v751
        %v753 = vpop.f32.mrf.mxu0
        %v754 = vpop.f32.mrf.mxu0
        %v755 = vpop.f32.mrf.mxu0
        %756 = vdwg.mxu0
        %v757 = vadd.f32 %v712, %v752
        %v758 = vxor.u32 %v757, 2147483648
        %v759 = vmul.f32 %v758, 1.442695
        %v760 = vpow.pop %v759
        %v761 = vadd.f32 %v760, 1.0
        %v762 = vrcp.pop %v761
        %v763 = vmul.f32 1.0, %v762
        %v764 = vtanh.pop %v757
        %766 = vrot.lane.b32.xlu0 %v709, 16
        %v767 = vpop.permute.xlu0 %766
        %v769 = vmul.f32 %v763, %v767
        %771 = vrot.lane.b32.xlu0 %v764, 80
        %v772 = vpop.permute.xlu0 %771
        %v774 = vmul.f32 %v763, %v772
        %776 = vrot.lane.b32.xlu0 %v774, 16
        %v777 = vpop.permute.xlu0 %776
        %v779 = vadd.f32 %v769, %v777
        %v780 = vtanh.pop %v779
        %782 = vrot.lane.b32.xlu0 %v780, 16
        %v783 = vpop.permute.xlu0 %782
        %v785 = vmul.f32 %v763, %v783
        %787 = vrot.lane.b32.xlu0 %v785, 96
        %v788 = vpop.permute.xlu0 %787
        %790 = vst.msk [vmem:[#allocation2] sm:$0x3] %vm329, %v788
        %792 = vrot.lane.b32.xlu0 %v779, 112
        %v793 = vpop.permute.xlu0 %792
        %795 = vst.msk [vmem:[#allocation3] sm:$0x3] %vm329, %v793
        %s796 = scalar_lea.vmem %s326, %s710
        %797 = vst.msk [vmem:[%s796] sm:$0x3] %vm329, %v788
        %s798 = scalar_select %p335, 5, 0
        %v799 = vld [vmem:[#allocation2] sm:$0x3]
        %v800 = vld [vmem:[#allocation3] sm:$0x3]
        %s801 = smul.u32 %s798, 2
        %s802 = scalar_lea.vmem %s308, %s801
        %v803 = vld [vmem:[%s802] sm:$0x3]
        %v804 = vpack.c.bf16 %v799, %v799
        %v806 = vsel %vm349, %v804, 0
        %808 = vmatprep.subr.bf16.mxu0 0
        %809 = vmatpush1.bf16.msra.mxu0 0
        %810 = vmatprep.subr.bf16.mxu0 0
        %811 = vmatpush1.bf16.msra.mxu0 0
        %812 = vmatprep.subr.bf16.mxu0 0
        %813 = vmatpush1.bf16.msra.mxu0 0
        %814 = vmatprep.subr.bf16.mxu0 0
        %815 = vmatpush1.bf16.msra.mxu0 0
        %816 = vmatprep.subr.bf16.mxu0 0
        %817 = vmatpush1.bf16.msra.mxu0 0
        %818 = vmatprep.subr.bf16.mxu0 0
        %819 = vmatpush1.bf16.msra.mxu0 0
        %820 = vmatprep.subr.bf16.mxu0 0
        %821 = vmatpush1.bf16.msra.mxu0 0
        %822 = vmatprep.subr.bf16.mxu0 0
        %823 = vmatpush1.bf16.msra.mxu0 %v347
        %824 = vmatprep.subr.bf16.mxu0 0
        %825 = vmatpush2.bf16.msra.mxu0 0
        %826 = vmatprep.subr.bf16.mxu0 0
        %827 = vmatpush2.bf16.msra.mxu0 0
        %828 = vmatprep.subr.bf16.mxu0 0
        %829 = vmatpush2.bf16.msra.mxu0 0
        %830 = vmatprep.subr.bf16.mxu0 0
        %831 = vmatpush2.bf16.msra.mxu0 0
        %832 = vmatprep.subr.bf16.mxu0 0
        %833 = vmatpush2.bf16.msra.mxu0 0
        %834 = vmatprep.subr.bf16.mxu0 0
        %835 = vmatpush2.bf16.msra.mxu0 0
        %836 = vmatprep.subr.bf16.mxu0 0
        %837 = vmatpush2.bf16.msra.mxu0 0
        %838 = vmatprep.subr.bf16.mxu0 0
        %839 = vmatpush2.bf16.msra.mxu0 0
        %840 = vmatprep.mubr.bf16.mxu0 0
        %841 = vmatmul.mubr.bf16.gmra.mxu0 %v806
        %v842 = vpop.f32.mrf.mxu0
        %v843 = vadd.f32 0.0, %v842
        %v844 = vpop.f32.mrf.mxu0
        %v845 = vpop.f32.mrf.mxu0
        %v846 = vpop.f32.mrf.mxu0
        %847 = vdwg.mxu0
        %v848 = vadd.f32 %v803, %v843
        %v849 = vxor.u32 %v848, 2147483648
        %v850 = vmul.f32 %v849, 1.442695
        %v851 = vpow.pop %v850
        %v852 = vadd.f32 %v851, 1.0
        %v853 = vrcp.pop %v852
        %v854 = vmul.f32 1.0, %v853
        %v855 = vtanh.pop %v848
        %857 = vrot.lane.b32.xlu0 %v800, 16
        %v858 = vpop.permute.xlu0 %857
        %v860 = vmul.f32 %v854, %v858
        %862 = vrot.lane.b32.xlu0 %v855, 80
        %v863 = vpop.permute.xlu0 %862
        %v865 = vmul.f32 %v854, %v863
        %867 = vrot.lane.b32.xlu0 %v865, 16
        %v868 = vpop.permute.xlu0 %867
        %v870 = vadd.f32 %v860, %v868
        %v871 = vtanh.pop %v870
        %873 = vrot.lane.b32.xlu0 %v871, 16
        %v874 = vpop.permute.xlu0 %873
        %v876 = vmul.f32 %v854, %v874
        %878 = vrot.lane.b32.xlu0 %v876, 96
        %v879 = vpop.permute.xlu0 %878
        %881 = vst.msk [vmem:[#allocation2] sm:$0x3] %vm329, %v879
        %883 = vrot.lane.b32.xlu0 %v870, 112
        %v884 = vpop.permute.xlu0 %883
        %886 = vst.msk [vmem:[#allocation3] sm:$0x3] %vm329, %v884
        %s887 = scalar_lea.vmem %s326, %s801
        %888 = vst.msk [vmem:[%s887] sm:$0x3] %vm329, %v879
        %v889 = vld [vmem:[#allocation2] sm:$0x3]
        %890 = vst.msk [vmem:[%s296] sm:$0x3] %vm329, %v889
        %v891 = vld [vmem:[#allocation3] sm:$0x3]
        %892 = vst.msk [vmem:[%s303] sm:$0x3] %vm329, %v891
        %p893 = scmp.lt.s32.totalorder %s24, 1
        %s894 = scalar_select %p893, %s24, 1
        %s895 = smul.addr %s894, 6
        %s896 = smul.addr %s895, 2
        %s897 = scalar_lea.vmem %s4, %s896
        %s898 = sand.u32 %s162, 1
        %s899 = scalar_lea.sflag [#allocation5], %s898
        %s900 = sand.u32 %s162, 1
        %s901 = smul.addr %s900, 2
        %s902 = scalar_lea.vmem [#allocation4], %s901
        %s903 = sand.u32 %s188, 1
        %s904 = scalar_lea.sflag [#allocation7], %s903
        %s905 = sand.u32 %s188, 1
        %s906 = smul.addr %s905, 2
        %s907 = scalar_lea.vmem [#allocation6], %s906
        // Predicated region
        $region37: #{history_module_forward.8} parent=35 // pred_check
          %p908 = pneg %p146
        $region38: #{history_module_forward.8} parent=35 // pred_check_branch
          %910 = sbr.rel (%p908) target = $region40
        $region39: #{history_module_forward.8} parent=35 // pred_region
          _
        $region40: #{history_module_forward.8} parent=35 // pred_fallthru
          _
        // Predicated region
        $region41: #{history_module_forward.8} parent=35 // pred_check
          %p911 = pneg %p172
        $region42: #{history_module_forward.8} parent=35 // pred_check_branch
          %913 = sbr.rel (%p911) target = $region44
        $region43: #{history_module_forward.8} parent=35 // pred_region
          %s915 = ssub.s32 32, 32
          %916 = vsyncadd %s899, %s915
          %s917 = smul.addr %s24, 32
          %s918 = scalar_lea.hbm %s5, %s917
          %s920 = sshll.u32 %s902, 4
          %s921 = int_to_ptr.vmem [resolvable:$true] %s920
          %923 = dma.vmem_to_hbm [thread:$0]  %s921, 32, %s918, %s899
        $region44: #{history_module_forward.8} parent=35 // pred_fallthru
          _
        // Predicated region
        $region45: #{history_module_forward.8} parent=35 // pred_check
          %p924 = pneg %p198
        $region46: #{history_module_forward.8} parent=35 // pred_check_branch
          %926 = sbr.rel (%p924) target = $region48
        $region47: #{history_module_forward.8} parent=35 // pred_region
          %s928 = ssub.s32 32, 32
          %929 = vsyncadd %s904, %s928
          %s930 = smul.addr %s24, 32
          %s931 = scalar_lea.hbm %s6, %s930
          %s933 = sshll.u32 %s907, 4
          %s934 = int_to_ptr.vmem [resolvable:$true] %s933
          %936 = dma.vmem_to_hbm [thread:$0]  %s934, 32, %s931, %s904
        $region48: #{history_module_forward.8} parent=35 // pred_fallthru
          _
      $region36: #{history_module_forward.8} parent=5 // pred_fallthru
        _
      %p937 = scmp.le.s32.totalorder 2, %s19
      // Predicated region
      $region49: #{history_module_forward.8} parent=5 // pred_check
        %p938 = pneg %p937
      $region50: #{history_module_forward.8} parent=5 // pred_check_branch
        %940 = sbr.rel (%p938) target = $region52
      $region51: #{history_module_forward.8} parent=5 // pred_region
        %s941 = ssub.s32 %s19, 2
        // Predicated region
        $region53: #{history_module_forward.8} parent=51 // pred_check
          %p942 = pneg %p152
        $region54: #{history_module_forward.8} parent=51 // pred_check_branch
          %944 = sbr.rel (%p942) target = $region56
        $region55: #{history_module_forward.8} parent=51 // pred_region
          %p945 = scmp.lt.s32.totalorder %s25, 1
          %s946 = scalar_select %p945, %s25, 1
          %s947 = smul.addr %s946, 6
          %s948 = smul.addr %s947, 2
          %s949 = scalar_lea.vmem %s4, %s948
        $region56: #{history_module_forward.8} parent=51 // pred_fallthru
          _
        // Predicated region
        $region57: #{history_module_forward.8} parent=51 // pred_check
          %p950 = pneg %p178
        $region58: #{history_module_forward.8} parent=51 // pred_check_branch
          %952 = sbr.rel (%p950) target = $region60
        $region59: #{history_module_forward.8} parent=51 // pred_region
          %s953 = sand.u32 %s163, 1
          %s954 = scalar_lea.sflag [#allocation5], %s953
          %s955 = sand.u32 %s163, 1
          %s956 = smul.addr %s955, 2
          %s957 = scalar_lea.vmem [#allocation4], %s956
          %958 = dma.done %s954, 32
        $region60: #{history_module_forward.8} parent=51 // pred_fallthru
          _
        // Predicated region
        $region61: #{history_module_forward.8} parent=51 // pred_check
          %p959 = pneg %p204
        $region62: #{history_module_forward.8} parent=51 // pred_check_branch
          %961 = sbr.rel (%p959) target = $region64
        $region63: #{history_module_forward.8} parent=51 // pred_region
          %s962 = sand.u32 %s189, 1
          %s963 = scalar_lea.sflag [#allocation7], %s962
          %s964 = sand.u32 %s189, 1
          %s965 = smul.addr %s964, 2
          %s966 = scalar_lea.vmem [#allocation6], %s965
          %967 = dma.done %s963, 32
        $region64: #{history_module_forward.8} parent=51 // pred_fallthru
          _
      $region52: #{history_module_forward.8} parent=5 // pred_fallthru
        _
    $region6: #{history_module_forward.8} parent=1 // loop_footer
      %s23 = sadd.s32 1, %s19
    $region7: #{history_module_forward.8} parent=1 // loop_footer_branch
      %18 = sbr.rel target = $region3
    $region8: #{history_module_forward.8} parent=1 // loop_exit
      _
    %968 = vsyncpa [#allocation5], 1
    %s969 = scalar_lea.sflag [#allocation5], 1
    %970 = vsyncpa %s969, 1
    %971 = vsyncpa [#allocation7], 1
    %s972 = scalar_lea.sflag [#allocation7], 1
    %973 = vsyncpa %s972, 1

// kernel: history_module_forward.5
$region0: #{history_module_forward.5}
  #allocation0 [shape = 'u32[]', space=smem, size = 0x4, offset = 0x4, fixed_abs, tag = 'smem constant byte address 0x4 - core index']
  #allocation1 [shape = 'u32[144,128]{1,0:T(1,128)}', space=vmem, size = 0x12000, scoped, tag = 'internal scratch']
  #allocation2 [shape = 'f32[2,16]{1,0:T(2,128)}', space=vmem, size = 0x400, scoped, tag = 'scratch operand']
  #allocation3 [shape = 'f32[2,16]{1,0:T(2,128)}', space=vmem, size = 0x400, scoped, tag = 'scratch operand']
  %s0 = inlined_call_operand.vmem [shape: f32[2,8,2,64], index: 0, kind: input, shape index: {}]
  %s1 = inlined_call_operand.vmem [shape: bf16[2,16,64], index: 1, kind: input, shape index: {}]
  %s2 = inlined_call_operand.vmem [shape: f32[2,2,16], index: 2, kind: input, shape index: {}, may-alias: {2,3}]
  %s3 = inlined_call_operand.vmem [shape: f32[2,2,16], index: 3, kind: input, shape index: {}, may-alias: {2,3}]
  %s4 = inlined_call_operand.vmem [shape: f32[2,8,2,16], index: 4, kind: output, shape index: {0}]
  %s5 = inlined_call_operand.vmem [shape: f32[2,2,16], index: 5, kind: output, shape index: {1}]
  %s6 = inlined_call_operand.vmem [shape: f32[2,2,16], index: 6, kind: output, shape index: {2}]
  %7 = xla_tuple %s4, %s5, %s6
  %s8 = sld [smem:[#allocation0]]
  $region65: #{history_module_forward.5} parent=0
    _
  %s10 = ssub.s32 1, %s8
  %s11 = scalar_select 0, %s10, %s8
  loop: start=0, step=1, limit=4
  $region2: #{history_module_forward.5} parent=0 // loop_pre_header
    _
  $region3: #{history_module_forward.5} parent=0 // loop_header
    %s13 = sphi 0, %s17
    %p14 = scmp.ge.s32.totalorder %s13, 4
    %s23 = sphi 0, %s25
    %s26 = sphi 0, %s23
    %s27 = sphi 0, %s26
    %s43 = sphi 0, %s27
    %s49 = sphi 0, %s51
    %s52 = sphi 0, %s49
    %s53 = sphi 0, %s52
    %s69 = sphi 0, %s53
    %s75 = sphi 0, %s77
    %s78 = sphi 0, %s75
    %s79 = sphi 0, %s78
    %s95 = sphi 0, %s79
    %s101 = sphi 0, %s103
    %s104 = sphi 0, %s101
    %s105 = sphi 0, %s104
    %s121 = sphi 0, %s105
    %s127 = sphi 0, %s129
    %s130 = sphi 0, %s127
    %s131 = sphi 0, %s130
    %s147 = sphi 0, %s131
    %s153 = sphi 0, %s155
    %s156 = sphi 0, %s153
    %s157 = sphi 0, %s156
    %s173 = sphi 0, %s157
    %s179 = sphi 0, %s181
    %s182 = sphi 0, %s179
    %s183 = sphi 0, %s182
    %s199 = sphi 0, %s183
  $region4: #{history_module_forward.5} parent=0 // loop_header_branch
    %16 = sbr.rel (%p14) target = $region8
  $region5: #{history_module_forward.5} parent=0 // loop_body
    %s18 = ssub.s32 %s13, 1
    %s19 = ssub.s32 %s13, 2
    %s20 = sadd.s32 %s13, 1
    %s21 = ssub.s32 %s13, %s20
    %p22 = scmp.eq.s32.totalorder %s21, 0
    %s24 = sadd.s32 %s23, 1
    %s25 = scalar_select %p22, %s23, %s24
    %p28 = pneg %p22
    %p29 = scmp.eq.s32.totalorder %s13, 1
    %p30 = por %p28, %p29
    %p31 = scmp.ne.s32.totalorder %s23, %s26
    %p32 = scmp.eq.s32.totalorder %s13, 0
    %p33 = por %p31, %p32
    %p34 = scmp.ne.s32.totalorder %s23, %s26
    %p35 = scmp.eq.s32.totalorder %s18, 1
    %p36 = por %p34, %p35
    %p37 = scmp.ne.s32.totalorder %s26, %s27
    %p38 = scmp.eq.s32.totalorder %s18, 0
    %p39 = por %p37, %p38
    %p40 = scmp.ne.s32.totalorder %s26, %s27
    %p41 = scmp.eq.s32.totalorder %s19, 1
    %p42 = por %p40, %p41
    %p44 = scmp.ne.s32.totalorder %s27, %s43
    %p45 = scmp.eq.s32.totalorder %s19, 0
    %p46 = por %p44, %p45
    %s47 = ssub.s32 %s13, %s20
    %p48 = scmp.eq.s32.totalorder %s47, 0
    %s50 = sadd.s32 %s49, 1
    %s51 = scalar_select %p48, %s49, %s50
    %p54 = pneg %p48
    %p55 = scmp.eq.s32.totalorder %s13, 1
    %p56 = por %p54, %p55
    %p57 = scmp.ne.s32.totalorder %s49, %s52
    %p58 = scmp.eq.s32.totalorder %s13, 0
    %p59 = por %p57, %p58
    %p60 = scmp.ne.s32.totalorder %s49, %s52
    %p61 = scmp.eq.s32.totalorder %s18, 1
    %p62 = por %p60, %p61
    %p63 = scmp.ne.s32.totalorder %s52, %s53
    %p64 = scmp.eq.s32.totalorder %s18, 0
    %p65 = por %p63, %p64
    %p66 = scmp.ne.s32.totalorder %s52, %s53
    %p67 = scmp.eq.s32.totalorder %s19, 1
    %p68 = por %p66, %p67
    %p70 = scmp.ne.s32.totalorder %s53, %s69
    %p71 = scmp.eq.s32.totalorder %s19, 0
    %p72 = por %p70, %p71
    %s73 = ssub.s32 %s13, %s20
    %p74 = scmp.eq.s32.totalorder %s73, 0
    %s76 = sadd.s32 %s75, 1
    %s77 = scalar_select %p74, %s75, %s76
    %p80 = pneg %p74
    %p81 = scmp.eq.s32.totalorder %s13, 1
    %p82 = por %p80, %p81
    %p83 = scmp.ne.s32.totalorder %s75, %s78
    %p84 = scmp.eq.s32.totalorder %s13, 0
    %p85 = por %p83, %p84
    %p86 = scmp.ne.s32.totalorder %s75, %s78
    %p87 = scmp.eq.s32.totalorder %s18, 1
    %p88 = por %p86, %p87
    %p89 = scmp.ne.s32.totalorder %s78, %s79
    %p90 = scmp.eq.s32.totalorder %s18, 0
    %p91 = por %p89, %p90
    %p92 = scmp.ne.s32.totalorder %s78, %s79
    %p93 = scmp.eq.s32.totalorder %s19, 1
    %p94 = por %p92, %p93
    %p96 = scmp.ne.s32.totalorder %s79, %s95
    %p97 = scmp.eq.s32.totalorder %s19, 0
    %p98 = por %p96, %p97
    %s99 = ssub.s32 %s13, %s20
    %p100 = scmp.eq.s32.totalorder %s99, 0
    %s102 = sadd.s32 %s101, 1
    %s103 = scalar_select %p100, %s101, %s102
    %p106 = pneg %p100
    %p107 = scmp.eq.s32.totalorder %s13, 1
    %p108 = por %p106, %p107
    %p109 = scmp.ne.s32.totalorder %s101, %s104
    %p110 = scmp.eq.s32.totalorder %s13, 0
    %p111 = por %p109, %p110
    %p112 = scmp.ne.s32.totalorder %s101, %s104
    %p113 = scmp.eq.s32.totalorder %s18, 1
    %p114 = por %p112, %p113
    %p115 = scmp.ne.s32.totalorder %s104, %s105
    %p116 = scmp.eq.s32.totalorder %s18, 0
    %p117 = por %p115, %p116
    %p118 = scmp.ne.s32.totalorder %s104, %s105
    %p119 = scmp.eq.s32.totalorder %s19, 1
    %p120 = por %p118, %p119
    %p122 = scmp.ne.s32.totalorder %s105, %s121
    %p123 = scmp.eq.s32.totalorder %s19, 0
    %p124 = por %p122, %p123
    %s125 = ssub.s32 %s13, %s20
    %p126 = scmp.eq.s32.totalorder %s125, 0
    %s128 = sadd.s32 %s127, 1
    %s129 = scalar_select %p126, %s127, %s128
    %p132 = pneg %p126
    %p133 = scmp.eq.s32.totalorder %s13, 1
    %p134 = por %p132, %p133
    %p135 = scmp.ne.s32.totalorder %s127, %s130
    %p136 = scmp.eq.s32.totalorder %s13, 0
    %p137 = por %p135, %p136
    %p138 = scmp.ne.s32.totalorder %s127, %s130
    %p139 = scmp.eq.s32.totalorder %s18, 1
    %p140 = por %p138, %p139
    %p141 = scmp.ne.s32.totalorder %s130, %s131
    %p142 = scmp.eq.s32.totalorder %s18, 0
    %p143 = por %p141, %p142
    %p144 = scmp.ne.s32.totalorder %s130, %s131
    %p145 = scmp.eq.s32.totalorder %s19, 1
    %p146 = por %p144, %p145
    %p148 = scmp.ne.s32.totalorder %s131, %s147
    %p149 = scmp.eq.s32.totalorder %s19, 0
    %p150 = por %p148, %p149
    %s151 = ssub.s32 %s13, %s20
    %p152 = scmp.eq.s32.totalorder %s151, 0
    %s154 = sadd.s32 %s153, 1
    %s155 = scalar_select %p152, %s153, %s154
    %p158 = pneg %p152
    %p159 = scmp.eq.s32.totalorder %s13, 1
    %p160 = por %p158, %p159
    %p161 = scmp.ne.s32.totalorder %s153, %s156
    %p162 = scmp.eq.s32.totalorder %s13, 0
    %p163 = por %p161, %p162
    %p164 = scmp.ne.s32.totalorder %s153, %s156
    %p165 = scmp.eq.s32.totalorder %s18, 1
    %p166 = por %p164, %p165
    %p167 = scmp.ne.s32.totalorder %s156, %s157
    %p168 = scmp.eq.s32.totalorder %s18, 0
    %p169 = por %p167, %p168
    %p170 = scmp.ne.s32.totalorder %s156, %s157
    %p171 = scmp.eq.s32.totalorder %s19, 1
    %p172 = por %p170, %p171
    %p174 = scmp.ne.s32.totalorder %s157, %s173
    %p175 = scmp.eq.s32.totalorder %s19, 0
    %p176 = por %p174, %p175
    %s177 = ssub.s32 %s13, %s20
    %p178 = scmp.eq.s32.totalorder %s177, 0
    %s180 = sadd.s32 %s179, 1
    %s181 = scalar_select %p178, %s179, %s180
    %p184 = pneg %p178
    %p185 = scmp.eq.s32.totalorder %s13, 1
    %p186 = por %p184, %p185
    %p187 = scmp.ne.s32.totalorder %s179, %s182
    %p188 = scmp.eq.s32.totalorder %s13, 0
    %p189 = por %p187, %p188
    %p190 = scmp.ne.s32.totalorder %s179, %s182
    %p191 = scmp.eq.s32.totalorder %s18, 1
    %p192 = por %p190, %p191
    %p193 = scmp.ne.s32.totalorder %s182, %s183
    %p194 = scmp.eq.s32.totalorder %s18, 0
    %p195 = por %p193, %p194
    %p196 = scmp.ne.s32.totalorder %s182, %s183
    %p197 = scmp.eq.s32.totalorder %s19, 1
    %p198 = por %p196, %p197
    %p200 = scmp.ne.s32.totalorder %s183, %s199
    %p201 = scmp.eq.s32.totalorder %s19, 0
    %p202 = por %p200, %p201
    %p203 = scmp.le.s32.totalorder 1, %s13
    %p204 = scmp.lt.s32.totalorder %s13, 3
    %p205 = pnand %p203, %p204
    %p206 = pneg %p205
    // Predicated region
    $region9: #{history_module_forward.5} parent=5 // pred_check
      _
    $region10: #{history_module_forward.5} parent=5 // pred_check_branch
      %208 = sbr.rel (%p205) target = $region12
    $region11: #{history_module_forward.5} parent=5 // pred_region
      %s209 = ssub.s32 %s13, 1
    $region12: #{history_module_forward.5} parent=5 // pred_fallthru
      _
    %p210 = scmp.lt.s32.totalorder %s13, 2
    // Predicated region
    $region13: #{history_module_forward.5} parent=5 // pred_check
      %p211 = pneg %p210
    $region14: #{history_module_forward.5} parent=5 // pred_check_branch
      %213 = sbr.rel (%p211) target = $region16
    $region15: #{history_module_forward.5} parent=5 // pred_region
      // Predicated region
      $region17: #{history_module_forward.5} parent=15 // pred_check
        %p214 = pneg %p33
      $region18: #{history_module_forward.5} parent=15 // pred_check_branch
        %216 = sbr.rel (%p214) target = $region20
      $region19: #{history_module_forward.5} parent=15 // pred_region
        %p217 = scmp.lt.s32.totalorder %s13, 1
        %s218 = scalar_select %p217, %s13, 1
        %s219 = smul.addr %s218, 8
        %s220 = smul.addr %s219, 2
        %s221 = scalar_lea.vmem %s0, %s220
      $region20: #{history_module_forward.5} parent=15 // pred_fallthru
        _
      // Predicated region
      $region21: #{history_module_forward.5} parent=15 // pred_check
        %p222 = pneg %p59
      $region22: #{history_module_forward.5} parent=15 // pred_check_branch
        %224 = sbr.rel (%p222) target = $region24
      $region23: #{history_module_forward.5} parent=15 // pred_region
        %p225 = scmp.lt.s32.totalorder %s13, 1
        %s226 = scalar_select %p225, %s13, 1
        %s227 = smul.addr %s226, 2
        %s228 = smul.addr %s227, 4
        %s229 = scalar_lea.vmem %s1, %s228
      $region24: #{history_module_forward.5} parent=15 // pred_fallthru
        _
      // Predicated region
      $region25: #{history_module_forward.5} parent=15 // pred_check
        %p230 = pneg %p85
      $region26: #{history_module_forward.5} parent=15 // pred_check_branch
        %232 = sbr.rel (%p230) target = $region28
      $region27: #{history_module_forward.5} parent=15 // pred_region
        %p233 = scmp.lt.s32.totalorder %s13, 1
        %s234 = scalar_select %p233, %s13, 1
        %s235 = smul.addr %s234, 2
        %s236 = scalar_lea.vmem %s2, %s235
      $region28: #{history_module_forward.5} parent=15 // pred_fallthru
        _
      // Predicated region
      $region29: #{history_module_forward.5} parent=15 // pred_check
        %p237 = pneg %p111
      $region30: #{history_module_forward.5} parent=15 // pred_check_branch
        %239 = sbr.rel (%p237) target = $region32
      $region31: #{history_module_forward.5} parent=15 // pred_region
        %p240 = scmp.lt.s32.totalorder %s13, 1
        %s241 = scalar_select %p240, %s13, 1
        %s242 = smul.addr %s241, 2
        %s243 = scalar_lea.vmem %s3, %s242
      $region32: #{history_module_forward.5} parent=15 // pred_fallthru
        _
    $region16: #{history_module_forward.5} parent=5 // pred_fallthru
      _
    %p244 = scmp.le.s32.totalorder 1, %s13
    %p245 = scmp.lt.s32.totalorder %s13, 3
    %p246 = pnand %p244, %p245
    %p247 = pneg %p246
    // Predicated region
    $region33: #{history_module_forward.5} parent=5 // pred_check
      _
    $region34: #{history_module_forward.5} parent=5 // pred_check_branch
      %249 = sbr.rel (%p246) target = $region36
    $region35: #{history_module_forward.5} parent=5 // pred_region
      %s250 = ssub.s32 %s13, 1
      %p251 = scmp.lt.s32.totalorder %s18, 1
      %s252 = scalar_select %p251, %s18, 1
      %s253 = smul.addr %s252, 8
      %s254 = smul.addr %s253, 2
      %s255 = scalar_lea.vmem %s0, %s254
      %p256 = pneg %p39
      %p257 = pneg %p36
      %p258 = scmp.lt.s32.totalorder %s18, 1
      %s259 = scalar_select %p258, %s18, 1
      %s260 = smul.addr %s259, 2
      %s261 = smul.addr %s260, 4
      %s262 = scalar_lea.vmem %s1, %s261
      %p263 = pneg %p65
      %p264 = pneg %p62
      %p265 = scmp.lt.s32.totalorder %s18, 1
      %s266 = scalar_select %p265, %s18, 1
      %s267 = smul.addr %s266, 2
      %s268 = scalar_lea.vmem %s2, %s267
      %p269 = pneg %p91
      %p270 = pneg %p88
      %p271 = scmp.lt.s32.totalorder %s18, 1
      %s272 = scalar_select %p271, %s18, 1
      %s273 = smul.addr %s272, 2
      %s274 = scalar_lea.vmem %s3, %s273
      %p275 = pneg %p117
      %p276 = pneg %p114
      %p277 = pneg %p143
      %p278 = pneg %p140
      %p279 = scmp.lt.s32.totalorder %s18, 1
      %s280 = scalar_select %p279, %s18, 1
      %s281 = smul.addr %s280, 8
      %s282 = smul.addr %s281, 2
      %s283 = scalar_lea.vmem %s4, %s282
      %p284 = pneg %p169
      %p285 = pneg %p166
      %p286 = scmp.lt.s32.totalorder %s18, 1
      %s287 = scalar_select %p286, %s18, 1
      %s288 = smul.addr %s287, 2
      %s289 = scalar_lea.vmem %s5, %s288
      %p290 = pneg %p195
      %p291 = pneg %p192
      %p292 = scmp.lt.s32.totalorder %s18, 1
      %s293 = scalar_select %p292, %s18, 1
      %s294 = smul.addr %s293, 2
      %s295 = scalar_lea.vmem %s6, %s294
      %p296 = scmp.lt.s32.totalorder %s18, 1
      %s297 = scalar_select %p296, %s18, 1
      %s298 = smul.addr %s297, 8
      %s299 = smul.addr %s298, 2
      %s300 = scalar_lea.vmem %s0, %s299
      %p301 = scmp.lt.s32.totalorder %s18, 1
      %s302 = scalar_select %p301, %s18, 1
      %s303 = smul.addr %s302, 2
      %s304 = smul.addr %s303, 4
      %s305 = scalar_lea.vmem %s1, %s304
      %p306 = scmp.lt.s32.totalorder %s18, 1
      %s307 = scalar_select %p306, %s18, 1
      %s308 = smul.addr %s307, 2
      %s309 = scalar_lea.vmem %s2, %s308
      %p310 = scmp.lt.s32.totalorder %s18, 1
      %s311 = scalar_select %p310, %s18, 1
      %s312 = smul.addr %s311, 2
      %s313 = scalar_lea.vmem %s3, %s312
      %p314 = scmp.lt.s32.totalorder %s18, 1
      %s315 = scalar_select %p314, %s18, 1
      %s316 = smul.addr %s315, 8
      %s317 = smul.addr %s316, 2
      %s318 = scalar_lea.vmem %s4, %s317
      %p319 = scmp.lt.s32.totalorder %s18, 1
      %s320 = scalar_select %p319, %s18, 1
      %s321 = smul.addr %s320, 2
      %s322 = scalar_lea.vmem %s5, %s321
      %p323 = scmp.lt.s32.totalorder %s18, 1
      %s324 = scalar_select %p323, %s18, 1
      %s325 = smul.addr %s324, 2
      %s326 = scalar_lea.vmem %s6, %s325
      %v328 = vld [vmem:[%s309] sm:$0x3]
      %vm329 = vcmask 123904
      %330 = vst.msk [vmem:[#allocation2] sm:$0x3] %vm329, %v328
      %v331 = vld [vmem:[%s313] sm:$0x3]
      %332 = vst.msk [vmem:[#allocation3] sm:$0x3] %vm329, %v331
      %v333 = vld [vmem:[%s305] sm:$0xf]
      %v334 = vld [vmem:[%s305 + $0x4] sm:$0xf]
      %p335 = scmp.eq.s32.totalorder %s18, 0
      %s336 = scalar_select %p335, 0, 7
      %v337 = vld [vmem:[#allocation2] sm:$0x3]
      %v338 = vld [vmem:[#allocation3] sm:$0x3]
      %s339 = smul.u32 %s336, 2
      %s340 = scalar_lea.vmem %s300, %s339
      %v341 = vld [vmem:[%s340] sm:$0x3]
      %v342 = vpack.c.bf16 %v337, %v337
      %v345 = vunpack.c.l.b16 %v333
      %v346 = vunpack.c.l.b16 %v334
      %v347 = vpack.c.b16 %v346, %v345
      %vm349 = vcmask 130048
      %v351 = vsel %vm349, %v342, 0
      %353 = vmatprep.subr.bf16.mxu0 0
      %354 = vmatpush1.bf16.msra.mxu0 0
      %355 = vmatprep.subr.bf16.mxu0 0
      %356 = vmatpush1.bf16.msra.mxu0 0
      %357 = vmatprep.subr.bf16.mxu0 0
      %358 = vmatpush1.bf16.msra.mxu0 0
      %359 = vmatprep.subr.bf16.mxu0 0
      %360 = vmatpush1.bf16.msra.mxu0 0
      %361 = vmatprep.subr.bf16.mxu0 0
      %362 = vmatpush1.bf16.msra.mxu0 0
      %363 = vmatprep.subr.bf16.mxu0 0
      %364 = vmatpush1.bf16.msra.mxu0 0
      %365 = vmatprep.subr.bf16.mxu0 0
      %366 = vmatpush1.bf16.msra.mxu0 0
      %367 = vmatprep.subr.bf16.mxu0 0
      %368 = vmatpush1.bf16.msra.mxu0 %v347
      %369 = vmatprep.subr.bf16.mxu0 0
      %370 = vmatpush2.bf16.msra.mxu0 0
      %371 = vmatprep.subr.bf16.mxu0 0
      %372 = vmatpush2.bf16.msra.mxu0 0
      %373 = vmatprep.subr.bf16.mxu0 0
      %374 = vmatpush2.bf16.msra.mxu0 0
      %375 = vmatprep.subr.bf16.mxu0 0
      %376 = vmatpush2.bf16.msra.mxu0 0
      %377 = vmatprep.subr.bf16.mxu0 0
      %378 = vmatpush2.bf16.msra.mxu0 0
      %379 = vmatprep.subr.bf16.mxu0 0
      %380 = vmatpush2.bf16.msra.mxu0 0
      %381 = vmatprep.subr.bf16.mxu0 0
      %382 = vmatpush2.bf16.msra.mxu0 0
      %383 = vmatprep.subr.bf16.mxu0 0
      %384 = vmatpush2.bf16.msra.mxu0 0
      %385 = vmatprep.mubr.bf16.mxu0 0
      %386 = vmatmul.mubr.bf16.gmra.mxu0 %v351
      %v387 = vpop.f32.mrf.mxu0
      %v388 = vadd.f32 0.0, %v387
      %v389 = vpop.f32.mrf.mxu0
      %v390 = vpop.f32.mrf.mxu0
      %v391 = vpop.f32.mrf.mxu0
      %392 = vdwg.mxu0
      %v393 = vadd.f32 %v341, %v388
      %v394 = vxor.u32 %v393, 2147483648
      %v395 = vmul.f32 %v394, 1.442695
      %v396 = vpow.pop %v395
      %v397 = vadd.f32 %v396, 1.0
      %v398 = vrcp.pop %v397
      %v399 = vmul.f32 1.0, %v398
      %v400 = vtanh.pop %v393
      %402 = vrot.lane.b32.xlu0 %v338, 16
      %v403 = vpop.permute.xlu0 %402
      %v405 = vmul.f32 %v399, %v403
      %407 = vrot.lane.b32.xlu0 %v400, 80
      %v408 = vpop.permute.xlu0 %407
      %v410 = vmul.f32 %v399, %v408
      %412 = vrot.lane.b32.xlu0 %v410, 16
      %v413 = vpop.permute.xlu0 %412
      %v415 = vadd.f32 %v405, %v413
      %v416 = vtanh.pop %v415
      %418 = vrot.lane.b32.xlu0 %v416, 16
      %v419 = vpop.permute.xlu0 %418
      %v421 = vmul.f32 %v399, %v419
      %423 = vrot.lane.b32.xlu0 %v421, 96
      %v424 = vpop.permute.xlu0 %423
      %426 = vst.msk [vmem:[#allocation2] sm:$0x3] %vm329, %v424
      %428 = vrot.lane.b32.xlu0 %v415, 112
      %v429 = vpop.permute.xlu0 %428
      %431 = vst.msk [vmem:[#allocation3] sm:$0x3] %vm329, %v429
      %s432 = scalar_lea.vmem %s318, %s339
      %433 = vst.msk [vmem:[%s432] sm:$0x3] %vm329, %v424
      %s434 = scalar_select %p335, 1, 6
      %v435 = vld [vmem:[#allocation2] sm:$0x3]
      %v436 = vld [vmem:[#allocation3] sm:$0x3]
      %s437 = smul.u32 %s434, 2
      %s438 = scalar_lea.vmem %s300, %s437
      %v439 = vld [vmem:[%s438] sm:$0x3]
      %v440 = vpack.c.bf16 %v435, %v435
      %v442 = vsel %vm349, %v440, 0
      %444 = vmatprep.subr.bf16.mxu0 0
      %445 = vmatpush1.bf16.msra.mxu0 0
      %446 = vmatprep.subr.bf16.mxu0 0
      %447 = vmatpush1.bf16.msra.mxu0 0
      %448 = vmatprep.subr.bf16.mxu0 0
      %449 = vmatpush1.bf16.msra.mxu0 0
      %450 = vmatprep.subr.bf16.mxu0 0
      %451 = vmatpush1.bf16.msra.mxu0 0
      %452 = vmatprep.subr.bf16.mxu0 0
      %453 = vmatpush1.bf16.msra.mxu0 0
      %454 = vmatprep.subr.bf16.mxu0 0
      %455 = vmatpush1.bf16.msra.mxu0 0
      %456 = vmatprep.subr.bf16.mxu0 0
      %457 = vmatpush1.bf16.msra.mxu0 0
      %458 = vmatprep.subr.bf16.mxu0 0
      %459 = vmatpush1.bf16.msra.mxu0 %v347
      %460 = vmatprep.subr.bf16.mxu0 0
      %461 = vmatpush2.bf16.msra.mxu0 0
      %462 = vmatprep.subr.bf16.mxu0 0
      %463 = vmatpush2.bf16.msra.mxu0 0
      %464 = vmatprep.subr.bf16.mxu0 0
      %465 = vmatpush2.bf16.msra.mxu0 0
      %466 = vmatprep.subr.bf16.mxu0 0
      %467 = vmatpush2.bf16.msra.mxu0 0
      %468 = vmatprep.subr.bf16.mxu0 0
      %469 = vmatpush2.bf16.msra.mxu0 0
      %470 = vmatprep.subr.bf16.mxu0 0
      %471 = vmatpush2.bf16.msra.mxu0 0
      %472 = vmatprep.subr.bf16.mxu0 0
      %473 = vmatpush2.bf16.msra.mxu0 0
      %474 = vmatprep.subr.bf16.mxu0 0
      %475 = vmatpush2.bf16.msra.mxu0 0
      %476 = vmatprep.mubr.bf16.mxu0 0
      %477 = vmatmul.mubr.bf16.gmra.mxu0 %v442
      %v478 = vpop.f32.mrf.mxu0
      %v479 = vadd.f32 0.0, %v478
      %v480 = vpop.f32.mrf.mxu0
      %v481 = vpop.f32.mrf.mxu0
      %v482 = vpop.f32.mrf.mxu0
      %483 = vdwg.mxu0
      %v484 = vadd.f32 %v439, %v479
      %v485 = vxor.u32 %v484, 2147483648
      %v486 = vmul.f32 %v485, 1.442695
      %v487 = vpow.pop %v486
      %v488 = vadd.f32 %v487, 1.0
      %v489 = vrcp.pop %v488
      %v490 = vmul.f32 1.0, %v489
      %v491 = vtanh.pop %v484
      %493 = vrot.lane.b32.xlu0 %v436, 16
      %v494 = vpop.permute.xlu0 %493
      %v496 = vmul.f32 %v490, %v494
      %498 = vrot.lane.b32.xlu0 %v491, 80
      %v499 = vpop.permute.xlu0 %498
      %v501 = vmul.f32 %v490, %v499
      %503 = vrot.lane.b32.xlu0 %v501, 16
      %v504 = vpop.permute.xlu0 %503
      %v506 = vadd.f32 %v496, %v504
      %v507 = vtanh.pop %v506
      %509 = vrot.lane.b32.xlu0 %v507, 16
      %v510 = vpop.permute.xlu0 %509
      %v512 = vmul.f32 %v490, %v510
      %514 = vrot.lane.b32.xlu0 %v512, 96
      %v515 = vpop.permute.xlu0 %514
      %517 = vst.msk [vmem:[#allocation2] sm:$0x3] %vm329, %v515
      %519 = vrot.lane.b32.xlu0 %v506, 112
      %v520 = vpop.permute.xlu0 %519
      %522 = vst.msk [vmem:[#allocation3] sm:$0x3] %vm329, %v520
      %s523 = scalar_lea.vmem %s318, %s437
      %524 = vst.msk [vmem:[%s523] sm:$0x3] %vm329, %v515
      %s525 = scalar_select %p335, 2, 5
      %v526 = vld [vmem:[#allocation2] sm:$0x3]
      %v527 = vld [vmem:[#allocation3] sm:$0x3]
      %s528 = smul.u32 %s525, 2
      %s529 = scalar_lea.vmem %s300, %s528
      %v530 = vld [vmem:[%s529] sm:$0x3]
      %v531 = vpack.c.bf16 %v526, %v526
      %v533 = vsel %vm349, %v531, 0
      %535 = vmatprep.subr.bf16.mxu0 0
      %536 = vmatpush1.bf16.msra.mxu0 0
      %537 = vmatprep.subr.bf16.mxu0 0
      %538 = vmatpush1.bf16.msra.mxu0 0
      %539 = vmatprep.subr.bf16.mxu0 0
      %540 = vmatpush1.bf16.msra.mxu0 0
      %541 = vmatprep.subr.bf16.mxu0 0
      %542 = vmatpush1.bf16.msra.mxu0 0
      %543 = vmatprep.subr.bf16.mxu0 0
      %544 = vmatpush1.bf16.msra.mxu0 0
      %545 = vmatprep.subr.bf16.mxu0 0
      %546 = vmatpush1.bf16.msra.mxu0 0
      %547 = vmatprep.subr.bf16.mxu0 0
      %548 = vmatpush1.bf16.msra.mxu0 0
      %549 = vmatprep.subr.bf16.mxu0 0
      %550 = vmatpush1.bf16.msra.mxu0 %v347
      %551 = vmatprep.subr.bf16.mxu0 0
      %552 = vmatpush2.bf16.msra.mxu0 0
      %553 = vmatprep.subr.bf16.mxu0 0
      %554 = vmatpush2.bf16.msra.mxu0 0
      %555 = vmatprep.subr.bf16.mxu0 0
      %556 = vmatpush2.bf16.msra.mxu0 0
      %557 = vmatprep.subr.bf16.mxu0 0
      %558 = vmatpush2.bf16.msra.mxu0 0
      %559 = vmatprep.subr.bf16.mxu0 0
      %560 = vmatpush2.bf16.msra.mxu0 0
      %561 = vmatprep.subr.bf16.mxu0 0
      %562 = vmatpush2.bf16.msra.mxu0 0
      %563 = vmatprep.subr.bf16.mxu0 0
      %564 = vmatpush2.bf16.msra.mxu0 0
      %565 = vmatprep.subr.bf16.mxu0 0
      %566 = vmatpush2.bf16.msra.mxu0 0
      %567 = vmatprep.mubr.bf16.mxu0 0
      %568 = vmatmul.mubr.bf16.gmra.mxu0 %v533
      %v569 = vpop.f32.mrf.mxu0
      %v570 = vadd.f32 0.0, %v569
      %v571 = vpop.f32.mrf.mxu0
      %v572 = vpop.f32.mrf.mxu0
      %v573 = vpop.f32.mrf.mxu0
      %574 = vdwg.mxu0
      %v575 = vadd.f32 %v530, %v570
      %v576 = vxor.u32 %v575, 2147483648
      %v577 = vmul.f32 %v576, 1.442695
      %v578 = vpow.pop %v577
      %v579 = vadd.f32 %v578, 1.0
      %v580 = vrcp.pop %v579
      %v581 = vmul.f32 1.0, %v580
      %v582 = vtanh.pop %v575
      %584 = vrot.lane.b32.xlu0 %v527, 16
      %v585 = vpop.permute.xlu0 %584
      %v587 = vmul.f32 %v581, %v585
      %589 = vrot.lane.b32.xlu0 %v582, 80
      %v590 = vpop.permute.xlu0 %589
      %v592 = vmul.f32 %v581, %v590
      %594 = vrot.lane.b32.xlu0 %v592, 16
      %v595 = vpop.permute.xlu0 %594
      %v597 = vadd.f32 %v587, %v595
      %v598 = vtanh.pop %v597
      %600 = vrot.lane.b32.xlu0 %v598, 16
      %v601 = vpop.permute.xlu0 %600
      %v603 = vmul.f32 %v581, %v601
      %605 = vrot.lane.b32.xlu0 %v603, 96
      %v606 = vpop.permute.xlu0 %605
      %608 = vst.msk [vmem:[#allocation2] sm:$0x3] %vm329, %v606
      %610 = vrot.lane.b32.xlu0 %v597, 112
      %v611 = vpop.permute.xlu0 %610
      %613 = vst.msk [vmem:[#allocation3] sm:$0x3] %vm329, %v611
      %s614 = scalar_lea.vmem %s318, %s528
      %615 = vst.msk [vmem:[%s614] sm:$0x3] %vm329, %v606
      %s616 = scalar_select %p335, 3, 4
      %v617 = vld [vmem:[#allocation2] sm:$0x3]
      %v618 = vld [vmem:[#allocation3] sm:$0x3]
      %s619 = smul.u32 %s616, 2
      %s620 = scalar_lea.vmem %s300, %s619
      %v621 = vld [vmem:[%s620] sm:$0x3]
      %v622 = vpack.c.bf16 %v617, %v617
      %v624 = vsel %vm349, %v622, 0
      %626 = vmatprep.subr.bf16.mxu0 0
      %627 = vmatpush1.bf16.msra.mxu0 0
      %628 = vmatprep.subr.bf16.mxu0 0
      %629 = vmatpush1.bf16.msra.mxu0 0
      %630 = vmatprep.subr.bf16.mxu0 0
      %631 = vmatpush1.bf16.msra.mxu0 0
      %632 = vmatprep.subr.bf16.mxu0 0
      %633 = vmatpush1.bf16.msra.mxu0 0
      %634 = vmatprep.subr.bf16.mxu0 0
      %635 = vmatpush1.bf16.msra.mxu0 0
      %636 = vmatprep.subr.bf16.mxu0 0
      %637 = vmatpush1.bf16.msra.mxu0 0
      %638 = vmatprep.subr.bf16.mxu0 0
      %639 = vmatpush1.bf16.msra.mxu0 0
      %640 = vmatprep.subr.bf16.mxu0 0
      %641 = vmatpush1.bf16.msra.mxu0 %v347
      %642 = vmatprep.subr.bf16.mxu0 0
      %643 = vmatpush2.bf16.msra.mxu0 0
      %644 = vmatprep.subr.bf16.mxu0 0
      %645 = vmatpush2.bf16.msra.mxu0 0
      %646 = vmatprep.subr.bf16.mxu0 0
      %647 = vmatpush2.bf16.msra.mxu0 0
      %648 = vmatprep.subr.bf16.mxu0 0
      %649 = vmatpush2.bf16.msra.mxu0 0
      %650 = vmatprep.subr.bf16.mxu0 0
      %651 = vmatpush2.bf16.msra.mxu0 0
      %652 = vmatprep.subr.bf16.mxu0 0
      %653 = vmatpush2.bf16.msra.mxu0 0
      %654 = vmatprep.subr.bf16.mxu0 0
      %655 = vmatpush2.bf16.msra.mxu0 0
      %656 = vmatprep.subr.bf16.mxu0 0
      %657 = vmatpush2.bf16.msra.mxu0 0
      %658 = vmatprep.mubr.bf16.mxu0 0
      %659 = vmatmul.mubr.bf16.gmra.mxu0 %v624
      %v660 = vpop.f32.mrf.mxu0
      %v661 = vadd.f32 0.0, %v660
      %v662 = vpop.f32.mrf.mxu0
      %v663 = vpop.f32.mrf.mxu0
      %v664 = vpop.f32.mrf.mxu0
      %665 = vdwg.mxu0
      %v666 = vadd.f32 %v621, %v661
      %v667 = vxor.u32 %v666, 2147483648
      %v668 = vmul.f32 %v667, 1.442695
      %v669 = vpow.pop %v668
      %v670 = vadd.f32 %v669, 1.0
      %v671 = vrcp.pop %v670
      %v672 = vmul.f32 1.0, %v671
      %v673 = vtanh.pop %v666
      %675 = vrot.lane.b32.xlu0 %v618, 16
      %v676 = vpop.permute.xlu0 %675
      %v678 = vmul.f32 %v672, %v676
      %680 = vrot.lane.b32.xlu0 %v673, 80
      %v681 = vpop.permute.xlu0 %680
      %v683 = vmul.f32 %v672, %v681
      %685 = vrot.lane.b32.xlu0 %v683, 16
      %v686 = vpop.permute.xlu0 %685
      %v688 = vadd.f32 %v678, %v686
      %v689 = vtanh.pop %v688
      %691 = vrot.lane.b32.xlu0 %v689, 16
      %v692 = vpop.permute.xlu0 %691
      %v694 = vmul.f32 %v672, %v692
      %696 = vrot.lane.b32.xlu0 %v694, 96
      %v697 = vpop.permute.xlu0 %696
      %699 = vst.msk [vmem:[#allocation2] sm:$0x3] %vm329, %v697
      %701 = vrot.lane.b32.xlu0 %v688, 112
      %v702 = vpop.permute.xlu0 %701
      %704 = vst.msk [vmem:[#allocation3] sm:$0x3] %vm329, %v702
      %s705 = scalar_lea.vmem %s318, %s619
      %706 = vst.msk [vmem:[%s705] sm:$0x3] %vm329, %v697
      %s707 = scalar_select %p335, 4, 3
      %v708 = vld [vmem:[#allocation2] sm:$0x3]
      %v709 = vld [vmem:[#allocation3] sm:$0x3]
      %s710 = smul.u32 %s707, 2
      %s711 = scalar_lea.vmem %s300, %s710
      %v712 = vld [vmem:[%s711] sm:$0x3]
      %v713 = vpack.c.bf16 %v708, %v708
      %v715 = vsel %vm349, %v713, 0
      %717 = vmatprep.subr.bf16.mxu0 0
      %718 = vmatpush1.bf16.msra.mxu0 0
      %719 = vmatprep.subr.bf16.mxu0 0
      %720 = vmatpush1.bf16.msra.mxu0 0
      %721 = vmatprep.subr.bf16.mxu0 0
      %722 = vmatpush1.bf16.msra.mxu0 0
      %723 = vmatprep.subr.bf16.mxu0 0
      %724 = vmatpush1.bf16.msra.mxu0 0
      %725 = vmatprep.subr.bf16.mxu0 0
      %726 = vmatpush1.bf16.msra.mxu0 0
      %727 = vmatprep.subr.bf16.mxu0 0
      %728 = vmatpush1.bf16.msra.mxu0 0
      %729 = vmatprep.subr.bf16.mxu0 0
      %730 = vmatpush1.bf16.msra.mxu0 0
      %731 = vmatprep.subr.bf16.mxu0 0
      %732 = vmatpush1.bf16.msra.mxu0 %v347
      %733 = vmatprep.subr.bf16.mxu0 0
      %734 = vmatpush2.bf16.msra.mxu0 0
      %735 = vmatprep.subr.bf16.mxu0 0
      %736 = vmatpush2.bf16.msra.mxu0 0
      %737 = vmatprep.subr.bf16.mxu0 0
      %738 = vmatpush2.bf16.msra.mxu0 0
      %739 = vmatprep.subr.bf16.mxu0 0
      %740 = vmatpush2.bf16.msra.mxu0 0
      %741 = vmatprep.subr.bf16.mxu0 0
      %742 = vmatpush2.bf16.msra.mxu0 0
      %743 = vmatprep.subr.bf16.mxu0 0
      %744 = vmatpush2.bf16.msra.mxu0 0
      %745 = vmatprep.subr.bf16.mxu0 0
      %746 = vmatpush2.bf16.msra.mxu0 0
      %747 = vmatprep.subr.bf16.mxu0 0
      %748 = vmatpush2.bf16.msra.mxu0 0
      %749 = vmatprep.mubr.bf16.mxu0 0
      %750 = vmatmul.mubr.bf16.gmra.mxu0 %v715
      %v751 = vpop.f32.mrf.mxu0
      %v752 = vadd.f32 0.0, %v751
      %v753 = vpop.f32.mrf.mxu0
      %v754 = vpop.f32.mrf.mxu0
      %v755 = vpop.f32.mrf.mxu0
      %756 = vdwg.mxu0
      %v757 = vadd.f32 %v712, %v752
      %v758 = vxor.u32 %v757, 2147483648
      %v759 = vmul.f32 %v758, 1.442695
      %v760 = vpow.pop %v759
      %v761 = vadd.f32 %v760, 1.0
      %v762 = vrcp.pop %v761
      %v763 = vmul.f32 1.0, %v762
      %v764 = vtanh.pop %v757
      %766 = vrot.lane.b32.xlu0 %v709, 16
      %v767 = vpop.permute.xlu0 %766
      %v769 = vmul.f32 %v763, %v767
      %771 = vrot.lane.b32.xlu0 %v764, 80
      %v772 = vpop.permute.xlu0 %771
      %v774 = vmul.f32 %v763, %v772
      %776 = vrot.lane.b32.xlu0 %v774, 16
      %v777 = vpop.permute.xlu0 %776
      %v779 = vadd.f32 %v769, %v777
      %v780 = vtanh.pop %v779
      %782 = vrot.lane.b32.xlu0 %v780, 16
      %v783 = vpop.permute.xlu0 %782
      %v785 = vmul.f32 %v763, %v783
      %787 = vrot.lane.b32.xlu0 %v785, 96
      %v788 = vpop.permute.xlu0 %787
      %790 = vst.msk [vmem:[#allocation2] sm:$0x3] %vm329, %v788
      %792 = vrot.lane.b32.xlu0 %v779, 112
      %v793 = vpop.permute.xlu0 %792
      %795 = vst.msk [vmem:[#allocation3] sm:$0x3] %vm329, %v793
      %s796 = scalar_lea.vmem %s318, %s710
      %797 = vst.msk [vmem:[%s796] sm:$0x3] %vm329, %v788
      %s798 = scalar_select %p335, 5, 2
      %v799 = vld [vmem:[#allocation2] sm:$0x3]
      %v800 = vld [vmem:[#allocation3] sm:$0x3]
      %s801 = smul.u32 %s798, 2
      %s802 = scalar_lea.vmem %s300, %s801
      %v803 = vld [vmem:[%s802] sm:$0x3]
      %v804 = vpack.c.bf16 %v799, %v799
      %v806 = vsel %vm349, %v804, 0
      %808 = vmatprep.subr.bf16.mxu0 0
      %809 = vmatpush1.bf16.msra.mxu0 0
      %810 = vmatprep.subr.bf16.mxu0 0
      %811 = vmatpush1.bf16.msra.mxu0 0
      %812 = vmatprep.subr.bf16.mxu0 0
      %813 = vmatpush1.bf16.msra.mxu0 0
      %814 = vmatprep.subr.bf16.mxu0 0
      %815 = vmatpush1.bf16.msra.mxu0 0
      %816 = vmatprep.subr.bf16.mxu0 0
      %817 = vmatpush1.bf16.msra.mxu0 0
      %818 = vmatprep.subr.bf16.mxu0 0
      %819 = vmatpush1.bf16.msra.mxu0 0
      %820 = vmatprep.subr.bf16.mxu0 0
      %821 = vmatpush1.bf16.msra.mxu0 0
      %822 = vmatprep.subr.bf16.mxu0 0
      %823 = vmatpush1.bf16.msra.mxu0 %v347
      %824 = vmatprep.subr.bf16.mxu0 0
      %825 = vmatpush2.bf16.msra.mxu0 0
      %826 = vmatprep.subr.bf16.mxu0 0
      %827 = vmatpush2.bf16.msra.mxu0 0
      %828 = vmatprep.subr.bf16.mxu0 0
      %829 = vmatpush2.bf16.msra.mxu0 0
      %830 = vmatprep.subr.bf16.mxu0 0
      %831 = vmatpush2.bf16.msra.mxu0 0
      %832 = vmatprep.subr.bf16.mxu0 0
      %833 = vmatpush2.bf16.msra.mxu0 0
      %834 = vmatprep.subr.bf16.mxu0 0
      %835 = vmatpush2.bf16.msra.mxu0 0
      %836 = vmatprep.subr.bf16.mxu0 0
      %837 = vmatpush2.bf16.msra.mxu0 0
      %838 = vmatprep.subr.bf16.mxu0 0
      %839 = vmatpush2.bf16.msra.mxu0 0
      %840 = vmatprep.mubr.bf16.mxu0 0
      %841 = vmatmul.mubr.bf16.gmra.mxu0 %v806
      %v842 = vpop.f32.mrf.mxu0
      %v843 = vadd.f32 0.0, %v842
      %v844 = vpop.f32.mrf.mxu0
      %v845 = vpop.f32.mrf.mxu0
      %v846 = vpop.f32.mrf.mxu0
      %847 = vdwg.mxu0
      %v848 = vadd.f32 %v803, %v843
      %v849 = vxor.u32 %v848, 2147483648
      %v850 = vmul.f32 %v849, 1.442695
      %v851 = vpow.pop %v850
      %v852 = vadd.f32 %v851, 1.0
      %v853 = vrcp.pop %v852
      %v854 = vmul.f32 1.0, %v853
      %v855 = vtanh.pop %v848
      %857 = vrot.lane.b32.xlu0 %v800, 16
      %v858 = vpop.permute.xlu0 %857
      %v860 = vmul.f32 %v854, %v858
      %862 = vrot.lane.b32.xlu0 %v855, 80
      %v863 = vpop.permute.xlu0 %862
      %v865 = vmul.f32 %v854, %v863
      %867 = vrot.lane.b32.xlu0 %v865, 16
      %v868 = vpop.permute.xlu0 %867
      %v870 = vadd.f32 %v860, %v868
      %v871 = vtanh.pop %v870
      %873 = vrot.lane.b32.xlu0 %v871, 16
      %v874 = vpop.permute.xlu0 %873
      %v876 = vmul.f32 %v854, %v874
      %878 = vrot.lane.b32.xlu0 %v876, 96
      %v879 = vpop.permute.xlu0 %878
      %881 = vst.msk [vmem:[#allocation2] sm:$0x3] %vm329, %v879
      %883 = vrot.lane.b32.xlu0 %v870, 112
      %v884 = vpop.permute.xlu0 %883
      %886 = vst.msk [vmem:[#allocation3] sm:$0x3] %vm329, %v884
      %s887 = scalar_lea.vmem %s318, %s801
      %888 = vst.msk [vmem:[%s887] sm:$0x3] %vm329, %v879
      %s889 = scalar_select %p335, 6, 1
      %v890 = vld [vmem:[#allocation2] sm:$0x3]
      %v891 = vld [vmem:[#allocation3] sm:$0x3]
      %s892 = smul.u32 %s889, 2
      %s893 = scalar_lea.vmem %s300, %s892
      %v894 = vld [vmem:[%s893] sm:$0x3]
      %v895 = vpack.c.bf16 %v890, %v890
      %v897 = vsel %vm349, %v895, 0
      %899 = vmatprep.subr.bf16.mxu0 0
      %900 = vmatpush1.bf16.msra.mxu0 0
      %901 = vmatprep.subr.bf16.mxu0 0
      %902 = vmatpush1.bf16.msra.mxu0 0
      %903 = vmatprep.subr.bf16.mxu0 0
      %904 = vmatpush1.bf16.msra.mxu0 0
      %905 = vmatprep.subr.bf16.mxu0 0
      %906 = vmatpush1.bf16.msra.mxu0 0
      %907 = vmatprep.subr.bf16.mxu0 0
      %908 = vmatpush1.bf16.msra.mxu0 0
      %909 = vmatprep.subr.bf16.mxu0 0
      %910 = vmatpush1.bf16.msra.mxu0 0
      %911 = vmatprep.subr.bf16.mxu0 0
      %912 = vmatpush1.bf16.msra.mxu0 0
      %913 = vmatprep.subr.bf16.mxu0 0
      %914 = vmatpush1.bf16.msra.mxu0 %v347
      %915 = vmatprep.subr.bf16.mxu0 0
      %916 = vmatpush2.bf16.msra.mxu0 0
      %917 = vmatprep.subr.bf16.mxu0 0
      %918 = vmatpush2.bf16.msra.mxu0 0
      %919 = vmatprep.subr.bf16.mxu0 0
      %920 = vmatpush2.bf16.msra.mxu0 0
      %921 = vmatprep.subr.bf16.mxu0 0
      %922 = vmatpush2.bf16.msra.mxu0 0
      %923 = vmatprep.subr.bf16.mxu0 0
      %924 = vmatpush2.bf16.msra.mxu0 0
      %925 = vmatprep.subr.bf16.mxu0 0
      %926 = vmatpush2.bf16.msra.mxu0 0
      %927 = vmatprep.subr.bf16.mxu0 0
      %928 = vmatpush2.bf16.msra.mxu0 0
      %929 = vmatprep.subr.bf16.mxu0 0
      %930 = vmatpush2.bf16.msra.mxu0 0
      %931 = vmatprep.mubr.bf16.mxu0 0
      %932 = vmatmul.mubr.bf16.gmra.mxu0 %v897
      %v933 = vpop.f32.mrf.mxu0
      %v934 = vadd.f32 0.0, %v933
      %v935 = vpop.f32.mrf.mxu0
      %v936 = vpop.f32.mrf.mxu0
      %v937 = vpop.f32.mrf.mxu0
      %938 = vdwg.mxu0
      %v939 = vadd.f32 %v894, %v934
      %v940 = vxor.u32 %v939, 2147483648
      %v941 = vmul.f32 %v940, 1.442695
      %v942 = vpow.pop %v941
      %v943 = vadd.f32 %v942, 1.0
      %v944 = vrcp.pop %v943
      %v945 = vmul.f32 1.0, %v944
      %v946 = vtanh.pop %v939
      %948 = vrot.lane.b32.xlu0 %v891, 16
      %v949 = vpop.permute.xlu0 %948
      %v951 = vmul.f32 %v945, %v949
      %953 = vrot.lane.b32.xlu0 %v946, 80
      %v954 = vpop.permute.xlu0 %953
      %v956 = vmul.f32 %v945, %v954
      %958 = vrot.lane.b32.xlu0 %v956, 16
      %v959 = vpop.permute.xlu0 %958
      %v961 = vadd.f32 %v951, %v959
      %v962 = vtanh.pop %v961
      %964 = vrot.lane.b32.xlu0 %v962, 16
      %v965 = vpop.permute.xlu0 %964
      %v967 = vmul.f32 %v945, %v965
      %969 = vrot.lane.b32.xlu0 %v967, 96
      %v970 = vpop.permute.xlu0 %969
      %972 = vst.msk [vmem:[#allocation2] sm:$0x3] %vm329, %v970
      %974 = vrot.lane.b32.xlu0 %v961, 112
      %v975 = vpop.permute.xlu0 %974
      %977 = vst.msk [vmem:[#allocation3] sm:$0x3] %vm329, %v975
      %s978 = scalar_lea.vmem %s318, %s892
      %979 = vst.msk [vmem:[%s978] sm:$0x3] %vm329, %v970
      %s980 = scalar_select %p335, 7, 0
      %v981 = vld [vmem:[#allocation2] sm:$0x3]
      %v982 = vld [vmem:[#allocation3] sm:$0x3]
      %s983 = smul.u32 %s980, 2
      %s984 = scalar_lea.vmem %s300, %s983
      %v985 = vld [vmem:[%s984] sm:$0x3]
      %v986 = vpack.c.bf16 %v981, %v981
      %v988 = vsel %vm349, %v986, 0
      %990 = vmatprep.subr.bf16.mxu0 0
      %991 = vmatpush1.bf16.msra.mxu0 0
      %992 = vmatprep.subr.bf16.mxu0 0
      %993 = vmatpush1.bf16.msra.mxu0 0
      %994 = vmatprep.subr.bf16.mxu0 0
      %995 = vmatpush1.bf16.msra.mxu0 0
      %996 = vmatprep.subr.bf16.mxu0 0
      %997 = vmatpush1.bf16.msra.mxu0 0
      %998 = vmatprep.subr.bf16.mxu0 0
      %999 = vmatpush1.bf16.msra.mxu0 0
      %1000 = vmatprep.subr.bf16.mxu0 0
      %1001 = vmatpush1.bf16.msra.mxu0 0
      %1002 = vmatprep.subr.bf16.mxu0 0
      %1003 = vmatpush1.bf16.msra.mxu0 0
      %1004 = vmatprep.subr.bf16.mxu0 0
      %1005 = vmatpush1.bf16.msra.mxu0 %v347
      %1006 = vmatprep.subr.bf16.mxu0 0
      %1007 = vmatpush2.bf16.msra.mxu0 0
      %1008 = vmatprep.subr.bf16.mxu0 0
      %1009 = vmatpush2.bf16.msra.mxu0 0
      %1010 = vmatprep.subr.bf16.mxu0 0
      %1011 = vmatpush2.bf16.msra.mxu0 0
      %1012 = vmatprep.subr.bf16.mxu0 0
      %1013 = vmatpush2.bf16.msra.mxu0 0
      %1014 = vmatprep.subr.bf16.mxu0 0
      %1015 = vmatpush2.bf16.msra.mxu0 0
      %1016 = vmatprep.subr.bf16.mxu0 0
      %1017 = vmatpush2.bf16.msra.mxu0 0
      %1018 = vmatprep.subr.bf16.mxu0 0
      %1019 = vmatpush2.bf16.msra.mxu0 0
      %1020 = vmatprep.subr.bf16.mxu0 0
      %1021 = vmatpush2.bf16.msra.mxu0 0
      %1022 = vmatprep.mubr.bf16.mxu0 0
      %1023 = vmatmul.mubr.bf16.gmra.mxu0 %v988
      %v1024 = vpop.f32.mrf.mxu0
      %v1025 = vadd.f32 0.0, %v1024
      %v1026 = vpop.f32.mrf.mxu0
      %v1027 = vpop.f32.mrf.mxu0
      %v1028 = vpop.f32.mrf.mxu0
      %1029 = vdwg.mxu0
      %v1030 = vadd.f32 %v985, %v1025
      %v1031 = vxor.u32 %v1030, 2147483648
      %v1032 = vmul.f32 %v1031, 1.442695
      %v1033 = vpow.pop %v1032
      %v1034 = vadd.f32 %v1033, 1.0
      %v1035 = vrcp.pop %v1034
      %v1036 = vmul.f32 1.0, %v1035
      %v1037 = vtanh.pop %v1030
      %1039 = vrot.lane.b32.xlu0 %v982, 16
      %v1040 = vpop.permute.xlu0 %1039
      %v1042 = vmul.f32 %v1036, %v1040
      %1044 = vrot.lane.b32.xlu0 %v1037, 80
      %v1045 = vpop.permute.xlu0 %1044
      %v1047 = vmul.f32 %v1036, %v1045
      %1049 = vrot.lane.b32.xlu0 %v1047, 16
      %v1050 = vpop.permute.xlu0 %1049
      %v1052 = vadd.f32 %v1042, %v1050
      %v1053 = vtanh.pop %v1052
      %1055 = vrot.lane.b32.xlu0 %v1053, 16
      %v1056 = vpop.permute.xlu0 %1055
      %v1058 = vmul.f32 %v1036, %v1056
      %1060 = vrot.lane.b32.xlu0 %v1058, 96
      %v1061 = vpop.permute.xlu0 %1060
      %1063 = vst.msk [vmem:[#allocation2] sm:$0x3] %vm329, %v1061
      %1065 = vrot.lane.b32.xlu0 %v1052, 112
      %v1066 = vpop.permute.xlu0 %1065
      %1068 = vst.msk [vmem:[#allocation3] sm:$0x3] %vm329, %v1066
      %s1069 = scalar_lea.vmem %s318, %s983
      %1070 = vst.msk [vmem:[%s1069] sm:$0x3] %vm329, %v1061
      %v1071 = vld [vmem:[#allocation2] sm:$0x3]
      %1072 = vst.msk [vmem:[%s322] sm:$0x3] %vm329, %v1071
      %v1073 = vld [vmem:[#allocation3] sm:$0x3]
      %1074 = vst.msk [vmem:[%s326] sm:$0x3] %vm329, %v1073
      %p1075 = scmp.lt.s32.totalorder %s18, 1
      %s1076 = scalar_select %p1075, %s18, 1
      %s1077 = smul.addr %s1076, 8
      %s1078 = smul.addr %s1077, 2
      %s1079 = scalar_lea.vmem %s4, %s1078
      %p1080 = scmp.lt.s32.totalorder %s18, 1
      %s1081 = scalar_select %p1080, %s18, 1
      %s1082 = smul.addr %s1081, 2
      %s1083 = scalar_lea.vmem %s5, %s1082
      %p1084 = scmp.lt.s32.totalorder %s18, 1
      %s1085 = scalar_select %p1084, %s18, 1
      %s1086 = smul.addr %s1085, 2
      %s1087 = scalar_lea.vmem %s6, %s1086
      // Predicated region
      $region37: #{history_module_forward.5} parent=35 // pred_check
        %p1088 = pneg %p140
      $region38: #{history_module_forward.5} parent=35 // pred_check_branch
        %1090 = sbr.rel (%p1088) target = $region40
      $region39: #{history_module_forward.5} parent=35 // pred_region
        _
      $region40: #{history_module_forward.5} parent=35 // pred_fallthru
        _
      // Predicated region
      $region41: #{history_module_forward.5} parent=35 // pred_check
        %p1091 = pneg %p166
      $region42: #{history_module_forward.5} parent=35 // pred_check_branch
        %1093 = sbr.rel (%p1091) target = $region44
      $region43: #{history_module_forward.5} parent=35 // pred_region
        _
      $region44: #{history_module_forward.5} parent=35 // pred_fallthru
        _
      // Predicated region
      $region45: #{history_module_forward.5} parent=35 // pred_check
        %p1094 = pneg %p192
      $region46: #{history_module_forward.5} parent=35 // pred_check_branch
        %1096 = sbr.rel (%p1094) target = $region48
      $region47: #{history_module_forward.5} parent=35 // pred_region
        _
      $region48: #{history_module_forward.5} parent=35 // pred_fallthru
        _
    $region36: #{history_module_forward.5} parent=5 // pred_fallthru
      _
    %p1097 = scmp.le.s32.totalorder 2, %s13
    // Predicated region
    $region49: #{history_module_forward.5} parent=5 // pred_check
      %p1098 = pneg %p1097
    $region50: #{history_module_forward.5} parent=5 // pred_check_branch
      %1100 = sbr.rel (%p1098) target = $region52
    $region51: #{history_module_forward.5} parent=5 // pred_region
      %s1101 = ssub.s32 %s13, 2
      // Predicated region
      $region53: #{history_module_forward.5} parent=51 // pred_check
        %p1102 = pneg %p146
      $region54: #{history_module_forward.5} parent=51 // pred_check_branch
        %1104 = sbr.rel (%p1102) target = $region56
      $region55: #{history_module_forward.5} parent=51 // pred_region
        %p1105 = scmp.lt.s32.totalorder %s19, 1
        %s1106 = scalar_select %p1105, %s19, 1
        %s1107 = smul.addr %s1106, 8
        %s1108 = smul.addr %s1107, 2
        %s1109 = scalar_lea.vmem %s4, %s1108
      $region56: #{history_module_forward.5} parent=51 // pred_fallthru
        _
      // Predicated region
      $region57: #{history_module_forward.5} parent=51 // pred_check
        %p1110 = pneg %p172
      $region58: #{history_module_forward.5} parent=51 // pred_check_branch
        %1112 = sbr.rel (%p1110) target = $region60
      $region59: #{history_module_forward.5} parent=51 // pred_region
        %p1113 = scmp.lt.s32.totalorder %s19, 1
        %s1114 = scalar_select %p1113, %s19, 1
        %s1115 = smul.addr %s1114, 2
        %s1116 = scalar_lea.vmem %s5, %s1115
      $region60: #{history_module_forward.5} parent=51 // pred_fallthru
        _
      // Predicated region
      $region61: #{history_module_forward.5} parent=51 // pred_check
        %p1117 = pneg %p198
      $region62: #{history_module_forward.5} parent=51 // pred_check_branch
        %1119 = sbr.rel (%p1117) target = $region64
      $region63: #{history_module_forward.5} parent=51 // pred_region
        %p1120 = scmp.lt.s32.totalorder %s19, 1
        %s1121 = scalar_select %p1120, %s19, 1
        %s1122 = smul.addr %s1121, 2
        %s1123 = scalar_lea.vmem %s6, %s1122
      $region64: #{history_module_forward.5} parent=51 // pred_fallthru
        _
    $region52: #{history_module_forward.5} parent=5 // pred_fallthru
      _
  $region6: #{history_module_forward.5} parent=0 // loop_footer
    %s17 = sadd.s32 1, %s13
  $region7: #{history_module_forward.5} parent=0 // loop_footer_branch
    %12 = sbr.rel target = $region3
  $region8: #{history_module_forward.5} parent=0 // loop_exit
    _

// kernel: history_module_forward.7
$region0: #{history_module_forward.7}
  #allocation0 [shape = 'u32[]', space=smem, size = 0x4, offset = 0x4, fixed_abs, tag = 'smem constant byte address 0x4 - core index']
  #allocation1 [shape = 'u32[144,128]{1,0:T(1,128)}', space=vmem, size = 0x12000, scoped, tag = 'internal scratch']
  %s0 = inlined_call_operand.vmem [shape: f32[2,6,12], index: 0, kind: input, shape index: {}]
  %s1 = inlined_call_operand.vmem [shape: f32[2,8,12], index: 1, kind: input, shape index: {}]
  %s2 = inlined_call_operand.vmem [shape: f32[2,8,32], index: 2, kind: input, shape index: {}]
  %s3 = inlined_call_operand.vmem [shape: f32[2,1,8], index: 3, kind: input, shape index: {}]
  %s4 = inlined_call_operand.vmem [shape: bf16[32,64], index: 4, kind: input, shape index: {}]
  %s5 = inlined_call_operand.vmem [shape: bf16[64,32], index: 5, kind: input, shape index: {}]
  %s6 = inlined_call_operand.vmem [shape: f32[1,32], index: 6, kind: input, shape index: {}]
  %s7 = inlined_call_operand.vmem [shape: f32[1,32], index: 7, kind: input, shape index: {}]
  %s8 = inlined_call_operand.hbm [shape: f32[2,1,32], index: 8, kind: output, shape index: {0}]
  %s9 = inlined_call_operand.vmem [shape: f32[2,6,8], index: 9, kind: output, shape index: {1}]
  %10 = xla_tuple %s8, %s9
  %s11 = sld [smem:[#allocation0]]
  $region50: #{history_module_forward.7} parent=0
    _
  %s13 = ssub.s32 1, %s11
  %s14 = scalar_select 0, %s13, %s11
  $region1: #{history_module_forward.7} parent=0
    #allocation2 [shape = 'u8[1024]{0}', space=vmem, size = 0x400, scoped, tag = 'output window, operand 0, single buffered']
    #allocation3 [shape = 's32[1]{0}', space=sflag, size = 0x4, scoped, tag = 'scoped memory for history_module_forward.7']
    %15 = vsyncpa [#allocation3], 0
    // Predicated region
    $region2: #{history_module_forward.7} parent=1 // pred_check
      _
    $region3: #{history_module_forward.7} parent=1 // pred_check_branch
      %17 = sbr.rel (0) target = $region5
    $region4: #{history_module_forward.7} parent=1 // pred_region
      _
    $region5: #{history_module_forward.7} parent=1 // pred_fallthru
      _
    // Predicated region
    $region6: #{history_module_forward.7} parent=1 // pred_check
      _
    $region7: #{history_module_forward.7} parent=1 // pred_check_branch
      %19 = sbr.rel (0) target = $region9
    $region8: #{history_module_forward.7} parent=1 // pred_region
      _
    $region9: #{history_module_forward.7} parent=1 // pred_fallthru
      _
    // Predicated region
    $region10: #{history_module_forward.7} parent=1 // pred_check
      _
    $region11: #{history_module_forward.7} parent=1 // pred_check_branch
      %21 = sbr.rel (0) target = $region13
    $region12: #{history_module_forward.7} parent=1 // pred_region
      _
    $region13: #{history_module_forward.7} parent=1 // pred_fallthru
      _
    // Predicated region
    $region14: #{history_module_forward.7} parent=1 // pred_check
      _
    $region15: #{history_module_forward.7} parent=1 // pred_check_branch
      %23 = sbr.rel (0) target = $region17
    $region16: #{history_module_forward.7} parent=1 // pred_region
      _
    $region17: #{history_module_forward.7} parent=1 // pred_fallthru
      _
    // Predicated region
    $region18: #{history_module_forward.7} parent=1 // pred_check
      _
    $region19: #{history_module_forward.7} parent=1 // pred_check_branch
      %25 = sbr.rel (0) target = $region21
    $region20: #{history_module_forward.7} parent=1 // pred_region
      _
    $region21: #{history_module_forward.7} parent=1 // pred_fallthru
      _
    // Predicated region
    $region22: #{history_module_forward.7} parent=1 // pred_check
      _
    $region23: #{history_module_forward.7} parent=1 // pred_check_branch
      %27 = sbr.rel (0) target = $region25
    $region24: #{history_module_forward.7} parent=1 // pred_region
      _
    $region25: #{history_module_forward.7} parent=1 // pred_fallthru
      _
    // Predicated region
    $region26: #{history_module_forward.7} parent=1 // pred_check
      _
    $region27: #{history_module_forward.7} parent=1 // pred_check_branch
      %29 = sbr.rel (0) target = $region29
    $region28: #{history_module_forward.7} parent=1 // pred_region
      _
    $region29: #{history_module_forward.7} parent=1 // pred_fallthru
      _
    // Predicated region
    $region30: #{history_module_forward.7} parent=1 // pred_check
      _
    $region31: #{history_module_forward.7} parent=1 // pred_check_branch
      %31 = sbr.rel (0) target = $region33
    $region32: #{history_module_forward.7} parent=1 // pred_region
      _
    $region33: #{history_module_forward.7} parent=1 // pred_fallthru
      _
    %v33 = vld [vmem:[%s4] sm:$0xf]
    %v34 = vld [vmem:[%s4 + $0x4] sm:$0xf]
    %v35 = vld [vmem:[%s4 + $0x8] sm:$0xf]
    %v36 = vld [vmem:[%s4 + $0xc] sm:$0xf]
    %v37 = vld [vmem:[%s5] sm:$0xf]
    %v38 = vld [vmem:[%s5 + $0x4] sm:$0xf]
    %v39 = vld [vmem:[%s5 + $0x8] sm:$0xf]
    %v40 = vld [vmem:[%s5 + $0xc] sm:$0xf]
    %v41 = vld [vmem:[%s5 + $0x10] sm:$0xf]
    %v42 = vld [vmem:[%s5 + $0x14] sm:$0xf]
    %v43 = vld [vmem:[%s5 + $0x18] sm:$0xf]
    %v44 = vld [vmem:[%s5 + $0x1c] sm:$0xf]
    %v45 = vld [vmem:[%s6] sm:$0x1]
    %v46 = vld [vmem:[%s7] sm:$0x1]
    %v47 = vld [vmem:[%s0] sm:$0x3f]
    %v48 = vpack.c.bf16 %v47, %v47
    %v49 = vld [vmem:[%s1] sm:$0xff]
    %v50 = vpack.c.bf16 %v49, %v49
    %v51 = vld [vmem:[%s2] sm:$0xff]
    %v52 = vpack.c.bf16 %v51, %v51
    %vm53 = vcmask 97280
    %v55 = vsel %vm53, %v48, 0
    %v58 = vsel %vm53, %v50, 0
    %60 = vmatprep.subr.bf16.mxu0 0
    %61 = vmatpush1.bf16.xpose.msra.mxu0 0
    %62 = vmatprep.subr.bf16.mxu0 0
    %63 = vmatpush1.bf16.xpose.msra.mxu0 0
    %64 = vmatprep.subr.bf16.mxu0 0
    %65 = vmatpush1.bf16.xpose.msra.mxu0 0
    %66 = vmatprep.subr.bf16.mxu0 0
    %67 = vmatpush1.bf16.xpose.msra.mxu0 0
    %68 = vmatprep.subr.bf16.mxu0 0
    %69 = vmatpush1.bf16.xpose.msra.mxu0 0
    %70 = vmatprep.subr.bf16.mxu0 0
    %71 = vmatpush1.bf16.xpose.msra.mxu0 0
    %72 = vmatprep.subr.bf16.mxu0 0
    %73 = vmatpush1.bf16.xpose.msra.mxu0 0
    %74 = vmatprep.subr.bf16.mxu0 0
    %75 = vmatpush1.bf16.xpose.msra.mxu0 %v58
    %76 = vmatprep.subr.bf16.mxu0 0
    %77 = vmatpush2.bf16.xpose.msra.mxu0 0
    %78 = vmatprep.subr.bf16.mxu0 0
    %79 = vmatpush2.bf16.xpose.msra.mxu0 0
    %80 = vmatprep.subr.bf16.mxu0 0
    %81 = vmatpush2.bf16.xpose.msra.mxu0 0
    %82 = vmatprep.subr.bf16.mxu0 0
    %83 = vmatpush2.bf16.xpose.msra.mxu0 0
    %84 = vmatprep.subr.bf16.mxu0 0
    %85 = vmatpush2.bf16.xpose.msra.mxu0 0
    %86 = vmatprep.subr.bf16.mxu0 0
    %87 = vmatpush2.bf16.xpose.msra.mxu0 0
    %88 = vmatprep.subr.bf16.mxu0 0
    %89 = vmatpush2.bf16.xpose.msra.mxu0 0
    %90 = vmatprep.subr.bf16.mxu0 0
    %91 = vmatpush2.bf16.xpose.msra.mxu0 0
    %92 = vmatprep.mubr.bf16.mxu0 0
    %93 = vmatmul.mubr.bf16.gmra.mxu0 %v55
    %v94 = vpop.f32.mrf.mxu0
    %v95 = vadd.f32 0.0, %v94
    %v96 = vpop.f32.mrf.mxu0
    %v97 = vpop.f32.mrf.mxu0
    %v98 = vpop.f32.mrf.mxu0
    %99 = vdwg.mxu0
    %v100 = vmul.f32 %v95, 0.28867513
    %v101 = vld [vmem:[%s3] sm:$0x1]
    %vm102 = vcmp.gt.f32.partialorder %v101, 0.5
    %v103 = vsel %vm102, 1, 0
    %v104 = vlaneseq
    %v105 = vshrl.u32 %v104, 7
    %v106 = vsub.s32 0, %v105
    %v107 = vrot.slane %v103, %v106
    %vm108 = vcmp.eq.s32.totalorder %v107, 1
    %v109 = vsel %vm108, -1e+09, %v100
    %vm110 = vcmask 62464
    %v111 = vsel %vm110, %v109, -inf
    %v112 = vrot.slane %v111, 4
    %v113 = vmax.f32 %v111, %v112
    %v114 = vrot.slane %v113, 2
    %v115 = vmax.f32 %v113, %v114
    %v116 = vrot.slane %v115, 1
    %v117 = vmax.f32 %v115, %v116
    %v118 = vsub.f32 %v109, %v117
    %v119 = vmul.f32 %v118, 1.442695
    %v120 = vpow.pop %v119
    %v121 = vsel %vm110, %v120, 0.0
    %v122 = vrot.slane %v121, 4
    %v123 = vadd.f32 %v121, %v122
    %v124 = vrot.slane %v123, 2
    %v125 = vadd.f32 %v123, %v124
    %v126 = vrot.slane %v125, 1
    %v127 = vadd.f32 %v125, %v126
    %v128 = vrcp.pop %v127
    %v129 = vmul.f32 %v120, %v128
    %v130 = vpack.c.bf16 %v129, %v129
    %vm131 = vcmask 64512
    %v133 = vsel %vm131, %v130, 0
    %vm135 = vcmask 1043456
    %v137 = vsel %vm135, %v52, 0
    %139 = vmatprep.subr.bf16.mxu0 0
    %140 = vmatpush1.bf16.msra.mxu0 0
    %141 = vmatprep.subr.bf16.mxu0 0
    %142 = vmatpush1.bf16.msra.mxu0 0
    %143 = vmatprep.subr.bf16.mxu0 0
    %144 = vmatpush1.bf16.msra.mxu0 0
    %145 = vmatprep.subr.bf16.mxu0 0
    %146 = vmatpush1.bf16.msra.mxu0 0
    %147 = vmatprep.subr.bf16.mxu0 0
    %148 = vmatpush1.bf16.msra.mxu0 0
    %149 = vmatprep.subr.bf16.mxu0 0
    %150 = vmatpush1.bf16.msra.mxu0 0
    %151 = vmatprep.subr.bf16.mxu0 0
    %152 = vmatpush1.bf16.msra.mxu0 0
    %153 = vmatprep.subr.bf16.mxu0 0
    %154 = vmatpush1.bf16.msra.mxu0 %v137
    %155 = vmatprep.subr.bf16.mxu0 0
    %156 = vmatpush2.bf16.msra.mxu0 0
    %157 = vmatprep.subr.bf16.mxu0 0
    %158 = vmatpush2.bf16.msra.mxu0 0
    %159 = vmatprep.subr.bf16.mxu0 0
    %160 = vmatpush2.bf16.msra.mxu0 0
    %161 = vmatprep.subr.bf16.mxu0 0
    %162 = vmatpush2.bf16.msra.mxu0 0
    %163 = vmatprep.subr.bf16.mxu0 0
    %164 = vmatpush2.bf16.msra.mxu0 0
    %165 = vmatprep.subr.bf16.mxu0 0
    %166 = vmatpush2.bf16.msra.mxu0 0
    %167 = vmatprep.subr.bf16.mxu0 0
    %168 = vmatpush2.bf16.msra.mxu0 0
    %169 = vmatprep.subr.bf16.mxu0 0
    %170 = vmatpush2.bf16.msra.mxu0 0
    %171 = vmatprep.mubr.bf16.mxu0 0
    %172 = vmatmul.mubr.bf16.gmra.mxu0 %v133
    %v173 = vpop.f32.mrf.mxu0
    %v174 = vadd.f32 0.0, %v173
    %v175 = vpop.f32.mrf.mxu0
    %v176 = vpop.f32.mrf.mxu0
    %v177 = vpop.f32.mrf.mxu0
    %178 = vdwg.mxu0
    %v179 = vpack.c.bf16 %v174, %v174
    %v184 = vunpack.c.l.b16 %v33
    %v185 = vunpack.c.l.b16 %v34
    %v186 = vunpack.c.l.b16 %v35
    %v187 = vunpack.c.l.b16 %v36
    %v188 = vpack.c.b16 %v185, %v184
    %v189 = vpack.c.b16 %v187, %v186
    %vm192 = vcmask 261120
    %v194 = vsel %vm192, %v179, 0
    %196 = vmatprep.subr.bf16.mxu0 0
    %197 = vmatpush1.bf16.msra.mxu0 0
    %198 = vmatprep.subr.bf16.mxu0 0
    %199 = vmatpush1.bf16.msra.mxu0 0
    %200 = vmatprep.subr.bf16.mxu0 0
    %201 = vmatpush1.bf16.msra.mxu0 0
    %202 = vmatprep.subr.bf16.mxu0 0
    %203 = vmatpush1.bf16.msra.mxu0 0
    %204 = vmatprep.subr.bf16.mxu0 0
    %205 = vmatpush1.bf16.msra.mxu0 0
    %206 = vmatprep.subr.bf16.mxu0 0
    %207 = vmatpush1.bf16.msra.mxu0 0
    %208 = vmatprep.subr.bf16.mxu0 0
    %209 = vmatpush1.bf16.msra.mxu0 %v189
    %210 = vmatprep.subr.bf16.mxu0 0
    %211 = vmatpush1.bf16.msra.mxu0 %v188
    %212 = vmatprep.subr.bf16.mxu0 0
    %213 = vmatpush2.bf16.msra.mxu0 0
    %214 = vmatprep.subr.bf16.mxu0 0
    %215 = vmatpush2.bf16.msra.mxu0 0
    %216 = vmatprep.subr.bf16.mxu0 0
    %217 = vmatpush2.bf16.msra.mxu0 0
    %218 = vmatprep.subr.bf16.mxu0 0
    %219 = vmatpush2.bf16.msra.mxu0 0
    %220 = vmatprep.subr.bf16.mxu0 0
    %221 = vmatpush2.bf16.msra.mxu0 0
    %222 = vmatprep.subr.bf16.mxu0 0
    %223 = vmatpush2.bf16.msra.mxu0 0
    %224 = vmatprep.subr.bf16.mxu0 0
    %225 = vmatpush2.bf16.msra.mxu0 0
    %226 = vmatprep.subr.bf16.mxu0 0
    %227 = vmatpush2.bf16.msra.mxu0 0
    %228 = vmatprep.mubr.bf16.mxu0 0
    %229 = vmatmul.mubr.bf16.gmra.mxu0 %v194
    %v230 = vpop.f32.mrf.mxu0
    %v231 = vadd.f32 0.0, %v230
    %v232 = vpop.f32.mrf.mxu0
    %v233 = vpop.f32.mrf.mxu0
    %v234 = vpop.f32.mrf.mxu0
    %235 = vdwg.mxu0
    %v236 = vmax.f32 %v231, 0.0
    %v237 = vpack.c.bf16 %v236, %v236
    %v246 = vunpack.c.l.b16 %v37
    %v247 = vunpack.c.l.b16 %v38
    %v248 = vunpack.c.l.b16 %v39
    %v249 = vunpack.c.l.b16 %v40
    %v250 = vunpack.c.l.b16 %v41
    %v251 = vunpack.c.l.b16 %v42
    %v252 = vunpack.c.l.b16 %v43
    %v253 = vunpack.c.l.b16 %v44
    %v254 = vpack.c.b16 %v247, %v246
    %v255 = vpack.c.b16 %v249, %v248
    %v256 = vpack.c.b16 %v251, %v250
    %v257 = vpack.c.b16 %v253, %v252
    %vm262 = vcmask 523264
    %v264 = vsel %vm262, %v237, 0
    %266 = vmatprep.subr.bf16.mxu0 0
    %267 = vmatpush1.bf16.msra.mxu0 0
    %268 = vmatprep.subr.bf16.mxu0 0
    %269 = vmatpush1.bf16.msra.mxu0 0
    %270 = vmatprep.subr.bf16.mxu0 0
    %271 = vmatpush1.bf16.msra.mxu0 0
    %272 = vmatprep.subr.bf16.mxu0 0
    %273 = vmatpush1.bf16.msra.mxu0 0
    %274 = vmatprep.subr.bf16.mxu0 0
    %275 = vmatpush1.bf16.msra.mxu0 %v257
    %276 = vmatprep.subr.bf16.mxu0 0
    %277 = vmatpush1.bf16.msra.mxu0 %v256
    %278 = vmatprep.subr.bf16.mxu0 0
    %279 = vmatpush1.bf16.msra.mxu0 %v255
    %280 = vmatprep.subr.bf16.mxu0 0
    %281 = vmatpush1.bf16.msra.mxu0 %v254
    %282 = vmatprep.subr.bf16.mxu0 0
    %283 = vmatpush2.bf16.msra.mxu0 0
    %284 = vmatprep.subr.bf16.mxu0 0
    %285 = vmatpush2.bf16.msra.mxu0 0
    %286 = vmatprep.subr.bf16.mxu0 0
    %287 = vmatpush2.bf16.msra.mxu0 0
    %288 = vmatprep.subr.bf16.mxu0 0
    %289 = vmatpush2.bf16.msra.mxu0 0
    %290 = vmatprep.subr.bf16.mxu0 0
    %291 = vmatpush2.bf16.msra.mxu0 0
    %292 = vmatprep.subr.bf16.mxu0 0
    %293 = vmatpush2.bf16.msra.mxu0 0
    %294 = vmatprep.subr.bf16.mxu0 0
    %295 = vmatpush2.bf16.msra.mxu0 0
    %296 = vmatprep.subr.bf16.mxu0 0
    %297 = vmatpush2.bf16.msra.mxu0 0
    %298 = vmatprep.mubr.bf16.mxu0 0
    %299 = vmatmul.mubr.bf16.gmra.mxu0 %v264
    %v300 = vpop.f32.mrf.mxu0
    %v301 = vadd.f32 %v174, %v300
    %v302 = vpop.f32.mrf.mxu0
    %v303 = vpop.f32.mrf.mxu0
    %v304 = vpop.f32.mrf.mxu0
    %305 = vdwg.mxu0
    %vm306 = vcmask 259072
    %v307 = vsel %vm306, %v301, 0.0
    %308 = vadd.xlane.f32.xlu0 %v307
    %v309 = vpop.xlane.xlu0 %308
    %v310 = vrcp.pop 32.0
    %v311 = vmul.f32 %v309, %v310
    %v312 = vsub.f32 %v301, %v311
    %v313 = vmul.f32 %v312, %v312
    %v314 = vsel %vm306, %v313, 0.0
    %315 = vadd.xlane.f32.xlu0 %v314
    %v316 = vpop.xlane.xlu0 %315
    %v317 = vmul.f32 %v316, %v310
    %v318 = vadd.f32 %v317, 1e-05
    %v319 = vrsqrt.pop %v318
    %v320 = vmul.f32 %v312, %v319
    %v322 = vlaneseq
    %v323 = vshrl.u32 %v322, 7
    %v324 = vsub.s32 0, %v323
    %v325 = vrot.slane %v45, %v324
    %v327 = vmul.f32 %v320, %v325
    %v329 = vlaneseq
    %v330 = vshrl.u32 %v329, 7
    %v331 = vsub.s32 0, %v330
    %v332 = vrot.slane %v46, %v331
    %v334 = vadd.f32 %v327, %v332
    %v335 = vsel %vm306, %v334, 0.0
    %v336 = vrot.slane %v335, 4
    %v337 = vadd.f32 %v335, %v336
    %v338 = vrot.slane %v337, 2
    %v339 = vadd.f32 %v337, %v338
    %v340 = vrot.slane %v339, 1
    %v341 = vadd.f32 %v339, %v340
    %v342 = vsel %vm192, %v341, -inf
    %343 = vmax.xlane.f32.xlu0 %v342
    %v344 = vpop.xlane.xlu0 %343
    %v345 = vsub.f32 %v341, %v344
    %v346 = vmul.f32 %v345, 1.442695
    %v347 = vpow.pop %v346
    %v348 = vsel %vm192, %v347, 0.0
    %349 = vadd.xlane.f32.xlu0 %v348
    %v350 = vpop.xlane.xlu0 %349
    %v351 = vrcp.pop %v350
    %v352 = vmul.f32 %v347, %v351
    %vm353 = vcmask 253952
    %354 = vst.msk [vmem:[#allocation2] sm:$0x1] %vm353, %v352
    %355 = vst.msk [vmem:[%s9] sm:$0x3f] %vm110, %v129
    %s356 = scalar_lea.vmem %s0, 8
    %v357 = vld [vmem:[%s356] sm:$0x3f]
    %v358 = vpack.c.bf16 %v357, %v357
    %s359 = scalar_lea.vmem %s1, 8
    %v360 = vld [vmem:[%s359] sm:$0xff]
    %v361 = vpack.c.bf16 %v360, %v360
    %s362 = scalar_lea.vmem %s2, 8
    %v363 = vld [vmem:[%s362] sm:$0xff]
    %v364 = vpack.c.bf16 %v363, %v363
    %v366 = vsel %vm53, %v358, 0
    %v369 = vsel %vm53, %v361, 0
    %371 = vmatprep.subr.bf16.mxu0 0
    %372 = vmatpush1.bf16.xpose.msra.mxu0 0
    %373 = vmatprep.subr.bf16.mxu0 0
    %374 = vmatpush1.bf16.xpose.msra.mxu0 0
    %375 = vmatprep.subr.bf16.mxu0 0
    %376 = vmatpush1.bf16.xpose.msra.mxu0 0
    %377 = vmatprep.subr.bf16.mxu0 0
    %378 = vmatpush1.bf16.xpose.msra.mxu0 0
    %379 = vmatprep.subr.bf16.mxu0 0
    %380 = vmatpush1.bf16.xpose.msra.mxu0 0
    %381 = vmatprep.subr.bf16.mxu0 0
    %382 = vmatpush1.bf16.xpose.msra.mxu0 0
    %383 = vmatprep.subr.bf16.mxu0 0
    %384 = vmatpush1.bf16.xpose.msra.mxu0 0
    %385 = vmatprep.subr.bf16.mxu0 0
    %386 = vmatpush1.bf16.xpose.msra.mxu0 %v369
    %387 = vmatprep.subr.bf16.mxu0 0
    %388 = vmatpush2.bf16.xpose.msra.mxu0 0
    %389 = vmatprep.subr.bf16.mxu0 0
    %390 = vmatpush2.bf16.xpose.msra.mxu0 0
    %391 = vmatprep.subr.bf16.mxu0 0
    %392 = vmatpush2.bf16.xpose.msra.mxu0 0
    %393 = vmatprep.subr.bf16.mxu0 0
    %394 = vmatpush2.bf16.xpose.msra.mxu0 0
    %395 = vmatprep.subr.bf16.mxu0 0
    %396 = vmatpush2.bf16.xpose.msra.mxu0 0
    %397 = vmatprep.subr.bf16.mxu0 0
    %398 = vmatpush2.bf16.xpose.msra.mxu0 0
    %399 = vmatprep.subr.bf16.mxu0 0
    %400 = vmatpush2.bf16.xpose.msra.mxu0 0
    %401 = vmatprep.subr.bf16.mxu0 0
    %402 = vmatpush2.bf16.xpose.msra.mxu0 0
    %403 = vmatprep.mubr.bf16.mxu0 0
    %404 = vmatmul.mubr.bf16.gmra.mxu0 %v366
    %v405 = vpop.f32.mrf.mxu0
    %v406 = vadd.f32 0.0, %v405
    %v407 = vpop.f32.mrf.mxu0
    %v408 = vpop.f32.mrf.mxu0
    %v409 = vpop.f32.mrf.mxu0
    %410 = vdwg.mxu0
    %v411 = vmul.f32 %v406, 0.28867513
    %s412 = scalar_lea.vmem %s3, 1
    %v413 = vld [vmem:[%s412] sm:$0x1]
    %vm414 = vcmp.gt.f32.partialorder %v413, 0.5
    %v415 = vsel %vm414, 1, 0
    %v416 = vlaneseq
    %v417 = vshrl.u32 %v416, 7
    %v418 = vsub.s32 0, %v417
    %v419 = vrot.slane %v415, %v418
    %vm420 = vcmp.eq.s32.totalorder %v419, 1
    %v421 = vsel %vm420, -1e+09, %v411
    %v422 = vsel %vm110, %v421, -inf
    %v423 = vrot.slane %v422, 4
    %v424 = vmax.f32 %v422, %v423
    %v425 = vrot.slane %v424, 2
    %v426 = vmax.f32 %v424, %v425
    %v427 = vrot.slane %v426, 1
    %v428 = vmax.f32 %v426, %v427
    %v429 = vsub.f32 %v421, %v428
    %v430 = vmul.f32 %v429, 1.442695
    %v431 = vpow.pop %v430
    %v432 = vsel %vm110, %v431, 0.0
    %v433 = vrot.slane %v432, 4
    %v434 = vadd.f32 %v432, %v433
    %v435 = vrot.slane %v434, 2
    %v436 = vadd.f32 %v434, %v435
    %v437 = vrot.slane %v436, 1
    %v438 = vadd.f32 %v436, %v437
    %v439 = vrcp.pop %v438
    %v440 = vmul.f32 %v431, %v439
    %v441 = vpack.c.bf16 %v440, %v440
    %v443 = vsel %vm131, %v441, 0
    %v446 = vsel %vm135, %v364, 0
    %448 = vmatprep.subr.bf16.mxu0 0
    %449 = vmatpush1.bf16.msra.mxu0 0
    %450 = vmatprep.subr.bf16.mxu0 0
    %451 = vmatpush1.bf16.msra.mxu0 0
    %452 = vmatprep.subr.bf16.mxu0 0
    %453 = vmatpush1.bf16.msra.mxu0 0
    %454 = vmatprep.subr.bf16.mxu0 0
    %455 = vmatpush1.bf16.msra.mxu0 0
    %456 = vmatprep.subr.bf16.mxu0 0
    %457 = vmatpush1.bf16.msra.mxu0 0
    %458 = vmatprep.subr.bf16.mxu0 0
    %459 = vmatpush1.bf16.msra.mxu0 0
    %460 = vmatprep.subr.bf16.mxu0 0
    %461 = vmatpush1.bf16.msra.mxu0 0
    %462 = vmatprep.subr.bf16.mxu0 0
    %463 = vmatpush1.bf16.msra.mxu0 %v446
    %464 = vmatprep.subr.bf16.mxu0 0
    %465 = vmatpush2.bf16.msra.mxu0 0
    %466 = vmatprep.subr.bf16.mxu0 0
    %467 = vmatpush2.bf16.msra.mxu0 0
    %468 = vmatprep.subr.bf16.mxu0 0
    %469 = vmatpush2.bf16.msra.mxu0 0
    %470 = vmatprep.subr.bf16.mxu0 0
    %471 = vmatpush2.bf16.msra.mxu0 0
    %472 = vmatprep.subr.bf16.mxu0 0
    %473 = vmatpush2.bf16.msra.mxu0 0
    %474 = vmatprep.subr.bf16.mxu0 0
    %475 = vmatpush2.bf16.msra.mxu0 0
    %476 = vmatprep.subr.bf16.mxu0 0
    %477 = vmatpush2.bf16.msra.mxu0 0
    %478 = vmatprep.subr.bf16.mxu0 0
    %479 = vmatpush2.bf16.msra.mxu0 0
    %480 = vmatprep.mubr.bf16.mxu0 0
    %481 = vmatmul.mubr.bf16.gmra.mxu0 %v443
    %v482 = vpop.f32.mrf.mxu0
    %v483 = vadd.f32 0.0, %v482
    %v484 = vpop.f32.mrf.mxu0
    %v485 = vpop.f32.mrf.mxu0
    %v486 = vpop.f32.mrf.mxu0
    %487 = vdwg.mxu0
    %v488 = vpack.c.bf16 %v483, %v483
    %v490 = vsel %vm192, %v488, 0
    %492 = vmatprep.subr.bf16.mxu0 0
    %493 = vmatpush1.bf16.msra.mxu0 0
    %494 = vmatprep.subr.bf16.mxu0 0
    %495 = vmatpush1.bf16.msra.mxu0 0
    %496 = vmatprep.subr.bf16.mxu0 0
    %497 = vmatpush1.bf16.msra.mxu0 0
    %498 = vmatprep.subr.bf16.mxu0 0
    %499 = vmatpush1.bf16.msra.mxu0 0
    %500 = vmatprep.subr.bf16.mxu0 0
    %501 = vmatpush1.bf16.msra.mxu0 0
    %502 = vmatprep.subr.bf16.mxu0 0
    %503 = vmatpush1.bf16.msra.mxu0 0
    %504 = vmatprep.subr.bf16.mxu0 0
    %505 = vmatpush1.bf16.msra.mxu0 %v189
    %506 = vmatprep.subr.bf16.mxu0 0
    %507 = vmatpush1.bf16.msra.mxu0 %v188
    %508 = vmatprep.subr.bf16.mxu0 0
    %509 = vmatpush2.bf16.msra.mxu0 0
    %510 = vmatprep.subr.bf16.mxu0 0
    %511 = vmatpush2.bf16.msra.mxu0 0
    %512 = vmatprep.subr.bf16.mxu0 0
    %513 = vmatpush2.bf16.msra.mxu0 0
    %514 = vmatprep.subr.bf16.mxu0 0
    %515 = vmatpush2.bf16.msra.mxu0 0
    %516 = vmatprep.subr.bf16.mxu0 0
    %517 = vmatpush2.bf16.msra.mxu0 0
    %518 = vmatprep.subr.bf16.mxu0 0
    %519 = vmatpush2.bf16.msra.mxu0 0
    %520 = vmatprep.subr.bf16.mxu0 0
    %521 = vmatpush2.bf16.msra.mxu0 0
    %522 = vmatprep.subr.bf16.mxu0 0
    %523 = vmatpush2.bf16.msra.mxu0 0
    %524 = vmatprep.mubr.bf16.mxu0 0
    %525 = vmatmul.mubr.bf16.gmra.mxu0 %v490
    %v526 = vpop.f32.mrf.mxu0
    %v527 = vadd.f32 0.0, %v526
    %v528 = vpop.f32.mrf.mxu0
    %v529 = vpop.f32.mrf.mxu0
    %v530 = vpop.f32.mrf.mxu0
    %531 = vdwg.mxu0
    %v532 = vmax.f32 %v527, 0.0
    %v533 = vpack.c.bf16 %v532, %v532
    %v535 = vsel %vm262, %v533, 0
    %537 = vmatprep.subr.bf16.mxu0 0
    %538 = vmatpush1.bf16.msra.mxu0 0
    %539 = vmatprep.subr.bf16.mxu0 0
    %540 = vmatpush1.bf16.msra.mxu0 0
    %541 = vmatprep.subr.bf16.mxu0 0
    %542 = vmatpush1.bf16.msra.mxu0 0
    %543 = vmatprep.subr.bf16.mxu0 0
    %544 = vmatpush1.bf16.msra.mxu0 0
    %545 = vmatprep.subr.bf16.mxu0 0
    %546 = vmatpush1.bf16.msra.mxu0 %v257
    %547 = vmatprep.subr.bf16.mxu0 0
    %548 = vmatpush1.bf16.msra.mxu0 %v256
    %549 = vmatprep.subr.bf16.mxu0 0
    %550 = vmatpush1.bf16.msra.mxu0 %v255
    %551 = vmatprep.subr.bf16.mxu0 0
    %552 = vmatpush1.bf16.msra.mxu0 %v254
    %553 = vmatprep.subr.bf16.mxu0 0
    %554 = vmatpush2.bf16.msra.mxu0 0
    %555 = vmatprep.subr.bf16.mxu0 0
    %556 = vmatpush2.bf16.msra.mxu0 0
    %557 = vmatprep.subr.bf16.mxu0 0
    %558 = vmatpush2.bf16.msra.mxu0 0
    %559 = vmatprep.subr.bf16.mxu0 0
    %560 = vmatpush2.bf16.msra.mxu0 0
    %561 = vmatprep.subr.bf16.mxu0 0
    %562 = vmatpush2.bf16.msra.mxu0 0
    %563 = vmatprep.subr.bf16.mxu0 0
    %564 = vmatpush2.bf16.msra.mxu0 0
    %565 = vmatprep.subr.bf16.mxu0 0
    %566 = vmatpush2.bf16.msra.mxu0 0
    %567 = vmatprep.subr.bf16.mxu0 0
    %568 = vmatpush2.bf16.msra.mxu0 0
    %569 = vmatprep.mubr.bf16.mxu0 0
    %570 = vmatmul.mubr.bf16.gmra.mxu0 %v535
    %v571 = vpop.f32.mrf.mxu0
    %v572 = vadd.f32 %v483, %v571
    %v573 = vpop.f32.mrf.mxu0
    %v574 = vpop.f32.mrf.mxu0
    %v575 = vpop.f32.mrf.mxu0
    %576 = vdwg.mxu0
    %v577 = vsel %vm306, %v572, 0.0
    %578 = vadd.xlane.f32.xlu0 %v577
    %v579 = vpop.xlane.xlu0 %578
    %v580 = vmul.f32 %v579, %v310
    %v581 = vsub.f32 %v572, %v580
    %v582 = vmul.f32 %v581, %v581
    %v583 = vsel %vm306, %v582, 0.0
    %584 = vadd.xlane.f32.xlu0 %v583
    %v585 = vpop.xlane.xlu0 %584
    %v586 = vmul.f32 %v585, %v310
    %v587 = vadd.f32 %v586, 1e-05
    %v588 = vrsqrt.pop %v587
    %v589 = vmul.f32 %v581, %v588
    %v590 = vmul.f32 %v589, %v325
    %v591 = vadd.f32 %v590, %v332
    %v592 = vsel %vm306, %v591, 0.0
    %v593 = vrot.slane %v592, 4
    %v594 = vadd.f32 %v592, %v593
    %v595 = vrot.slane %v594, 2
    %v596 = vadd.f32 %v594, %v595
    %v597 = vrot.slane %v596, 1
    %v598 = vadd.f32 %v596, %v597
    %v599 = vsel %vm192, %v598, -inf
    %600 = vmax.xlane.f32.xlu0 %v599
    %v601 = vpop.xlane.xlu0 %600
    %v602 = vsub.f32 %v598, %v601
    %v603 = vmul.f32 %v602, 1.442695
    %v604 = vpow.pop %v603
    %v605 = vsel %vm192, %v604, 0.0
    %606 = vadd.xlane.f32.xlu0 %v605
    %v607 = vpop.xlane.xlu0 %606
    %v608 = vrcp.pop %v607
    %v609 = vmul.f32 %v604, %v608
    %s610 = scalar_lea.vmem [#allocation2], 1
    %611 = vst.msk [vmem:[%s610] sm:$0x1] %vm353, %v609
    %s612 = scalar_lea.vmem %s9, 8
    %613 = vst.msk [vmem:[%s612] sm:$0x3f] %vm110, %v440
    // Predicated region
    $region34: #{history_module_forward.7} parent=1 // pred_check
      _
    $region35: #{history_module_forward.7} parent=1 // pred_check_branch
      %615 = sbr.rel (0) target = $region37
    $region36: #{history_module_forward.7} parent=1 // pred_region
      %s617 = ssub.s32 32, 32
      %618 = vsyncadd [#allocation3], %s617
      %s619 = sshll.u32 [#allocation2], 4
      %s620 = int_to_ptr.vmem [resolvable:$true] %s619
      %625 = dma.vmem_to_hbm [thread:$0]  %s620, 32, %s8, [#allocation3], 16, 16, 1
    $region37: #{history_module_forward.7} parent=1 // pred_fallthru
      _
    // Predicated region
    $region38: #{history_module_forward.7} parent=1 // pred_check
      _
    $region39: #{history_module_forward.7} parent=1 // pred_check_branch
      %627 = sbr.rel (0) target = $region41
    $region40: #{history_module_forward.7} parent=1 // pred_region
      _
    $region41: #{history_module_forward.7} parent=1 // pred_fallthru
      _
    // Predicated region
    $region42: #{history_module_forward.7} parent=1 // pred_check
      _
    $region43: #{history_module_forward.7} parent=1 // pred_check_branch
      %629 = sbr.rel (0) target = $region45
    $region44: #{history_module_forward.7} parent=1 // pred_region
      %630 = dma.done [#allocation3], 32
    $region45: #{history_module_forward.7} parent=1 // pred_fallthru
      _
    // Predicated region
    $region46: #{history_module_forward.7} parent=1 // pred_check
      _
    $region47: #{history_module_forward.7} parent=1 // pred_check_branch
      %632 = sbr.rel (0) target = $region49
    $region48: #{history_module_forward.7} parent=1 // pred_region
      _
    $region49: #{history_module_forward.7} parent=1 // pred_fallthru
      _
    %633 = vsyncpa [#allocation3], 1

</llo_original>
